<compile_context>
chip_gen: v5e
topology: v5e:2x2
jax: 0.10.0
libtpu: 0.0.40
codegen_flags: <defaults>
</compile_context>

<pallas_src>
import functools

import numpy as np
import jax
import jax.numpy as jnp
from jax.experimental import pallas as pl
from jax.experimental.pallas import tpu as pltpu


# ----------------------------------------------------------------------------
# Relative position index (static, mirrors the PyTorch buffer construction).
# ----------------------------------------------------------------------------
def make_relative_position_index(window_size):
    Wh, Ww = window_size
    coords = np.stack(np.meshgrid(np.arange(Wh), np.arange(Ww), indexing="ij"))
    coords_flatten = coords.reshape(2, -1)                        # (2, N)
    rel = coords_flatten[:, :, None] - coords_flatten[:, None, :]  # (2, N, N)
    rel = rel.transpose(1, 2, 0).astype(np.int64)                  # (N, N, 2)
    rel[:, :, 0] += Wh - 1
    rel[:, :, 1] += Ww - 1
    rel[:, :, 0] *= 2 * Ww - 1
    return jnp.asarray(rel.sum(-1), dtype=jnp.int32)               # (N, N)


# ----------------------------------------------------------------------------
# Pallas kernel: fused window attention for a block of TB windows.
# ----------------------------------------------------------------------------
def _window_attention_kernel(x_ref, wqkv_ref, bqkv_ref, wproj_ref, bproj_ref,
                             bias_ref, o_ref, y_ref, *, num_heads, scale):
    TB, N, C = x_ref.shape
    H = num_heads
    D = C // H

    # QKV projection for all TB*N tokens on the MXU.
    x = x_ref[...].astype(jnp.float32).reshape(TB * N, C)
    qkv = (jnp.dot(x, wqkv_ref[...].astype(jnp.float32),
                   preferred_element_type=jnp.float32)
           + bqkv_ref[...].astype(jnp.float32))                    # (TB*N, 3C)

    bias = bias_ref[...].astype(jnp.float32)                       # (1|TB, H*N, N)

    for h in range(H):
        q = qkv[:, 0 * C + h * D: 0 * C + (h + 1) * D].reshape(TB, N, D)
        k = qkv[:, 1 * C + h * D: 1 * C + (h + 1) * D].reshape(TB, N, D)
        v = qkv[:, 2 * C + h * D: 2 * C + (h + 1) * D].reshape(TB, N, D)

        # scores + relative position bias (+ shift mask, pre-folded)
        s = jnp.einsum("bnd,bmd->bnm", q, k,
                       preferred_element_type=jnp.float32) * scale
        s = s + bias[:, h * N:(h + 1) * N, :]        # broadcasts over TB if needed

        # numerically stable softmax over keys
        s = s - jnp.max(s, axis=-1, keepdims=True)
        p = jnp.exp(s)
        p = p / jnp.sum(p, axis=-1, keepdims=True)

        yh = jnp.einsum("bnm,bmd->bnd", p, v,
                        preferred_element_type=jnp.float32)        # (TB, N, D)
        y_ref[:, h * D:(h + 1) * D] = yh.reshape(TB * N, D)

    # Output projection on the MXU.
    out = (jnp.dot(y_ref[...], wproj_ref[...].astype(jnp.float32),
                   preferred_element_type=jnp.float32)
           + bproj_ref[...].astype(jnp.float32))                   # (TB*N, C)
    o_ref[...] = out.reshape(TB, N, C).astype(o_ref.dtype)


def _pick_block_windows(B_, N, C, itemsize, budget_bytes=2 << 20):
    """Largest divisor of B_ whose x-block payload fits the per-step budget."""
    cap = max(1, budget_bytes // max(1, N * C * itemsize))
    tb = 1
    for d in range(1, B_ + 1):
        if B_ % d == 0 and d <= cap:
            tb = d
    return tb


# ----------------------------------------------------------------------------
# Wrapper: prepares the dense bias, picks tiling, launches pallas_call.
# ----------------------------------------------------------------------------
def window_attention(x, qkv_w, qkv_b, proj_w, proj_b, rpb_table, rp_index,
                     num_heads, mask=None, *, block_windows=None):
    """x: (B_, N, C). qkv_w: (C, 3C), qkv_b: (3C,), proj_w: (C, C),
       proj_b: (C,). mask: optional (nW, N, N)."""
    B_, N, C = x.shape
    H = num_heads
    assert C % H == 0
    D = C // H
    scale = float(D) ** -0.5

    # Tiny gather of the relative position bias -> dense (H, N, N) in f32.
    rpb = rpb_table[rp_index.reshape(-1)].astype(jnp.float32)      # (N*N, H)
    rpb = rpb.reshape(N, N, H).transpose(2, 0, 1)                  # (H, N, N)

    if mask is None:
        bias = rpb.reshape(1, H * N, N)                            # (1, H*N, N)
        bias_bb = 1
    else:
        nW = mask.shape[0]
        win = jnp.arange(B_) % nW                                  # window id per row
        bias = rpb[None, :, :, :] + mask[win][:, None, :, :].astype(jnp.float32)
        bias = bias.reshape(B_, H * N, N)                          # (B_, H*N, N)
        bias_bb = B_

    itemsize = jnp.dtype(x.dtype).itemsize
    TB = block_windows if block_windows is not None else _pick_block_windows(
        B_, N, C, itemsize)
    assert B_ % TB == 0
    grid = (B_ // TB,)

    if bias_bb == 1:
        bias_spec = pl.BlockSpec((1, H * N, N), lambda b: (0, 0, 0))
    else:
        bias_spec = pl.BlockSpec((TB, H * N, N), lambda b: (b, 0, 0))

    kernel = functools.partial(_window_attention_kernel,
                               num_heads=H, scale=scale)

    return pl.pallas_call(
        kernel,
        out_shape=jax.ShapeDtypeStruct((B_, N, C), x.dtype),
        grid_spec=pltpu.PrefetchScalarGridSpec(
            num_scalar_prefetch=0,
            grid=grid,
            in_specs=[
                pl.BlockSpec((TB, N, C), lambda b: (b, 0, 0)),     # x block
                pl.BlockSpec((C, 3 * C), lambda b: (0, 0)),        # Wqkv (resident)
                pl.BlockSpec((1, 3 * C), lambda b: (0, 0)),        # bqkv
                pl.BlockSpec((C, C), lambda b: (0, 0)),            # Wproj (resident)
                pl.BlockSpec((1, C), lambda b: (0, 0)),            # bproj
                bias_spec,                                          # rel-pos (+mask)
            ],
            out_specs=pl.BlockSpec((TB, N, C), lambda b: (b, 0, 0)),
            scratch_shapes=[pltpu.VMEM((TB * N, C), jnp.float32)],  # head concat
        ),
        compiler_params=pltpu.CompilerParams(
            dimension_semantics=("parallel",)),
    )(x, qkv_w, qkv_b.reshape(1, 3 * C), proj_w, proj_b.reshape(1, C), bias)


# ----------------------------------------------------------------------------
# Module-style wrapper mirroring the PyTorch class (inference only).
# ----------------------------------------------------------------------------
class WindowAttention:
    def __init__(self, dim, window_size, num_heads, qkv_bias=True, *, key,
                 dtype=jnp.float32):
        self.dim = dim
        self.window_size = tuple(window_size)
        self.num_heads = num_heads
        C = dim
        k1, k2, k3, k4, k5 = jax.random.split(key, 5)
        lim = 1.0 / (C ** 0.5)
        # NOTE: weights stored already transposed (in_features, out_features).
        self.qkv_w = jax.random.uniform(k1, (C, 3 * C), dtype, -lim, lim)
        self.qkv_b = (jax.random.uniform(k2, (3 * C,), dtype, -lim, lim)
                      if qkv_bias else jnp.zeros((3 * C,), dtype))
        self.proj_w = jax.random.uniform(k3, (C, C), dtype, -lim, lim)
        self.proj_b = jax.random.uniform(k4, (C,), dtype, -lim, lim)
        table_len = ((2 * self.window_size[0] - 1)
                     * (2 * self.window_size[1] - 1))
        self.rpb_table = 0.02 * jax.random.truncated_normal(
            k5, -2.0, 2.0, (table_len, num_heads), dtype)
        self.rp_index = make_relative_position_index(self.window_size)

    def __call__(self, x, mask=None):
        return window_attention(x, self.qkv_w, self.qkv_b, self.proj_w,
                                self.proj_b, self.rpb_table, self.rp_index,
                                self.num_heads, mask)


# ----------------------------------------------------------------------------
# Pure-JAX reference (mirrors the PyTorch forward exactly).
# ----------------------------------------------------------------------------
def window_attention_ref(x, qkv_w, qkv_b, proj_w, proj_b, rpb_table, rp_index,
                         num_heads, mask=None):
    B_, N, C = x.shape
    H = num_heads
    D = C // H
    scale = float(D) ** -0.5
    hp = jax.lax.Precision.HIGHEST
    qkv = jnp.einsum("bnc,ck->bnk", x, qkv_w, precision=hp) + qkv_b
    qkv = qkv.reshape(B_, N, 3, H, D).transpose(2, 0, 3, 1, 4)
    q, k, v = qkv[0], qkv[1], qkv[2]                               # (B_, H, N, D)
    attn = jnp.einsum("bhnd,bhmd->bhnm", q * scale, k, precision=hp)
    rpb = rpb_table[rp_index.reshape(-1)].reshape(N, N, H).transpose(2, 0, 1)
    attn = attn + rpb[None]
    if mask is not None:
        nW = mask.shape[0]
        attn = attn.reshape(B_ // nW, nW, H, N, N) + mask[None, :, None]
        attn = attn.reshape(B_, H, N, N)
    attn = jax.nn.softmax(attn, axis=-1)
    out = jnp.einsum("bhnm,bhmd->bhnd", attn, v, precision=hp)
    out = out.transpose(0, 2, 1, 3).reshape(B_, N, C)
    return jnp.einsum("bnc,cd->bnd", out, proj_w, precision=hp) + proj_b


if __name__ == "__main__":
    root = jax.random.PRNGKey(0)
    k_param, k_x, k_mask = jax.random.split(root, 3)

    dim, window_size, num_heads = 32, (4, 4), 4
    N = window_size[0] * window_size[1]           # 16 tokens / window
    batch, num_windows = 2, 4
    B_ = batch * num_windows                       # 8 windows total

    module = WindowAttention(dim, window_size, num_heads, qkv_bias=True,
                             key=k_param)
    x = jax.random.normal(k_x, (B_, N, dim), dtype=jnp.float32)

    # --- no-mask path -------------------------------------------------------
    out = jax.block_until_ready(module(x))
    ref = window_attention_ref(x, module.qkv_w, module.qkv_b, module.proj_w,
                               module.proj_b, module.rpb_table,
                               module.rp_index, num_heads)
    assert out.shape == (B_, N, dim) and out.dtype == x.dtype
    assert jnp.allclose(out, ref, atol=3e-2, rtol=3e-2), "mismatch (no mask)"

    # --- shifted-window mask path ------------------------------------------
    mask = jnp.where(jax.random.bernoulli(k_mask, 0.5, (num_windows, N, N)),
                     0.0, -100.0).astype(jnp.float32)
    out_m = jax.block_until_ready(module(x, mask))
    ref_m = window_attention_ref(x, module.qkv_w, module.qkv_b, module.proj_w,
                                 module.proj_b, module.rpb_table,
                                 module.rp_index, num_heads, mask=mask)
    assert jnp.allclose(out_m, ref_m, atol=3e-2, rtol=3e-2), "mismatch (mask)"

    print("KERNEL_OK")
</pallas_src>

<mosaic_0001>
module attributes {stable_mosaic.version = 11 : i64} {
  func.func @_window_attention_kernel(%arg0: i32, %arg1: memref<8x16x32xf32, #tpu.memory_space<vmem>>, %arg2: memref<32x96xf32, #tpu.memory_space<vmem>>, %arg3: memref<1x96xf32, #tpu.memory_space<vmem>>, %arg4: memref<32x32xf32, #tpu.memory_space<vmem>>, %arg5: memref<1x32xf32, #tpu.memory_space<vmem>>, %arg6: memref<1x64x16xf32, #tpu.memory_space<vmem>>, %arg7: memref<8x16x32xf32, #tpu.memory_space<vmem>>, %arg8: memref<128x32xf32, #tpu.memory_space<vmem>>) attributes {dimension_semantics = [#tpu.dimension_semantics<parallel>], iteration_bounds = array<i64: 1>, scalar_prefetch = 0 : i64, scratch_operands = 1 : i64, tpu.core_type = #tpu.core_type<tc>, window_params = [{transform_indices = @transform_0, window_bounds = array<i64: 8, 16, 32>}, {pipeline_mode = #tpu.pipeline_mode<synchronous>, transform_indices = @transform_1, window_bounds = array<i64: 32, 96>}, {pipeline_mode = #tpu.pipeline_mode<synchronous>, transform_indices = @transform_2, window_bounds = array<i64: 1, 96>}, {pipeline_mode = #tpu.pipeline_mode<synchronous>, transform_indices = @transform_3, window_bounds = array<i64: 32, 32>}, {pipeline_mode = #tpu.pipeline_mode<synchronous>, transform_indices = @transform_4, window_bounds = array<i64: 1, 32>}, {pipeline_mode = #tpu.pipeline_mode<synchronous>, transform_indices = @transform_5, window_bounds = array<i64: 1, 64, 16>}, {transform_indices = @transform_6, window_bounds = array<i64: 8, 16, 32>}]} {
    %c0 = arith.constant 0 : index
    %c0_0 = arith.constant 0 : index
    %c0_1 = arith.constant 0 : index
    %0 = vector.load %arg1[%c0, %c0_0, %c0_1] : memref<8x16x32xf32, #tpu.memory_space<vmem>>, vector<8x16x32xf32>
    %1 = vector.shape_cast %0 : vector<8x16x32xf32> to vector<128x32xf32>
    %c0_2 = arith.constant 0 : index
    %c0_3 = arith.constant 0 : index
    %2 = vector.load %arg2[%c0_2, %c0_3] : memref<32x96xf32, #tpu.memory_space<vmem>>, vector<32x96xf32>
    %cst = arith.constant dense<0.000000e+00> : vector<128x96xf32>
    %3 = tpu.matmul %1, %2, %cst {dimension_numbers = #tpu.dot_dimension_numbers<[1], [0], [0], [1], [0, 0, 1, 1], [], []>} : vector<128x32xf32>, vector<32x96xf32>, vector<128x96xf32> -> vector<128x96xf32>
    %c0_4 = arith.constant 0 : index
    %c0_5 = arith.constant 0 : index
    %4 = vector.load %arg3[%c0_4, %c0_5] : memref<1x96xf32, #tpu.memory_space<vmem>>, vector<1x96xf32>
    %5 = vector.broadcast %4 : vector<1x96xf32> to vector<128x96xf32>
    %6 = arith.addf %3, %5 : vector<128x96xf32>
    %c0_6 = arith.constant 0 : index
    %c0_7 = arith.constant 0 : index
    %c0_8 = arith.constant 0 : index
    %7 = vector.load %arg6[%c0_6, %c0_7, %c0_8] : memref<1x64x16xf32, #tpu.memory_space<vmem>>, vector<1x64x16xf32>
    %8 = vector.extract_strided_slice %6 {offsets = [0, 0], sizes = [128, 8], strides = [1, 1]} : vector<128x96xf32> to vector<128x8xf32>
    %9 = vector.shape_cast %8 : vector<128x8xf32> to vector<8x16x8xf32>
    %10 = vector.extract_strided_slice %6 {offsets = [0, 32], sizes = [128, 8], strides = [1, 1]} : vector<128x96xf32> to vector<128x8xf32>
    %11 = vector.shape_cast %10 : vector<128x8xf32> to vector<8x16x8xf32>
    %12 = vector.extract_strided_slice %6 {offsets = [0, 64], sizes = [128, 8], strides = [1, 1]} : vector<128x96xf32> to vector<128x8xf32>
    %13 = vector.shape_cast %12 : vector<128x8xf32> to vector<8x16x8xf32>
    "tpu.trace_start"() <{level = 10 : i32, message = "bnd,bmd->bnm"}> : () -> ()
    %cst_9 = arith.constant dense<0.000000e+00> : vector<8x16x16xf32>
    %14 = tpu.matmul %9, %11, %cst_9 {dimension_numbers = #tpu.dot_dimension_numbers<[2], [2], [1], [1], [0, 0, 0, 1, 1, 1], [0], [0]>} : vector<8x16x8xf32>, vector<8x16x8xf32>, vector<8x16x16xf32> -> vector<8x16x16xf32>
    "tpu.trace_stop"() : () -> ()
    %cst_10 = arith.constant 0.353553385 : f32
    %15 = vector.broadcast %cst_10 : f32 to vector<8x16x16xf32>
    %16 = arith.mulf %14, %15 : vector<8x16x16xf32>
    %17 = vector.extract_strided_slice %7 {offsets = [0, 0, 0], sizes = [1, 16, 16], strides = [1, 1, 1]} : vector<1x64x16xf32> to vector<1x16x16xf32>
    %18 = vector.broadcast %17 : vector<1x16x16xf32> to vector<8x16x16xf32>
    %19 = arith.addf %16, %18 : vector<8x16x16xf32>
    %cst_11 = arith.constant dense<0xFF800000> : vector<8x16xf32>
    %20 = vector.multi_reduction <maximumf>, %19, %cst_11 [2] : vector<8x16x16xf32> to vector<8x16xf32>
    %21 = vector.shape_cast %20 : vector<8x16xf32> to vector<8x16x1xf32>
    %22 = vector.broadcast %21 : vector<8x16x1xf32> to vector<8x16x16xf32>
    %23 = arith.subf %19, %22 : vector<8x16x16xf32>
    %24 = math.exp %23 : vector<8x16x16xf32>
    %cst_12 = arith.constant dense<0.000000e+00> : vector<8x16xf32>
    %25 = vector.multi_reduction <add>, %24, %cst_12 [2] : vector<8x16x16xf32> to vector<8x16xf32>
    %26 = vector.shape_cast %25 : vector<8x16xf32> to vector<8x16x1xf32>
    %27 = vector.broadcast %26 : vector<8x16x1xf32> to vector<8x16x16xf32>
    %28 = arith.divf %24, %27 : vector<8x16x16xf32>
    "tpu.trace_start"() <{level = 10 : i32, message = "bnm,bmd->bnd"}> : () -> ()
    %cst_13 = arith.constant dense<0.000000e+00> : vector<8x16x8xf32>
    %29 = tpu.matmul %28, %13, %cst_13 {dimension_numbers = #tpu.dot_dimension_numbers<[2], [1], [1], [2], [0, 0, 0, 1, 1, 2], [0], [0]>} : vector<8x16x16xf32>, vector<8x16x8xf32>, vector<8x16x8xf32> -> vector<8x16x8xf32>
    "tpu.trace_stop"() : () -> ()
    %30 = vector.shape_cast %29 : vector<8x16x8xf32> to vector<128x8xf32>
    %c0_14 = arith.constant 0 : index
    %c0_15 = arith.constant 0 : index
    %31 = vector.load %arg8[%c0_14, %c0_15] : memref<128x32xf32, #tpu.memory_space<vmem>>, vector<128x8xf32>
    tpu.vector_store %arg8[%c0_14, %c0_15], %30 {strides = array<i32>} : memref<128x32xf32, #tpu.memory_space<vmem>>, vector<128x8xf32>,
    %32 = vector.extract_strided_slice %6 {offsets = [0, 8], sizes = [128, 8], strides = [1, 1]} : vector<128x96xf32> to vector<128x8xf32>
    %33 = vector.shape_cast %32 : vector<128x8xf32> to vector<8x16x8xf32>
    %34 = vector.extract_strided_slice %6 {offsets = [0, 40], sizes = [128, 8], strides = [1, 1]} : vector<128x96xf32> to vector<128x8xf32>
    %35 = vector.shape_cast %34 : vector<128x8xf32> to vector<8x16x8xf32>
    %36 = vector.extract_strided_slice %6 {offsets = [0, 72], sizes = [128, 8], strides = [1, 1]} : vector<128x96xf32> to vector<128x8xf32>
    %37 = vector.shape_cast %36 : vector<128x8xf32> to vector<8x16x8xf32>
    "tpu.trace_start"() <{level = 10 : i32, message = "bnd,bmd->bnm"}> : () -> ()
    %cst_16 = arith.constant dense<0.000000e+00> : vector<8x16x16xf32>
    %38 = tpu.matmul %33, %35, %cst_16 {dimension_numbers = #tpu.dot_dimension_numbers<[2], [2], [1], [1], [0, 0, 0, 1, 1, 1], [0], [0]>} : vector<8x16x8xf32>, vector<8x16x8xf32>, vector<8x16x16xf32> -> vector<8x16x16xf32>
    "tpu.trace_stop"() : () -> ()
    %cst_17 = arith.constant 0.353553385 : f32
    %39 = vector.broadcast %cst_17 : f32 to vector<8x16x16xf32>
    %40 = arith.mulf %38, %39 : vector<8x16x16xf32>
    %41 = vector.extract_strided_slice %7 {offsets = [0, 16, 0], sizes = [1, 16, 16], strides = [1, 1, 1]} : vector<1x64x16xf32> to vector<1x16x16xf32>
    %42 = vector.broadcast %41 : vector<1x16x16xf32> to vector<8x16x16xf32>
    %43 = arith.addf %40, %42 : vector<8x16x16xf32>
    %cst_18 = arith.constant dense<0xFF800000> : vector<8x16xf32>
    %44 = vector.multi_reduction <maximumf>, %43, %cst_18 [2] : vector<8x16x16xf32> to vector<8x16xf32>
    %45 = vector.shape_cast %44 : vector<8x16xf32> to vector<8x16x1xf32>
    %46 = vector.broadcast %45 : vector<8x16x1xf32> to vector<8x16x16xf32>
    %47 = arith.subf %43, %46 : vector<8x16x16xf32>
    %48 = math.exp %47 : vector<8x16x16xf32>
    %cst_19 = arith.constant dense<0.000000e+00> : vector<8x16xf32>
    %49 = vector.multi_reduction <add>, %48, %cst_19 [2] : vector<8x16x16xf32> to vector<8x16xf32>
    %50 = vector.shape_cast %49 : vector<8x16xf32> to vector<8x16x1xf32>
    %51 = vector.broadcast %50 : vector<8x16x1xf32> to vector<8x16x16xf32>
    %52 = arith.divf %48, %51 : vector<8x16x16xf32>
    "tpu.trace_start"() <{level = 10 : i32, message = "bnm,bmd->bnd"}> : () -> ()
    %cst_20 = arith.constant dense<0.000000e+00> : vector<8x16x8xf32>
    %53 = tpu.matmul %52, %37, %cst_20 {dimension_numbers = #tpu.dot_dimension_numbers<[2], [1], [1], [2], [0, 0, 0, 1, 1, 2], [0], [0]>} : vector<8x16x16xf32>, vector<8x16x8xf32>, vector<8x16x8xf32> -> vector<8x16x8xf32>
    "tpu.trace_stop"() : () -> ()
    %54 = vector.shape_cast %53 : vector<8x16x8xf32> to vector<128x8xf32>
    %c0_21 = arith.constant 0 : index
    %c8 = arith.constant 8 : index
    %55 = vector.load %arg8[%c0_21, %c8] : memref<128x32xf32, #tpu.memory_space<vmem>>, vector<128x8xf32>
    tpu.vector_store %arg8[%c0_21, %c8], %54 {strides = array<i32>} : memref<128x32xf32, #tpu.memory_space<vmem>>, vector<128x8xf32>,
    %56 = vector.extract_strided_slice %6 {offsets = [0, 16], sizes = [128, 8], strides = [1, 1]} : vector<128x96xf32> to vector<128x8xf32>
    %57 = vector.shape_cast %56 : vector<128x8xf32> to vector<8x16x8xf32>
    %58 = vector.extract_strided_slice %6 {offsets = [0, 48], sizes = [128, 8], strides = [1, 1]} : vector<128x96xf32> to vector<128x8xf32>
    %59 = vector.shape_cast %58 : vector<128x8xf32> to vector<8x16x8xf32>
    %60 = vector.extract_strided_slice %6 {offsets = [0, 80], sizes = [128, 8], strides = [1, 1]} : vector<128x96xf32> to vector<128x8xf32>
    %61 = vector.shape_cast %60 : vector<128x8xf32> to vector<8x16x8xf32>
    "tpu.trace_start"() <{level = 10 : i32, message = "bnd,bmd->bnm"}> : () -> ()
    %cst_22 = arith.constant dense<0.000000e+00> : vector<8x16x16xf32>
    %62 = tpu.matmul %57, %59, %cst_22 {dimension_numbers = #tpu.dot_dimension_numbers<[2], [2], [1], [1], [0, 0, 0, 1, 1, 1], [0], [0]>} : vector<8x16x8xf32>, vector<8x16x8xf32>, vector<8x16x16xf32> -> vector<8x16x16xf32>
    "tpu.trace_stop"() : () -> ()
    %cst_23 = arith.constant 0.353553385 : f32
    %63 = vector.broadcast %cst_23 : f32 to vector<8x16x16xf32>
    %64 = arith.mulf %62, %63 : vector<8x16x16xf32>
    %65 = vector.extract_strided_slice %7 {offsets = [0, 32, 0], sizes = [1, 16, 16], strides = [1, 1, 1]} : vector<1x64x16xf32> to vector<1x16x16xf32>
    %66 = vector.broadcast %65 : vector<1x16x16xf32> to vector<8x16x16xf32>
    %67 = arith.addf %64, %66 : vector<8x16x16xf32>
    %cst_24 = arith.constant dense<0xFF800000> : vector<8x16xf32>
    %68 = vector.multi_reduction <maximumf>, %67, %cst_24 [2] : vector<8x16x16xf32> to vector<8x16xf32>
    %69 = vector.shape_cast %68 : vector<8x16xf32> to vector<8x16x1xf32>
    %70 = vector.broadcast %69 : vector<8x16x1xf32> to vector<8x16x16xf32>
    %71 = arith.subf %67, %70 : vector<8x16x16xf32>
    %72 = math.exp %71 : vector<8x16x16xf32>
    %cst_25 = arith.constant dense<0.000000e+00> : vector<8x16xf32>
    %73 = vector.multi_reduction <add>, %72, %cst_25 [2] : vector<8x16x16xf32> to vector<8x16xf32>
    %74 = vector.shape_cast %73 : vector<8x16xf32> to vector<8x16x1xf32>
    %75 = vector.broadcast %74 : vector<8x16x1xf32> to vector<8x16x16xf32>
    %76 = arith.divf %72, %75 : vector<8x16x16xf32>
    "tpu.trace_start"() <{level = 10 : i32, message = "bnm,bmd->bnd"}> : () -> ()
    %cst_26 = arith.constant dense<0.000000e+00> : vector<8x16x8xf32>
    %77 = tpu.matmul %76, %61, %cst_26 {dimension_numbers = #tpu.dot_dimension_numbers<[2], [1], [1], [2], [0, 0, 0, 1, 1, 2], [0], [0]>} : vector<8x16x16xf32>, vector<8x16x8xf32>, vector<8x16x8xf32> -> vector<8x16x8xf32>
    "tpu.trace_stop"() : () -> ()
    %78 = vector.shape_cast %77 : vector<8x16x8xf32> to vector<128x8xf32>
    %c0_27 = arith.constant 0 : index
    %c16 = arith.constant 16 : index
    %79 = vector.load %arg8[%c0_27, %c16] : memref<128x32xf32, #tpu.memory_space<vmem>>, vector<128x8xf32>
    tpu.vector_store %arg8[%c0_27, %c16], %78 {strides = array<i32>} : memref<128x32xf32, #tpu.memory_space<vmem>>, vector<128x8xf32>,
    %80 = vector.extract_strided_slice %6 {offsets = [0, 24], sizes = [128, 8], strides = [1, 1]} : vector<128x96xf32> to vector<128x8xf32>
    %81 = vector.shape_cast %80 : vector<128x8xf32> to vector<8x16x8xf32>
    %82 = vector.extract_strided_slice %6 {offsets = [0, 56], sizes = [128, 8], strides = [1, 1]} : vector<128x96xf32> to vector<128x8xf32>
    %83 = vector.shape_cast %82 : vector<128x8xf32> to vector<8x16x8xf32>
    %84 = vector.extract_strided_slice %6 {offsets = [0, 88], sizes = [128, 8], strides = [1, 1]} : vector<128x96xf32> to vector<128x8xf32>
    %85 = vector.shape_cast %84 : vector<128x8xf32> to vector<8x16x8xf32>
    "tpu.trace_start"() <{level = 10 : i32, message = "bnd,bmd->bnm"}> : () -> ()
    %cst_28 = arith.constant dense<0.000000e+00> : vector<8x16x16xf32>
    %86 = tpu.matmul %81, %83, %cst_28 {dimension_numbers = #tpu.dot_dimension_numbers<[2], [2], [1], [1], [0, 0, 0, 1, 1, 1], [0], [0]>} : vector<8x16x8xf32>, vector<8x16x8xf32>, vector<8x16x16xf32> -> vector<8x16x16xf32>
    "tpu.trace_stop"() : () -> ()
    %cst_29 = arith.constant 0.353553385 : f32
    %87 = vector.broadcast %cst_29 : f32 to vector<8x16x16xf32>
    %88 = arith.mulf %86, %87 : vector<8x16x16xf32>
    %89 = vector.extract_strided_slice %7 {offsets = [0, 48, 0], sizes = [1, 16, 16], strides = [1, 1, 1]} : vector<1x64x16xf32> to vector<1x16x16xf32>
    %90 = vector.broadcast %89 : vector<1x16x16xf32> to vector<8x16x16xf32>
    %91 = arith.addf %88, %90 : vector<8x16x16xf32>
    %cst_30 = arith.constant dense<0xFF800000> : vector<8x16xf32>
    %92 = vector.multi_reduction <maximumf>, %91, %cst_30 [2] : vector<8x16x16xf32> to vector<8x16xf32>
    %93 = vector.shape_cast %92 : vector<8x16xf32> to vector<8x16x1xf32>
    %94 = vector.broadcast %93 : vector<8x16x1xf32> to vector<8x16x16xf32>
    %95 = arith.subf %91, %94 : vector<8x16x16xf32>
    %96 = math.exp %95 : vector<8x16x16xf32>
    %cst_31 = arith.constant dense<0.000000e+00> : vector<8x16xf32>
    %97 = vector.multi_reduction <add>, %96, %cst_31 [2] : vector<8x16x16xf32> to vector<8x16xf32>
    %98 = vector.shape_cast %97 : vector<8x16xf32> to vector<8x16x1xf32>
    %99 = vector.broadcast %98 : vector<8x16x1xf32> to vector<8x16x16xf32>
    %100 = arith.divf %96, %99 : vector<8x16x16xf32>
    "tpu.trace_start"() <{level = 10 : i32, message = "bnm,bmd->bnd"}> : () -> ()
    %cst_32 = arith.constant dense<0.000000e+00> : vector<8x16x8xf32>
    %101 = tpu.matmul %100, %85, %cst_32 {dimension_numbers = #tpu.dot_dimension_numbers<[2], [1], [1], [2], [0, 0, 0, 1, 1, 2], [0], [0]>} : vector<8x16x16xf32>, vector<8x16x8xf32>, vector<8x16x8xf32> -> vector<8x16x8xf32>
    "tpu.trace_stop"() : () -> ()
    %102 = vector.shape_cast %101 : vector<8x16x8xf32> to vector<128x8xf32>
    %c0_33 = arith.constant 0 : index
    %c24 = arith.constant 24 : index
    %103 = vector.load %arg8[%c0_33, %c24] : memref<128x32xf32, #tpu.memory_space<vmem>>, vector<128x8xf32>
    tpu.vector_store %arg8[%c0_33, %c24], %102 {strides = array<i32>} : memref<128x32xf32, #tpu.memory_space<vmem>>, vector<128x8xf32>,
    %c0_34 = arith.constant 0 : index
    %c0_35 = arith.constant 0 : index
    %104 = vector.load %arg8[%c0_34, %c0_35] : memref<128x32xf32, #tpu.memory_space<vmem>>, vector<128x32xf32>
    %c0_36 = arith.constant 0 : index
    %c0_37 = arith.constant 0 : index
    %105 = vector.load %arg4[%c0_36, %c0_37] : memref<32x32xf32, #tpu.memory_space<vmem>>, vector<32x32xf32>
    %cst_38 = arith.constant dense<0.000000e+00> : vector<128x32xf32>
    %106 = tpu.matmul %104, %105, %cst_38 {dimension_numbers = #tpu.dot_dimension_numbers<[1], [0], [0], [1], [0, 0, 1, 1], [], []>} : vector<128x32xf32>, vector<32x32xf32>, vector<128x32xf32> -> vector<128x32xf32>
    %c0_39 = arith.constant 0 : index
    %c0_40 = arith.constant 0 : index
    %107 = vector.load %arg5[%c0_39, %c0_40] : memref<1x32xf32, #tpu.memory_space<vmem>>, vector<1x32xf32>
    %108 = vector.broadcast %107 : vector<1x32xf32> to vector<128x32xf32>
    %109 = arith.addf %106, %108 : vector<128x32xf32>
    %110 = vector.shape_cast %109 : vector<128x32xf32> to vector<8x16x32xf32>
    %c0_41 = arith.constant 0 : index
    %c0_42 = arith.constant 0 : index
    %c0_43 = arith.constant 0 : index
    %111 = vector.load %arg7[%c0_41, %c0_42, %c0_43] : memref<8x16x32xf32, #tpu.memory_space<vmem>>, vector<8x16x32xf32>
    tpu.vector_store %arg7[%c0_41, %c0_42, %c0_43], %110 {strides = array<i32>} : memref<8x16x32xf32, #tpu.memory_space<vmem>>, vector<8x16x32xf32>,
    return
  }
  func.func @transform_0(%arg0: i32) -> (i32, i32, i32) {
    %c0_i32 = arith.constant 0 : i32
    %c0_i32_0 = arith.constant 0 : i32
    %c0_i32_1 = arith.constant 0 : i32
    return %arg0, %c0_i32, %c0_i32_0 : i32, i32, i32
  }
  func.func @transform_1(%arg0: i32) -> (i32, i32) {
    %c0_i32 = arith.constant 0 : i32
    %c0_i32_0 = arith.constant 0 : i32
    %c0_i32_1 = arith.constant 0 : i32
    return %c0_i32, %c0_i32_0 : i32, i32
  }
  func.func @transform_2(%arg0: i32) -> (i32, i32) {
    %c0_i32 = arith.constant 0 : i32
    %c0_i32_0 = arith.constant 0 : i32
    %c0_i32_1 = arith.constant 0 : i32
    return %c0_i32, %c0_i32_0 : i32, i32
  }
  func.func @transform_3(%arg0: i32) -> (i32, i32) {
    %c0_i32 = arith.constant 0 : i32
    %c0_i32_0 = arith.constant 0 : i32
    %c0_i32_1 = arith.constant 0 : i32
    return %c0_i32, %c0_i32_0 : i32, i32
  }
  func.func @transform_4(%arg0: i32) -> (i32, i32) {
    %c0_i32 = arith.constant 0 : i32
    %c0_i32_0 = arith.constant 0 : i32
    %c0_i32_1 = arith.constant 0 : i32
    return %c0_i32, %c0_i32_0 : i32, i32
  }
  func.func @transform_5(%arg0: i32) -> (i32, i32, i32) {
    %c0_i32 = arith.constant 0 : i32
    %c0_i32_0 = arith.constant 0 : i32
    %c0_i32_1 = arith.constant 0 : i32
    %c0_i32_2 = arith.constant 0 : i32
    return %c0_i32, %c0_i32_0, %c0_i32_1 : i32, i32, i32
  }
  func.func @transform_6(%arg0: i32) -> (i32, i32, i32) {
    %c0_i32 = arith.constant 0 : i32
    %c0_i32_0 = arith.constant 0 : i32
    %c0_i32_1 = arith.constant 0 : i32
    return %arg0, %c0_i32, %c0_i32_0 : i32, i32, i32
  }
}

</mosaic_0001>

<llo_original>
// kernel: tpu_custom_call.1
$region0: #{tpu_custom_call.1}
  #allocation0 [shape = 'u32[]', space=smem, size = 0x4, offset = 0x4, fixed_abs, tag = 'smem constant byte address 0x4 - core index']
  #allocation1 [shape = 'u32[72,128]{1,0:T(1,128)}', space=vmem, size = 0x9000, scoped, tag = 'internal scratch']
  #allocation2 [shape = 'f32[128,32]{1,0:T(8,128)}', space=vmem, size = 0x10000, scoped, tag = 'scratch operand']
  %s0 = inlined_call_operand.hbm [shape: f32[8,16,32], index: 0, kind: input, shape index: {}]
  %s1 = inlined_call_operand.vmem [shape: f32[32,96], index: 1, kind: input, shape index: {}]
  %s2 = inlined_call_operand.vmem [shape: f32[1,96], index: 2, kind: input, shape index: {}]
  %s3 = inlined_call_operand.vmem [shape: f32[32,32], index: 3, kind: input, shape index: {}]
  %s4 = inlined_call_operand.vmem [shape: f32[1,32], index: 4, kind: input, shape index: {}]
  %s5 = inlined_call_operand.vmem [shape: f32[1,64,16], index: 5, kind: input, shape index: {}]
  %s6 = inlined_call_operand.hbm [shape: f32[8,16,32], index: 6, kind: output, shape index: {}]
  %s7 = sld [smem:[#allocation0]]
  $region38: #{tpu_custom_call.1} parent=0
    _
  %s9 = ssub.s32 1, %s7
  %s10 = scalar_select 0, %s9, %s7
  $region1: #{tpu_custom_call.1} parent=0
    #allocation3 [shape = 'u8[65536]{0}', space=vmem, size = 0x10000, scoped, tag = 'input window, operand 0, single buffered']
    #allocation4 [shape = 's32[1]{0}', space=sflag, size = 0x4, scoped, tag = 'scoped memory for tpu_custom_call.1']
    #allocation5 [shape = 's32[1]{0}', space=sflag, size = 0x4, scoped, tag = 'scoped memory for tpu_custom_call.1']
    #allocation6 [shape = 'u8[65536]{0}', space=vmem, size = 0x10000, scoped, tag = 'output window, operand 0, single buffered']
    %11 = vsyncpa [#allocation4], 0
    %12 = vsyncpa [#allocation5], 0
    // Predicated region
    $region2: #{tpu_custom_call.1} parent=1 // pred_check
      _
    $region3: #{tpu_custom_call.1} parent=1 // pred_check_branch
      %14 = sbr.rel (0) target = $region5
    $region4: #{tpu_custom_call.1} parent=1 // pred_region
      %16 = vsyncadd [#allocation4], 0
      %s17 = sshll.u32 %s0, 4
      %s18 = int_to_ptr.hbm [resolvable:$true] %s17
      %s19 = sshll.u32 [#allocation3], 4
      %s20 = int_to_ptr.vmem [resolvable:$true] %s19
      %25 = dma.hbm_to_vmem [thread:$0]  %s18, 2048, %s20, [#allocation4], 128, 128, 8
    $region5: #{tpu_custom_call.1} parent=1 // pred_fallthru
      _
    // Predicated region
    $region6: #{tpu_custom_call.1} parent=1 // pred_check
      _
    $region7: #{tpu_custom_call.1} parent=1 // pred_check_branch
      %27 = sbr.rel (0) target = $region9
    $region8: #{tpu_custom_call.1} parent=1 // pred_region
      _
    $region9: #{tpu_custom_call.1} parent=1 // pred_fallthru
      _
    // Predicated region
    $region10: #{tpu_custom_call.1} parent=1 // pred_check
      _
    $region11: #{tpu_custom_call.1} parent=1 // pred_check_branch
      %29 = sbr.rel (0) target = $region13
    $region12: #{tpu_custom_call.1} parent=1 // pred_region
      _
    $region13: #{tpu_custom_call.1} parent=1 // pred_fallthru
      _
    // Predicated region
    $region14: #{tpu_custom_call.1} parent=1 // pred_check
      _
    $region15: #{tpu_custom_call.1} parent=1 // pred_check_branch
      %31 = sbr.rel (0) target = $region17
    $region16: #{tpu_custom_call.1} parent=1 // pred_region
      _
    $region17: #{tpu_custom_call.1} parent=1 // pred_fallthru
      _
    // Predicated region
    $region18: #{tpu_custom_call.1} parent=1 // pred_check
      _
    $region19: #{tpu_custom_call.1} parent=1 // pred_check_branch
      %33 = sbr.rel (0) target = $region21
    $region20: #{tpu_custom_call.1} parent=1 // pred_region
      _
    $region21: #{tpu_custom_call.1} parent=1 // pred_fallthru
      _
    // Predicated region
    $region22: #{tpu_custom_call.1} parent=1 // pred_check
      _
    $region23: #{tpu_custom_call.1} parent=1 // pred_check_branch
      %35 = sbr.rel (0) target = $region25
    $region24: #{tpu_custom_call.1} parent=1 // pred_region
      _
    $region25: #{tpu_custom_call.1} parent=1 // pred_fallthru
      _
    // Predicated region
    $region26: #{tpu_custom_call.1} parent=1 // pred_check
      _
    $region27: #{tpu_custom_call.1} parent=1 // pred_check_branch
      %37 = sbr.rel (0) target = $region29
    $region28: #{tpu_custom_call.1} parent=1 // pred_region
      %39 = dma.done [#allocation4], 2048
    $region29: #{tpu_custom_call.1} parent=1 // pred_fallthru
      _
    %v40 = vld [vmem:[#allocation3] sm:$0xff]
    %v41 = vld [vmem:[#allocation3 + $0x8] sm:$0xff]
    %v42 = vld [vmem:[#allocation3 + $0x10] sm:$0xff]
    %v43 = vld [vmem:[#allocation3 + $0x18] sm:$0xff]
    %v44 = vld [vmem:[#allocation3 + $0x20] sm:$0xff]
    %v45 = vld [vmem:[#allocation3 + $0x28] sm:$0xff]
    %v46 = vld [vmem:[#allocation3 + $0x30] sm:$0xff]
    %v47 = vld [vmem:[#allocation3 + $0x38] sm:$0xff]
    %v48 = vld [vmem:[#allocation3 + $0x40] sm:$0xff]
    %v49 = vld [vmem:[#allocation3 + $0x48] sm:$0xff]
    %v50 = vld [vmem:[#allocation3 + $0x50] sm:$0xff]
    %v51 = vld [vmem:[#allocation3 + $0x58] sm:$0xff]
    %v52 = vld [vmem:[#allocation3 + $0x60] sm:$0xff]
    %v53 = vld [vmem:[#allocation3 + $0x68] sm:$0xff]
    %v54 = vld [vmem:[#allocation3 + $0x70] sm:$0xff]
    %v55 = vld [vmem:[#allocation3 + $0x78] sm:$0xff]
    %v56 = vld [vmem:[%s1] sm:$0xff]
    %v57 = vld [vmem:[%s1 + $0x8] sm:$0xff]
    %v58 = vld [vmem:[%s1 + $0x10] sm:$0xff]
    %v59 = vld [vmem:[%s1 + $0x18] sm:$0xff]
    %v60 = vld [vmem:[%s2] sm:$0x1]
    %v62 = vperm.slane %v60, 0
    %vm64 = vcmask 261120
    %v66 = vsel %vm64, %v40, 0
    %v69 = vsel %vm64, %v41, 0
    %v72 = vsel %vm64, %v42, 0
    %v75 = vsel %vm64, %v43, 0
    %v78 = vsel %vm64, %v44, 0
    %v81 = vsel %vm64, %v45, 0
    %v84 = vsel %vm64, %v46, 0
    %v87 = vsel %vm64, %v47, 0
    %v90 = vsel %vm64, %v48, 0
    %v93 = vsel %vm64, %v49, 0
    %v96 = vsel %vm64, %v50, 0
    %v99 = vsel %vm64, %v51, 0
    %v102 = vsel %vm64, %v52, 0
    %v105 = vsel %vm64, %v53, 0
    %v108 = vsel %vm64, %v54, 0
    %v111 = vsel %vm64, %v55, 0
    %113 = vmatpush.msra.mxu0 0.0
    %114 = vmatpush.msra.mxu0 0.0
    %115 = vmatpush.msra.mxu0 0.0
    %116 = vmatpush.msra.mxu0 0.0
    %117 = vmatpush.msra.mxu0 0.0
    %118 = vmatpush.msra.mxu0 0.0
    %119 = vmatpush.msra.mxu0 0.0
    %120 = vmatpush.msra.mxu0 0.0
    %121 = vmatpush.msra.mxu0 0.0
    %122 = vmatpush.msra.mxu0 0.0
    %123 = vmatpush.msra.mxu0 0.0
    %124 = vmatpush.msra.mxu0 0.0
    %125 = vmatpush.msra.mxu0 %v59
    %126 = vmatpush.msra.mxu0 %v58
    %127 = vmatpush.msra.mxu0 %v57
    %128 = vmatpush.msra.mxu0 %v56
    %129 = vmatmul.f32.gmra.mxu0 %v66
    %v130 = vpop.f32.mrf.mxu0
    %v131 = vadd.f32 %v62, %v130
    %132 = vmatmul.f32.gmra.mxu0 %v69
    %v133 = vpop.f32.mrf.mxu0
    %v134 = vadd.f32 %v62, %v133
    %135 = vmatmul.f32.gmra.mxu0 %v72
    %v136 = vpop.f32.mrf.mxu0
    %v137 = vadd.f32 %v62, %v136
    %138 = vmatmul.f32.gmra.mxu0 %v75
    %v139 = vpop.f32.mrf.mxu0
    %v140 = vadd.f32 %v62, %v139
    %141 = vmatmul.f32.gmra.mxu0 %v78
    %v142 = vpop.f32.mrf.mxu0
    %v143 = vadd.f32 %v62, %v142
    %144 = vmatmul.f32.gmra.mxu0 %v81
    %v145 = vpop.f32.mrf.mxu0
    %v146 = vadd.f32 %v62, %v145
    %147 = vmatmul.f32.gmra.mxu0 %v84
    %v148 = vpop.f32.mrf.mxu0
    %v149 = vadd.f32 %v62, %v148
    %150 = vmatmul.f32.gmra.mxu0 %v87
    %v151 = vpop.f32.mrf.mxu0
    %v152 = vadd.f32 %v62, %v151
    %153 = vmatmul.f32.gmra.mxu0 %v90
    %v154 = vpop.f32.mrf.mxu0
    %v155 = vadd.f32 %v62, %v154
    %156 = vmatmul.f32.gmra.mxu0 %v93
    %v157 = vpop.f32.mrf.mxu0
    %v158 = vadd.f32 %v62, %v157
    %159 = vmatmul.f32.gmra.mxu0 %v96
    %v160 = vpop.f32.mrf.mxu0
    %v161 = vadd.f32 %v62, %v160
    %162 = vmatmul.f32.gmra.mxu0 %v99
    %v163 = vpop.f32.mrf.mxu0
    %v164 = vadd.f32 %v62, %v163
    %165 = vmatmul.f32.gmra.mxu0 %v102
    %v166 = vpop.f32.mrf.mxu0
    %v167 = vadd.f32 %v62, %v166
    %168 = vmatmul.f32.gmra.mxu0 %v105
    %v169 = vpop.f32.mrf.mxu0
    %v170 = vadd.f32 %v62, %v169
    %171 = vmatmul.f32.gmra.mxu0 %v108
    %v172 = vpop.f32.mrf.mxu0
    %v173 = vadd.f32 %v62, %v172
    %174 = vmatmul.f32.gmra.mxu0 %v111
    %v175 = vpop.f32.mrf.mxu0
    %v176 = vadd.f32 %v62, %v175
    %177 = vdwg.mxu0
    %v178 = vld [vmem:[%s5] sm:$0xff]
    %v179 = vld [vmem:[%s5 + $0x8] sm:$0xff]
    %v180 = vld [vmem:[%s5 + $0x10] sm:$0xff]
    %v181 = vld [vmem:[%s5 + $0x18] sm:$0xff]
    %v182 = vld [vmem:[%s5 + $0x20] sm:$0xff]
    %v183 = vld [vmem:[%s5 + $0x28] sm:$0xff]
    %v184 = vld [vmem:[%s5 + $0x30] sm:$0xff]
    %v185 = vld [vmem:[%s5 + $0x38] sm:$0xff]
    %188 = vrot.lane.b32.xlu0 %v131, 96
    %v189 = vpop.permute.xlu0 %188
    %190 = vrot.lane.b32.xlu0 %v134, 96
    %v191 = vpop.permute.xlu0 %190
    %vm192 = vcmask 64512
    %v193 = vsel %vm192, %v131, 0
    %v195 = vsel %vm192, %v134, 0
    %v197 = vsel %vm192, %v189, 0
    %v199 = vsel %vm192, %v191, 0
    %201 = vmatpush.xpose.msra.mxu0 0.0
    %202 = vmatpush.xpose.msra.mxu0 0.0
    %203 = vmatpush.xpose.msra.mxu0 0.0
    %204 = vmatpush.xpose.msra.mxu0 0.0
    %205 = vmatpush.xpose.msra.mxu0 0.0
    %206 = vmatpush.xpose.msra.mxu0 0.0
    %207 = vmatpush.xpose.msra.mxu0 0.0
    %208 = vmatpush.xpose.msra.mxu0 0.0
    %209 = vmatpush.xpose.msra.mxu0 0.0
    %210 = vmatpush.xpose.msra.mxu0 0.0
    %211 = vmatpush.xpose.msra.mxu0 0.0
    %212 = vmatpush.xpose.msra.mxu0 0.0
    %213 = vmatpush.xpose.msra.mxu0 0.0
    %214 = vmatpush.xpose.msra.mxu0 0.0
    %215 = vmatpush.xpose.msra.mxu0 %v199
    %216 = vmatpush.xpose.msra.mxu0 %v197
    %217 = vmatmul.f32.gmra.mxu0 %v193
    %v218 = vpop.f32.mrf.mxu0
    %v219 = vadd.f32 0.0, %v218
    %220 = vmatmul.f32.gmra.mxu0 %v195
    %v221 = vpop.f32.mrf.mxu0
    %v222 = vadd.f32 0.0, %v221
    %223 = vdwg.mxu0
    %226 = vrot.lane.b32.xlu0 %v137, 96
    %v227 = vpop.permute.xlu0 %226
    %228 = vrot.lane.b32.xlu0 %v140, 96
    %v229 = vpop.permute.xlu0 %228
    %v230 = vsel %vm192, %v137, 0
    %v232 = vsel %vm192, %v140, 0
    %v234 = vsel %vm192, %v227, 0
    %v236 = vsel %vm192, %v229, 0
    %238 = vmatpush.xpose.msra.mxu0 0.0
    %239 = vmatpush.xpose.msra.mxu0 0.0
    %240 = vmatpush.xpose.msra.mxu0 0.0
    %241 = vmatpush.xpose.msra.mxu0 0.0
    %242 = vmatpush.xpose.msra.mxu0 0.0
    %243 = vmatpush.xpose.msra.mxu0 0.0
    %244 = vmatpush.xpose.msra.mxu0 0.0
    %245 = vmatpush.xpose.msra.mxu0 0.0
    %246 = vmatpush.xpose.msra.mxu0 0.0
    %247 = vmatpush.xpose.msra.mxu0 0.0
    %248 = vmatpush.xpose.msra.mxu0 0.0
    %249 = vmatpush.xpose.msra.mxu0 0.0
    %250 = vmatpush.xpose.msra.mxu0 0.0
    %251 = vmatpush.xpose.msra.mxu0 0.0
    %252 = vmatpush.xpose.msra.mxu0 %v236
    %253 = vmatpush.xpose.msra.mxu0 %v234
    %254 = vmatmul.f32.gmra.mxu0 %v230
    %v255 = vpop.f32.mrf.mxu0
    %v256 = vadd.f32 0.0, %v255
    %257 = vmatmul.f32.gmra.mxu0 %v232
    %v258 = vpop.f32.mrf.mxu0
    %v259 = vadd.f32 0.0, %v258
    %260 = vdwg.mxu0
    %263 = vrot.lane.b32.xlu0 %v143, 96
    %v264 = vpop.permute.xlu0 %263
    %265 = vrot.lane.b32.xlu0 %v146, 96
    %v266 = vpop.permute.xlu0 %265
    %v267 = vsel %vm192, %v143, 0
    %v269 = vsel %vm192, %v146, 0
    %v271 = vsel %vm192, %v264, 0
    %v273 = vsel %vm192, %v266, 0
    %275 = vmatpush.xpose.msra.mxu0 0.0
    %276 = vmatpush.xpose.msra.mxu0 0.0
    %277 = vmatpush.xpose.msra.mxu0 0.0
    %278 = vmatpush.xpose.msra.mxu0 0.0
    %279 = vmatpush.xpose.msra.mxu0 0.0
    %280 = vmatpush.xpose.msra.mxu0 0.0
    %281 = vmatpush.xpose.msra.mxu0 0.0
    %282 = vmatpush.xpose.msra.mxu0 0.0
    %283 = vmatpush.xpose.msra.mxu0 0.0
    %284 = vmatpush.xpose.msra.mxu0 0.0
    %285 = vmatpush.xpose.msra.mxu0 0.0
    %286 = vmatpush.xpose.msra.mxu0 0.0
    %287 = vmatpush.xpose.msra.mxu0 0.0
    %288 = vmatpush.xpose.msra.mxu0 0.0
    %289 = vmatpush.xpose.msra.mxu0 %v273
    %290 = vmatpush.xpose.msra.mxu0 %v271
    %291 = vmatmul.f32.gmra.mxu0 %v267
    %v292 = vpop.f32.mrf.mxu0
    %v293 = vadd.f32 0.0, %v292
    %294 = vmatmul.f32.gmra.mxu0 %v269
    %v295 = vpop.f32.mrf.mxu0
    %v296 = vadd.f32 0.0, %v295
    %297 = vdwg.mxu0
    %300 = vrot.lane.b32.xlu0 %v149, 96
    %v301 = vpop.permute.xlu0 %300
    %302 = vrot.lane.b32.xlu0 %v152, 96
    %v303 = vpop.permute.xlu0 %302
    %v304 = vsel %vm192, %v149, 0
    %v306 = vsel %vm192, %v152, 0
    %v308 = vsel %vm192, %v301, 0
    %v310 = vsel %vm192, %v303, 0
    %312 = vmatpush.xpose.msra.mxu0 0.0
    %313 = vmatpush.xpose.msra.mxu0 0.0
    %314 = vmatpush.xpose.msra.mxu0 0.0
    %315 = vmatpush.xpose.msra.mxu0 0.0
    %316 = vmatpush.xpose.msra.mxu0 0.0
    %317 = vmatpush.xpose.msra.mxu0 0.0
    %318 = vmatpush.xpose.msra.mxu0 0.0
    %319 = vmatpush.xpose.msra.mxu0 0.0
    %320 = vmatpush.xpose.msra.mxu0 0.0
    %321 = vmatpush.xpose.msra.mxu0 0.0
    %322 = vmatpush.xpose.msra.mxu0 0.0
    %323 = vmatpush.xpose.msra.mxu0 0.0
    %324 = vmatpush.xpose.msra.mxu0 0.0
    %325 = vmatpush.xpose.msra.mxu0 0.0
    %326 = vmatpush.xpose.msra.mxu0 %v310
    %327 = vmatpush.xpose.msra.mxu0 %v308
    %328 = vmatmul.f32.gmra.mxu0 %v304
    %v329 = vpop.f32.mrf.mxu0
    %v330 = vadd.f32 0.0, %v329
    %331 = vmatmul.f32.gmra.mxu0 %v306
    %v332 = vpop.f32.mrf.mxu0
    %v333 = vadd.f32 0.0, %v332
    %334 = vdwg.mxu0
    %337 = vrot.lane.b32.xlu0 %v155, 96
    %v338 = vpop.permute.xlu0 %337
    %339 = vrot.lane.b32.xlu0 %v158, 96
    %v340 = vpop.permute.xlu0 %339
    %v341 = vsel %vm192, %v155, 0
    %v343 = vsel %vm192, %v158, 0
    %v345 = vsel %vm192, %v338, 0
    %v347 = vsel %vm192, %v340, 0
    %349 = vmatpush.xpose.msra.mxu0 0.0
    %350 = vmatpush.xpose.msra.mxu0 0.0
    %351 = vmatpush.xpose.msra.mxu0 0.0
    %352 = vmatpush.xpose.msra.mxu0 0.0
    %353 = vmatpush.xpose.msra.mxu0 0.0
    %354 = vmatpush.xpose.msra.mxu0 0.0
    %355 = vmatpush.xpose.msra.mxu0 0.0
    %356 = vmatpush.xpose.msra.mxu0 0.0
    %357 = vmatpush.xpose.msra.mxu0 0.0
    %358 = vmatpush.xpose.msra.mxu0 0.0
    %359 = vmatpush.xpose.msra.mxu0 0.0
    %360 = vmatpush.xpose.msra.mxu0 0.0
    %361 = vmatpush.xpose.msra.mxu0 0.0
    %362 = vmatpush.xpose.msra.mxu0 0.0
    %363 = vmatpush.xpose.msra.mxu0 %v347
    %364 = vmatpush.xpose.msra.mxu0 %v345
    %365 = vmatmul.f32.gmra.mxu0 %v341
    %v366 = vpop.f32.mrf.mxu0
    %v367 = vadd.f32 0.0, %v366
    %368 = vmatmul.f32.gmra.mxu0 %v343
    %v369 = vpop.f32.mrf.mxu0
    %v370 = vadd.f32 0.0, %v369
    %371 = vdwg.mxu0
    %374 = vrot.lane.b32.xlu0 %v161, 96
    %v375 = vpop.permute.xlu0 %374
    %376 = vrot.lane.b32.xlu0 %v164, 96
    %v377 = vpop.permute.xlu0 %376
    %v378 = vsel %vm192, %v161, 0
    %v380 = vsel %vm192, %v164, 0
    %v382 = vsel %vm192, %v375, 0
    %v384 = vsel %vm192, %v377, 0
    %386 = vmatpush.xpose.msra.mxu0 0.0
    %387 = vmatpush.xpose.msra.mxu0 0.0
    %388 = vmatpush.xpose.msra.mxu0 0.0
    %389 = vmatpush.xpose.msra.mxu0 0.0
    %390 = vmatpush.xpose.msra.mxu0 0.0
    %391 = vmatpush.xpose.msra.mxu0 0.0
    %392 = vmatpush.xpose.msra.mxu0 0.0
    %393 = vmatpush.xpose.msra.mxu0 0.0
    %394 = vmatpush.xpose.msra.mxu0 0.0
    %395 = vmatpush.xpose.msra.mxu0 0.0
    %396 = vmatpush.xpose.msra.mxu0 0.0
    %397 = vmatpush.xpose.msra.mxu0 0.0
    %398 = vmatpush.xpose.msra.mxu0 0.0
    %399 = vmatpush.xpose.msra.mxu0 0.0
    %400 = vmatpush.xpose.msra.mxu0 %v384
    %401 = vmatpush.xpose.msra.mxu0 %v382
    %402 = vmatmul.f32.gmra.mxu0 %v378
    %v403 = vpop.f32.mrf.mxu0
    %v404 = vadd.f32 0.0, %v403
    %405 = vmatmul.f32.gmra.mxu0 %v380
    %v406 = vpop.f32.mrf.mxu0
    %v407 = vadd.f32 0.0, %v406
    %408 = vdwg.mxu0
    %411 = vrot.lane.b32.xlu0 %v167, 96
    %v412 = vpop.permute.xlu0 %411
    %413 = vrot.lane.b32.xlu0 %v170, 96
    %v414 = vpop.permute.xlu0 %413
    %v415 = vsel %vm192, %v167, 0
    %v417 = vsel %vm192, %v170, 0
    %v419 = vsel %vm192, %v412, 0
    %v421 = vsel %vm192, %v414, 0
    %423 = vmatpush.xpose.msra.mxu0 0.0
    %424 = vmatpush.xpose.msra.mxu0 0.0
    %425 = vmatpush.xpose.msra.mxu0 0.0
    %426 = vmatpush.xpose.msra.mxu0 0.0
    %427 = vmatpush.xpose.msra.mxu0 0.0
    %428 = vmatpush.xpose.msra.mxu0 0.0
    %429 = vmatpush.xpose.msra.mxu0 0.0
    %430 = vmatpush.xpose.msra.mxu0 0.0
    %431 = vmatpush.xpose.msra.mxu0 0.0
    %432 = vmatpush.xpose.msra.mxu0 0.0
    %433 = vmatpush.xpose.msra.mxu0 0.0
    %434 = vmatpush.xpose.msra.mxu0 0.0
    %435 = vmatpush.xpose.msra.mxu0 0.0
    %436 = vmatpush.xpose.msra.mxu0 0.0
    %437 = vmatpush.xpose.msra.mxu0 %v421
    %438 = vmatpush.xpose.msra.mxu0 %v419
    %439 = vmatmul.f32.gmra.mxu0 %v415
    %v440 = vpop.f32.mrf.mxu0
    %v441 = vadd.f32 0.0, %v440
    %442 = vmatmul.f32.gmra.mxu0 %v417
    %v443 = vpop.f32.mrf.mxu0
    %v444 = vadd.f32 0.0, %v443
    %445 = vdwg.mxu0
    %448 = vrot.lane.b32.xlu0 %v173, 96
    %v449 = vpop.permute.xlu0 %448
    %450 = vrot.lane.b32.xlu0 %v176, 96
    %v451 = vpop.permute.xlu0 %450
    %v452 = vsel %vm192, %v173, 0
    %v454 = vsel %vm192, %v176, 0
    %v456 = vsel %vm192, %v449, 0
    %v458 = vsel %vm192, %v451, 0
    %460 = vmatpush.xpose.msra.mxu0 0.0
    %461 = vmatpush.xpose.msra.mxu0 0.0
    %462 = vmatpush.xpose.msra.mxu0 0.0
    %463 = vmatpush.xpose.msra.mxu0 0.0
    %464 = vmatpush.xpose.msra.mxu0 0.0
    %465 = vmatpush.xpose.msra.mxu0 0.0
    %466 = vmatpush.xpose.msra.mxu0 0.0
    %467 = vmatpush.xpose.msra.mxu0 0.0
    %468 = vmatpush.xpose.msra.mxu0 0.0
    %469 = vmatpush.xpose.msra.mxu0 0.0
    %470 = vmatpush.xpose.msra.mxu0 0.0
    %471 = vmatpush.xpose.msra.mxu0 0.0
    %472 = vmatpush.xpose.msra.mxu0 0.0
    %473 = vmatpush.xpose.msra.mxu0 0.0
    %474 = vmatpush.xpose.msra.mxu0 %v458
    %475 = vmatpush.xpose.msra.mxu0 %v456
    %476 = vmatmul.f32.gmra.mxu0 %v452
    %v477 = vpop.f32.mrf.mxu0
    %v478 = vadd.f32 0.0, %v477
    %479 = vmatmul.f32.gmra.mxu0 %v454
    %v480 = vpop.f32.mrf.mxu0
    %v481 = vadd.f32 0.0, %v480
    %482 = vdwg.mxu0
    %v483 = vmul.f32 %v219, 0.35355338
    %v484 = vmul.f32 %v222, 0.35355338
    %v485 = vmul.f32 %v256, 0.35355338
    %v486 = vmul.f32 %v259, 0.35355338
    %v487 = vmul.f32 %v293, 0.35355338
    %v488 = vmul.f32 %v296, 0.35355338
    %v489 = vmul.f32 %v330, 0.35355338
    %v490 = vmul.f32 %v333, 0.35355338
    %v491 = vmul.f32 %v367, 0.35355338
    %v492 = vmul.f32 %v370, 0.35355338
    %v493 = vmul.f32 %v404, 0.35355338
    %v494 = vmul.f32 %v407, 0.35355338
    %v495 = vmul.f32 %v441, 0.35355338
    %v496 = vmul.f32 %v444, 0.35355338
    %v497 = vmul.f32 %v478, 0.35355338
    %v498 = vmul.f32 %v481, 0.35355338
    %v499 = vadd.f32 %v483, %v178
    %v500 = vadd.f32 %v484, %v179
    %v501 = vadd.f32 %v485, %v178
    %v502 = vadd.f32 %v486, %v179
    %v503 = vadd.f32 %v487, %v178
    %v504 = vadd.f32 %v488, %v179
    %v505 = vadd.f32 %v489, %v178
    %v506 = vadd.f32 %v490, %v179
    %v507 = vadd.f32 %v491, %v178
    %v508 = vadd.f32 %v492, %v179
    %v509 = vadd.f32 %v493, %v178
    %v510 = vadd.f32 %v494, %v179
    %v511 = vadd.f32 %v495, %v178
    %v512 = vadd.f32 %v496, %v179
    %v513 = vadd.f32 %v497, %v178
    %v514 = vadd.f32 %v498, %v179
    %vm515 = vcmask 130048
    %v516 = vsel %vm515, %v499, -inf
    %517 = vmax.xlane.f32.xlu0 %v516
    %v518 = vpop.xlane.xlu0 %517
    %v519 = vsel %vm515, %v500, -inf
    %520 = vmax.xlane.f32.xlu0 %v519
    %v521 = vpop.xlane.xlu0 %520
    %v522 = vsel %vm515, %v501, -inf
    %523 = vmax.xlane.f32.xlu0 %v522
    %v524 = vpop.xlane.xlu0 %523
    %v525 = vsel %vm515, %v502, -inf
    %526 = vmax.xlane.f32.xlu0 %v525
    %v527 = vpop.xlane.xlu0 %526
    %v528 = vsel %vm515, %v503, -inf
    %529 = vmax.xlane.f32.xlu0 %v528
    %v530 = vpop.xlane.xlu0 %529
    %v531 = vsel %vm515, %v504, -inf
    %532 = vmax.xlane.f32.xlu0 %v531
    %v533 = vpop.xlane.xlu0 %532
    %v534 = vsel %vm515, %v505, -inf
    %535 = vmax.xlane.f32.xlu0 %v534
    %v536 = vpop.xlane.xlu0 %535
    %v537 = vsel %vm515, %v506, -inf
    %538 = vmax.xlane.f32.xlu0 %v537
    %v539 = vpop.xlane.xlu0 %538
    %v540 = vsel %vm515, %v507, -inf
    %541 = vmax.xlane.f32.xlu0 %v540
    %v542 = vpop.xlane.xlu0 %541
    %v543 = vsel %vm515, %v508, -inf
    %544 = vmax.xlane.f32.xlu0 %v543
    %v545 = vpop.xlane.xlu0 %544
    %v546 = vsel %vm515, %v509, -inf
    %547 = vmax.xlane.f32.xlu0 %v546
    %v548 = vpop.xlane.xlu0 %547
    %v549 = vsel %vm515, %v510, -inf
    %550 = vmax.xlane.f32.xlu0 %v549
    %v551 = vpop.xlane.xlu0 %550
    %v552 = vsel %vm515, %v511, -inf
    %553 = vmax.xlane.f32.xlu0 %v552
    %v554 = vpop.xlane.xlu0 %553
    %v555 = vsel %vm515, %v512, -inf
    %556 = vmax.xlane.f32.xlu0 %v555
    %v557 = vpop.xlane.xlu0 %556
    %v558 = vsel %vm515, %v513, -inf
    %559 = vmax.xlane.f32.xlu0 %v558
    %v560 = vpop.xlane.xlu0 %559
    %v561 = vsel %vm515, %v514, -inf
    %562 = vmax.xlane.f32.xlu0 %v561
    %v563 = vpop.xlane.xlu0 %562
    %v564 = vsub.f32 %v499, %v518
    %v565 = vsub.f32 %v500, %v521
    %v566 = vsub.f32 %v501, %v524
    %v567 = vsub.f32 %v502, %v527
    %v568 = vsub.f32 %v503, %v530
    %v569 = vsub.f32 %v504, %v533
    %v570 = vsub.f32 %v505, %v536
    %v571 = vsub.f32 %v506, %v539
    %v572 = vsub.f32 %v507, %v542
    %v573 = vsub.f32 %v508, %v545
    %v574 = vsub.f32 %v509, %v548
    %v575 = vsub.f32 %v510, %v551
    %v576 = vsub.f32 %v511, %v554
    %v577 = vsub.f32 %v512, %v557
    %v578 = vsub.f32 %v513, %v560
    %v579 = vsub.f32 %v514, %v563
    %v580 = vmul.f32 %v564, 1.442695
    %v581 = vpow.pop %v580
    %v582 = vmul.f32 %v565, 1.442695
    %v583 = vpow.pop %v582
    %v584 = vmul.f32 %v566, 1.442695
    %v585 = vpow.pop %v584
    %v586 = vmul.f32 %v567, 1.442695
    %v587 = vpow.pop %v586
    %v588 = vmul.f32 %v568, 1.442695
    %v589 = vpow.pop %v588
    %v590 = vmul.f32 %v569, 1.442695
    %v591 = vpow.pop %v590
    %v592 = vmul.f32 %v570, 1.442695
    %v593 = vpow.pop %v592
    %v594 = vmul.f32 %v571, 1.442695
    %v595 = vpow.pop %v594
    %v596 = vmul.f32 %v572, 1.442695
    %v597 = vpow.pop %v596
    %v598 = vmul.f32 %v573, 1.442695
    %v599 = vpow.pop %v598
    %v600 = vmul.f32 %v574, 1.442695
    %v601 = vpow.pop %v600
    %v602 = vmul.f32 %v575, 1.442695
    %v603 = vpow.pop %v602
    %v604 = vmul.f32 %v576, 1.442695
    %v605 = vpow.pop %v604
    %v606 = vmul.f32 %v577, 1.442695
    %v607 = vpow.pop %v606
    %v608 = vmul.f32 %v578, 1.442695
    %v609 = vpow.pop %v608
    %v610 = vmul.f32 %v579, 1.442695
    %v611 = vpow.pop %v610
    %v612 = vsel %vm515, %v581, 0.0
    %613 = vadd.xlane.f32.xlu0 %v612
    %v614 = vpop.xlane.xlu0 %613
    %v615 = vsel %vm515, %v583, 0.0
    %616 = vadd.xlane.f32.xlu0 %v615
    %v617 = vpop.xlane.xlu0 %616
    %v618 = vsel %vm515, %v585, 0.0
    %619 = vadd.xlane.f32.xlu0 %v618
    %v620 = vpop.xlane.xlu0 %619
    %v621 = vsel %vm515, %v587, 0.0
    %622 = vadd.xlane.f32.xlu0 %v621
    %v623 = vpop.xlane.xlu0 %622
    %v624 = vsel %vm515, %v589, 0.0
    %625 = vadd.xlane.f32.xlu0 %v624
    %v626 = vpop.xlane.xlu0 %625
    %v627 = vsel %vm515, %v591, 0.0
    %628 = vadd.xlane.f32.xlu0 %v627
    %v629 = vpop.xlane.xlu0 %628
    %v630 = vsel %vm515, %v593, 0.0
    %631 = vadd.xlane.f32.xlu0 %v630
    %v632 = vpop.xlane.xlu0 %631
    %v633 = vsel %vm515, %v595, 0.0
    %634 = vadd.xlane.f32.xlu0 %v633
    %v635 = vpop.xlane.xlu0 %634
    %v636 = vsel %vm515, %v597, 0.0
    %637 = vadd.xlane.f32.xlu0 %v636
    %v638 = vpop.xlane.xlu0 %637
    %v639 = vsel %vm515, %v599, 0.0
    %640 = vadd.xlane.f32.xlu0 %v639
    %v641 = vpop.xlane.xlu0 %640
    %v642 = vsel %vm515, %v601, 0.0
    %643 = vadd.xlane.f32.xlu0 %v642
    %v644 = vpop.xlane.xlu0 %643
    %v645 = vsel %vm515, %v603, 0.0
    %646 = vadd.xlane.f32.xlu0 %v645
    %v647 = vpop.xlane.xlu0 %646
    %v648 = vsel %vm515, %v605, 0.0
    %649 = vadd.xlane.f32.xlu0 %v648
    %v650 = vpop.xlane.xlu0 %649
    %v651 = vsel %vm515, %v607, 0.0
    %652 = vadd.xlane.f32.xlu0 %v651
    %v653 = vpop.xlane.xlu0 %652
    %v654 = vsel %vm515, %v609, 0.0
    %655 = vadd.xlane.f32.xlu0 %v654
    %v656 = vpop.xlane.xlu0 %655
    %v657 = vsel %vm515, %v611, 0.0
    %658 = vadd.xlane.f32.xlu0 %v657
    %v659 = vpop.xlane.xlu0 %658
    %v660 = vrcp.pop %v614
    %v661 = vmul.f32 %v614, %v660
    %v662 = vsub.f32 1.0, %v661
    %v663 = vmul.f32 %v660, %v662
    %v664 = vadd.f32 %v660, %v663
    %vm665 = vweird.f32 %v614
    %vm666 = vweird.f32 %v660
    %vm667 = vmor %vm665, %vm666
    %v668 = vsel %vm667, %v660, %v664
    %v669 = vand.u32 2147483647, %v614
    %vm670 = vcmp.eq.f32.partialorder %v669, 8.507059e+37
    %v671 = vand.u32 %v614, 2147483648
    %v672 = vor.u32 1.1754944e-38, %v671
    %v673 = vsel %vm670, %v672, %v668
    %v674 = vmul.f32 %v581, %v673
    %v675 = vrcp.pop %v617
    %v676 = vmul.f32 %v617, %v675
    %v677 = vsub.f32 1.0, %v676
    %v678 = vmul.f32 %v675, %v677
    %v679 = vadd.f32 %v675, %v678
    %vm680 = vweird.f32 %v617
    %vm681 = vweird.f32 %v675
    %vm682 = vmor %vm680, %vm681
    %v683 = vsel %vm682, %v675, %v679
    %v684 = vand.u32 2147483647, %v617
    %vm685 = vcmp.eq.f32.partialorder %v684, 8.507059e+37
    %v686 = vand.u32 %v617, 2147483648
    %v687 = vor.u32 1.1754944e-38, %v686
    %v688 = vsel %vm685, %v687, %v683
    %v689 = vmul.f32 %v583, %v688
    %v690 = vrcp.pop %v620
    %v691 = vmul.f32 %v620, %v690
    %v692 = vsub.f32 1.0, %v691
    %v693 = vmul.f32 %v690, %v692
    %v694 = vadd.f32 %v690, %v693
    %vm695 = vweird.f32 %v620
    %vm696 = vweird.f32 %v690
    %vm697 = vmor %vm695, %vm696
    %v698 = vsel %vm697, %v690, %v694
    %v699 = vand.u32 2147483647, %v620
    %vm700 = vcmp.eq.f32.partialorder %v699, 8.507059e+37
    %v701 = vand.u32 %v620, 2147483648
    %v702 = vor.u32 1.1754944e-38, %v701
    %v703 = vsel %vm700, %v702, %v698
    %v704 = vmul.f32 %v585, %v703
    %v705 = vrcp.pop %v623
    %v706 = vmul.f32 %v623, %v705
    %v707 = vsub.f32 1.0, %v706
    %v708 = vmul.f32 %v705, %v707
    %v709 = vadd.f32 %v705, %v708
    %vm710 = vweird.f32 %v623
    %vm711 = vweird.f32 %v705
    %vm712 = vmor %vm710, %vm711
    %v713 = vsel %vm712, %v705, %v709
    %v714 = vand.u32 2147483647, %v623
    %vm715 = vcmp.eq.f32.partialorder %v714, 8.507059e+37
    %v716 = vand.u32 %v623, 2147483648
    %v717 = vor.u32 1.1754944e-38, %v716
    %v718 = vsel %vm715, %v717, %v713
    %v719 = vmul.f32 %v587, %v718
    %v720 = vrcp.pop %v626
    %v721 = vmul.f32 %v626, %v720
    %v722 = vsub.f32 1.0, %v721
    %v723 = vmul.f32 %v720, %v722
    %v724 = vadd.f32 %v720, %v723
    %vm725 = vweird.f32 %v626
    %vm726 = vweird.f32 %v720
    %vm727 = vmor %vm725, %vm726
    %v728 = vsel %vm727, %v720, %v724
    %v729 = vand.u32 2147483647, %v626
    %vm730 = vcmp.eq.f32.partialorder %v729, 8.507059e+37
    %v731 = vand.u32 %v626, 2147483648
    %v732 = vor.u32 1.1754944e-38, %v731
    %v733 = vsel %vm730, %v732, %v728
    %v734 = vmul.f32 %v589, %v733
    %v735 = vrcp.pop %v629
    %v736 = vmul.f32 %v629, %v735
    %v737 = vsub.f32 1.0, %v736
    %v738 = vmul.f32 %v735, %v737
    %v739 = vadd.f32 %v735, %v738
    %vm740 = vweird.f32 %v629
    %vm741 = vweird.f32 %v735
    %vm742 = vmor %vm740, %vm741
    %v743 = vsel %vm742, %v735, %v739
    %v744 = vand.u32 2147483647, %v629
    %vm745 = vcmp.eq.f32.partialorder %v744, 8.507059e+37
    %v746 = vand.u32 %v629, 2147483648
    %v747 = vor.u32 1.1754944e-38, %v746
    %v748 = vsel %vm745, %v747, %v743
    %v749 = vmul.f32 %v591, %v748
    %v750 = vrcp.pop %v632
    %v751 = vmul.f32 %v632, %v750
    %v752 = vsub.f32 1.0, %v751
    %v753 = vmul.f32 %v750, %v752
    %v754 = vadd.f32 %v750, %v753
    %vm755 = vweird.f32 %v632
    %vm756 = vweird.f32 %v750
    %vm757 = vmor %vm755, %vm756
    %v758 = vsel %vm757, %v750, %v754
    %v759 = vand.u32 2147483647, %v632
    %vm760 = vcmp.eq.f32.partialorder %v759, 8.507059e+37
    %v761 = vand.u32 %v632, 2147483648
    %v762 = vor.u32 1.1754944e-38, %v761
    %v763 = vsel %vm760, %v762, %v758
    %v764 = vmul.f32 %v593, %v763
    %v765 = vrcp.pop %v635
    %v766 = vmul.f32 %v635, %v765
    %v767 = vsub.f32 1.0, %v766
    %v768 = vmul.f32 %v765, %v767
    %v769 = vadd.f32 %v765, %v768
    %vm770 = vweird.f32 %v635
    %vm771 = vweird.f32 %v765
    %vm772 = vmor %vm770, %vm771
    %v773 = vsel %vm772, %v765, %v769
    %v774 = vand.u32 2147483647, %v635
    %vm775 = vcmp.eq.f32.partialorder %v774, 8.507059e+37
    %v776 = vand.u32 %v635, 2147483648
    %v777 = vor.u32 1.1754944e-38, %v776
    %v778 = vsel %vm775, %v777, %v773
    %v779 = vmul.f32 %v595, %v778
    %v780 = vrcp.pop %v638
    %v781 = vmul.f32 %v638, %v780
    %v782 = vsub.f32 1.0, %v781
    %v783 = vmul.f32 %v780, %v782
    %v784 = vadd.f32 %v780, %v783
    %vm785 = vweird.f32 %v638
    %vm786 = vweird.f32 %v780
    %vm787 = vmor %vm785, %vm786
    %v788 = vsel %vm787, %v780, %v784
    %v789 = vand.u32 2147483647, %v638
    %vm790 = vcmp.eq.f32.partialorder %v789, 8.507059e+37
    %v791 = vand.u32 %v638, 2147483648
    %v792 = vor.u32 1.1754944e-38, %v791
    %v793 = vsel %vm790, %v792, %v788
    %v794 = vmul.f32 %v597, %v793
    %v795 = vrcp.pop %v641
    %v796 = vmul.f32 %v641, %v795
    %v797 = vsub.f32 1.0, %v796
    %v798 = vmul.f32 %v795, %v797
    %v799 = vadd.f32 %v795, %v798
    %vm800 = vweird.f32 %v641
    %vm801 = vweird.f32 %v795
    %vm802 = vmor %vm800, %vm801
    %v803 = vsel %vm802, %v795, %v799
    %v804 = vand.u32 2147483647, %v641
    %vm805 = vcmp.eq.f32.partialorder %v804, 8.507059e+37
    %v806 = vand.u32 %v641, 2147483648
    %v807 = vor.u32 1.1754944e-38, %v806
    %v808 = vsel %vm805, %v807, %v803
    %v809 = vmul.f32 %v599, %v808
    %v810 = vrcp.pop %v644
    %v811 = vmul.f32 %v644, %v810
    %v812 = vsub.f32 1.0, %v811
    %v813 = vmul.f32 %v810, %v812
    %v814 = vadd.f32 %v810, %v813
    %vm815 = vweird.f32 %v644
    %vm816 = vweird.f32 %v810
    %vm817 = vmor %vm815, %vm816
    %v818 = vsel %vm817, %v810, %v814
    %v819 = vand.u32 2147483647, %v644
    %vm820 = vcmp.eq.f32.partialorder %v819, 8.507059e+37
    %v821 = vand.u32 %v644, 2147483648
    %v822 = vor.u32 1.1754944e-38, %v821
    %v823 = vsel %vm820, %v822, %v818
    %v824 = vmul.f32 %v601, %v823
    %v825 = vrcp.pop %v647
    %v826 = vmul.f32 %v647, %v825
    %v827 = vsub.f32 1.0, %v826
    %v828 = vmul.f32 %v825, %v827
    %v829 = vadd.f32 %v825, %v828
    %vm830 = vweird.f32 %v647
    %vm831 = vweird.f32 %v825
    %vm832 = vmor %vm830, %vm831
    %v833 = vsel %vm832, %v825, %v829
    %v834 = vand.u32 2147483647, %v647
    %vm835 = vcmp.eq.f32.partialorder %v834, 8.507059e+37
    %v836 = vand.u32 %v647, 2147483648
    %v837 = vor.u32 1.1754944e-38, %v836
    %v838 = vsel %vm835, %v837, %v833
    %v839 = vmul.f32 %v603, %v838
    %v840 = vrcp.pop %v650
    %v841 = vmul.f32 %v650, %v840
    %v842 = vsub.f32 1.0, %v841
    %v843 = vmul.f32 %v840, %v842
    %v844 = vadd.f32 %v840, %v843
    %vm845 = vweird.f32 %v650
    %vm846 = vweird.f32 %v840
    %vm847 = vmor %vm845, %vm846
    %v848 = vsel %vm847, %v840, %v844
    %v849 = vand.u32 2147483647, %v650
    %vm850 = vcmp.eq.f32.partialorder %v849, 8.507059e+37
    %v851 = vand.u32 %v650, 2147483648
    %v852 = vor.u32 1.1754944e-38, %v851
    %v853 = vsel %vm850, %v852, %v848
    %v854 = vmul.f32 %v605, %v853
    %v855 = vrcp.pop %v653
    %v856 = vmul.f32 %v653, %v855
    %v857 = vsub.f32 1.0, %v856
    %v858 = vmul.f32 %v855, %v857
    %v859 = vadd.f32 %v855, %v858
    %vm860 = vweird.f32 %v653
    %vm861 = vweird.f32 %v855
    %vm862 = vmor %vm860, %vm861
    %v863 = vsel %vm862, %v855, %v859
    %v864 = vand.u32 2147483647, %v653
    %vm865 = vcmp.eq.f32.partialorder %v864, 8.507059e+37
    %v866 = vand.u32 %v653, 2147483648
    %v867 = vor.u32 1.1754944e-38, %v866
    %v868 = vsel %vm865, %v867, %v863
    %v869 = vmul.f32 %v607, %v868
    %v870 = vrcp.pop %v656
    %v871 = vmul.f32 %v656, %v870
    %v872 = vsub.f32 1.0, %v871
    %v873 = vmul.f32 %v870, %v872
    %v874 = vadd.f32 %v870, %v873
    %vm875 = vweird.f32 %v656
    %vm876 = vweird.f32 %v870
    %vm877 = vmor %vm875, %vm876
    %v878 = vsel %vm877, %v870, %v874
    %v879 = vand.u32 2147483647, %v656
    %vm880 = vcmp.eq.f32.partialorder %v879, 8.507059e+37
    %v881 = vand.u32 %v656, 2147483648
    %v882 = vor.u32 1.1754944e-38, %v881
    %v883 = vsel %vm880, %v882, %v878
    %v884 = vmul.f32 %v609, %v883
    %v885 = vrcp.pop %v659
    %v886 = vmul.f32 %v659, %v885
    %v887 = vsub.f32 1.0, %v886
    %v888 = vmul.f32 %v885, %v887
    %v889 = vadd.f32 %v885, %v888
    %vm890 = vweird.f32 %v659
    %vm891 = vweird.f32 %v885
    %vm892 = vmor %vm890, %vm891
    %v893 = vsel %vm892, %v885, %v889
    %v894 = vand.u32 2147483647, %v659
    %vm895 = vcmp.eq.f32.partialorder %v894, 8.507059e+37
    %v896 = vand.u32 %v659, 2147483648
    %v897 = vor.u32 1.1754944e-38, %v896
    %v898 = vsel %vm895, %v897, %v893
    %v899 = vmul.f32 %v611, %v898
    %900 = vrot.lane.b32.xlu0 %v131, 64
    %v901 = vpop.permute.xlu0 %900
    %902 = vrot.lane.b32.xlu0 %v134, 64
    %v903 = vpop.permute.xlu0 %902
    %v907 = vsel %vm515, %v674, 0
    %v910 = vsel %vm515, %v689, 0
    %912 = vmatpush.msra.mxu0 0.0
    %913 = vmatpush.msra.mxu0 0.0
    %914 = vmatpush.msra.mxu0 0.0
    %915 = vmatpush.msra.mxu0 0.0
    %916 = vmatpush.msra.mxu0 0.0
    %917 = vmatpush.msra.mxu0 0.0
    %918 = vmatpush.msra.mxu0 0.0
    %919 = vmatpush.msra.mxu0 0.0
    %920 = vmatpush.msra.mxu0 0.0
    %921 = vmatpush.msra.mxu0 0.0
    %922 = vmatpush.msra.mxu0 0.0
    %923 = vmatpush.msra.mxu0 0.0
    %924 = vmatpush.msra.mxu0 0.0
    %925 = vmatpush.msra.mxu0 0.0
    %926 = vmatpush.msra.mxu0 %v903
    %927 = vmatpush.msra.mxu0 %v901
    %928 = vmatmul.f32.gmra.mxu0 %v907
    %v929 = vpop.f32.mrf.mxu0
    %v930 = vadd.f32 0.0, %v929
    %931 = vmatmul.f32.gmra.mxu0 %v910
    %v932 = vpop.f32.mrf.mxu0
    %v933 = vadd.f32 0.0, %v932
    %934 = vdwg.mxu0
    %935 = vrot.lane.b32.xlu0 %v137, 64
    %v936 = vpop.permute.xlu0 %935
    %937 = vrot.lane.b32.xlu0 %v140, 64
    %v938 = vpop.permute.xlu0 %937
    %v942 = vsel %vm515, %v704, 0
    %v945 = vsel %vm515, %v719, 0
    %947 = vmatpush.msra.mxu0 0.0
    %948 = vmatpush.msra.mxu0 0.0
    %949 = vmatpush.msra.mxu0 0.0
    %950 = vmatpush.msra.mxu0 0.0
    %951 = vmatpush.msra.mxu0 0.0
    %952 = vmatpush.msra.mxu0 0.0
    %953 = vmatpush.msra.mxu0 0.0
    %954 = vmatpush.msra.mxu0 0.0
    %955 = vmatpush.msra.mxu0 0.0
    %956 = vmatpush.msra.mxu0 0.0
    %957 = vmatpush.msra.mxu0 0.0
    %958 = vmatpush.msra.mxu0 0.0
    %959 = vmatpush.msra.mxu0 0.0
    %960 = vmatpush.msra.mxu0 0.0
    %961 = vmatpush.msra.mxu0 %v938
    %962 = vmatpush.msra.mxu0 %v936
    %963 = vmatmul.f32.gmra.mxu0 %v942
    %v964 = vpop.f32.mrf.mxu0
    %v965 = vadd.f32 0.0, %v964
    %966 = vmatmul.f32.gmra.mxu0 %v945
    %v967 = vpop.f32.mrf.mxu0
    %v968 = vadd.f32 0.0, %v967
    %969 = vdwg.mxu0
    %970 = vrot.lane.b32.xlu0 %v143, 64
    %v971 = vpop.permute.xlu0 %970
    %972 = vrot.lane.b32.xlu0 %v146, 64
    %v973 = vpop.permute.xlu0 %972
    %v977 = vsel %vm515, %v734, 0
    %v980 = vsel %vm515, %v749, 0
    %982 = vmatpush.msra.mxu0 0.0
    %983 = vmatpush.msra.mxu0 0.0
    %984 = vmatpush.msra.mxu0 0.0
    %985 = vmatpush.msra.mxu0 0.0
    %986 = vmatpush.msra.mxu0 0.0
    %987 = vmatpush.msra.mxu0 0.0
    %988 = vmatpush.msra.mxu0 0.0
    %989 = vmatpush.msra.mxu0 0.0
    %990 = vmatpush.msra.mxu0 0.0
    %991 = vmatpush.msra.mxu0 0.0
    %992 = vmatpush.msra.mxu0 0.0
    %993 = vmatpush.msra.mxu0 0.0
    %994 = vmatpush.msra.mxu0 0.0
    %995 = vmatpush.msra.mxu0 0.0
    %996 = vmatpush.msra.mxu0 %v973
    %997 = vmatpush.msra.mxu0 %v971
    %998 = vmatmul.f32.gmra.mxu0 %v977
    %v999 = vpop.f32.mrf.mxu0
    %v1000 = vadd.f32 0.0, %v999
    %1001 = vmatmul.f32.gmra.mxu0 %v980
    %v1002 = vpop.f32.mrf.mxu0
    %v1003 = vadd.f32 0.0, %v1002
    %1004 = vdwg.mxu0
    %1005 = vrot.lane.b32.xlu0 %v149, 64
    %v1006 = vpop.permute.xlu0 %1005
    %1007 = vrot.lane.b32.xlu0 %v152, 64
    %v1008 = vpop.permute.xlu0 %1007
    %v1012 = vsel %vm515, %v764, 0
    %v1015 = vsel %vm515, %v779, 0
    %1017 = vmatpush.msra.mxu0 0.0
    %1018 = vmatpush.msra.mxu0 0.0
    %1019 = vmatpush.msra.mxu0 0.0
    %1020 = vmatpush.msra.mxu0 0.0
    %1021 = vmatpush.msra.mxu0 0.0
    %1022 = vmatpush.msra.mxu0 0.0
    %1023 = vmatpush.msra.mxu0 0.0
    %1024 = vmatpush.msra.mxu0 0.0
    %1025 = vmatpush.msra.mxu0 0.0
    %1026 = vmatpush.msra.mxu0 0.0
    %1027 = vmatpush.msra.mxu0 0.0
    %1028 = vmatpush.msra.mxu0 0.0
    %1029 = vmatpush.msra.mxu0 0.0
    %1030 = vmatpush.msra.mxu0 0.0
    %1031 = vmatpush.msra.mxu0 %v1008
    %1032 = vmatpush.msra.mxu0 %v1006
    %1033 = vmatmul.f32.gmra.mxu0 %v1012
    %v1034 = vpop.f32.mrf.mxu0
    %v1035 = vadd.f32 0.0, %v1034
    %1036 = vmatmul.f32.gmra.mxu0 %v1015
    %v1037 = vpop.f32.mrf.mxu0
    %v1038 = vadd.f32 0.0, %v1037
    %1039 = vdwg.mxu0
    %1040 = vrot.lane.b32.xlu0 %v155, 64
    %v1041 = vpop.permute.xlu0 %1040
    %1042 = vrot.lane.b32.xlu0 %v158, 64
    %v1043 = vpop.permute.xlu0 %1042
    %v1047 = vsel %vm515, %v794, 0
    %v1050 = vsel %vm515, %v809, 0
    %1052 = vmatpush.msra.mxu0 0.0
    %1053 = vmatpush.msra.mxu0 0.0
    %1054 = vmatpush.msra.mxu0 0.0
    %1055 = vmatpush.msra.mxu0 0.0
    %1056 = vmatpush.msra.mxu0 0.0
    %1057 = vmatpush.msra.mxu0 0.0
    %1058 = vmatpush.msra.mxu0 0.0
    %1059 = vmatpush.msra.mxu0 0.0
    %1060 = vmatpush.msra.mxu0 0.0
    %1061 = vmatpush.msra.mxu0 0.0
    %1062 = vmatpush.msra.mxu0 0.0
    %1063 = vmatpush.msra.mxu0 0.0
    %1064 = vmatpush.msra.mxu0 0.0
    %1065 = vmatpush.msra.mxu0 0.0
    %1066 = vmatpush.msra.mxu0 %v1043
    %1067 = vmatpush.msra.mxu0 %v1041
    %1068 = vmatmul.f32.gmra.mxu0 %v1047
    %v1069 = vpop.f32.mrf.mxu0
    %v1070 = vadd.f32 0.0, %v1069
    %1071 = vmatmul.f32.gmra.mxu0 %v1050
    %v1072 = vpop.f32.mrf.mxu0
    %v1073 = vadd.f32 0.0, %v1072
    %1074 = vdwg.mxu0
    %1075 = vrot.lane.b32.xlu0 %v161, 64
    %v1076 = vpop.permute.xlu0 %1075
    %1077 = vrot.lane.b32.xlu0 %v164, 64
    %v1078 = vpop.permute.xlu0 %1077
    %v1082 = vsel %vm515, %v824, 0
    %v1085 = vsel %vm515, %v839, 0
    %1087 = vmatpush.msra.mxu0 0.0
    %1088 = vmatpush.msra.mxu0 0.0
    %1089 = vmatpush.msra.mxu0 0.0
    %1090 = vmatpush.msra.mxu0 0.0
    %1091 = vmatpush.msra.mxu0 0.0
    %1092 = vmatpush.msra.mxu0 0.0
    %1093 = vmatpush.msra.mxu0 0.0
    %1094 = vmatpush.msra.mxu0 0.0
    %1095 = vmatpush.msra.mxu0 0.0
    %1096 = vmatpush.msra.mxu0 0.0
    %1097 = vmatpush.msra.mxu0 0.0
    %1098 = vmatpush.msra.mxu0 0.0
    %1099 = vmatpush.msra.mxu0 0.0
    %1100 = vmatpush.msra.mxu0 0.0
    %1101 = vmatpush.msra.mxu0 %v1078
    %1102 = vmatpush.msra.mxu0 %v1076
    %1103 = vmatmul.f32.gmra.mxu0 %v1082
    %v1104 = vpop.f32.mrf.mxu0
    %v1105 = vadd.f32 0.0, %v1104
    %1106 = vmatmul.f32.gmra.mxu0 %v1085
    %v1107 = vpop.f32.mrf.mxu0
    %v1108 = vadd.f32 0.0, %v1107
    %1109 = vdwg.mxu0
    %1110 = vrot.lane.b32.xlu0 %v167, 64
    %v1111 = vpop.permute.xlu0 %1110
    %1112 = vrot.lane.b32.xlu0 %v170, 64
    %v1113 = vpop.permute.xlu0 %1112
    %v1117 = vsel %vm515, %v854, 0
    %v1120 = vsel %vm515, %v869, 0
    %1122 = vmatpush.msra.mxu0 0.0
    %1123 = vmatpush.msra.mxu0 0.0
    %1124 = vmatpush.msra.mxu0 0.0
    %1125 = vmatpush.msra.mxu0 0.0
    %1126 = vmatpush.msra.mxu0 0.0
    %1127 = vmatpush.msra.mxu0 0.0
    %1128 = vmatpush.msra.mxu0 0.0
    %1129 = vmatpush.msra.mxu0 0.0
    %1130 = vmatpush.msra.mxu0 0.0
    %1131 = vmatpush.msra.mxu0 0.0
    %1132 = vmatpush.msra.mxu0 0.0
    %1133 = vmatpush.msra.mxu0 0.0
    %1134 = vmatpush.msra.mxu0 0.0
    %1135 = vmatpush.msra.mxu0 0.0
    %1136 = vmatpush.msra.mxu0 %v1113
    %1137 = vmatpush.msra.mxu0 %v1111
    %1138 = vmatmul.f32.gmra.mxu0 %v1117
    %v1139 = vpop.f32.mrf.mxu0
    %v1140 = vadd.f32 0.0, %v1139
    %1141 = vmatmul.f32.gmra.mxu0 %v1120
    %v1142 = vpop.f32.mrf.mxu0
    %v1143 = vadd.f32 0.0, %v1142
    %1144 = vdwg.mxu0
    %1145 = vrot.lane.b32.xlu0 %v173, 64
    %v1146 = vpop.permute.xlu0 %1145
    %1147 = vrot.lane.b32.xlu0 %v176, 64
    %v1148 = vpop.permute.xlu0 %1147
    %v1152 = vsel %vm515, %v884, 0
    %v1155 = vsel %vm515, %v899, 0
    %1157 = vmatpush.msra.mxu0 0.0
    %1158 = vmatpush.msra.mxu0 0.0
    %1159 = vmatpush.msra.mxu0 0.0
    %1160 = vmatpush.msra.mxu0 0.0
    %1161 = vmatpush.msra.mxu0 0.0
    %1162 = vmatpush.msra.mxu0 0.0
    %1163 = vmatpush.msra.mxu0 0.0
    %1164 = vmatpush.msra.mxu0 0.0
    %1165 = vmatpush.msra.mxu0 0.0
    %1166 = vmatpush.msra.mxu0 0.0
    %1167 = vmatpush.msra.mxu0 0.0
    %1168 = vmatpush.msra.mxu0 0.0
    %1169 = vmatpush.msra.mxu0 0.0
    %1170 = vmatpush.msra.mxu0 0.0
    %1171 = vmatpush.msra.mxu0 %v1148
    %1172 = vmatpush.msra.mxu0 %v1146
    %1173 = vmatmul.f32.gmra.mxu0 %v1152
    %v1174 = vpop.f32.mrf.mxu0
    %v1175 = vadd.f32 0.0, %v1174
    %1176 = vmatmul.f32.gmra.mxu0 %v1155
    %v1177 = vpop.f32.mrf.mxu0
    %v1178 = vadd.f32 0.0, %v1177
    %1179 = vdwg.mxu0
    %1180 = vst.msk [vmem:[#allocation2] sm:$0xff] %vm192, %v930
    %1181 = vst.msk [vmem:[#allocation2 + $0x8] sm:$0xff] %vm192, %v933
    %1182 = vst.msk [vmem:[#allocation2 + $0x10] sm:$0xff] %vm192, %v965
    %1183 = vst.msk [vmem:[#allocation2 + $0x18] sm:$0xff] %vm192, %v968
    %1184 = vst.msk [vmem:[#allocation2 + $0x20] sm:$0xff] %vm192, %v1000
    %1185 = vst.msk [vmem:[#allocation2 + $0x28] sm:$0xff] %vm192, %v1003
    %1186 = vst.msk [vmem:[#allocation2 + $0x30] sm:$0xff] %vm192, %v1035
    %1187 = vst.msk [vmem:[#allocation2 + $0x38] sm:$0xff] %vm192, %v1038
    %1188 = vst.msk [vmem:[#allocation2 + $0x40] sm:$0xff] %vm192, %v1070
    %1189 = vst.msk [vmem:[#allocation2 + $0x48] sm:$0xff] %vm192, %v1073
    %1190 = vst.msk [vmem:[#allocation2 + $0x50] sm:$0xff] %vm192, %v1105
    %1191 = vst.msk [vmem:[#allocation2 + $0x58] sm:$0xff] %vm192, %v1108
    %1192 = vst.msk [vmem:[#allocation2 + $0x60] sm:$0xff] %vm192, %v1140
    %1193 = vst.msk [vmem:[#allocation2 + $0x68] sm:$0xff] %vm192, %v1143
    %1194 = vst.msk [vmem:[#allocation2 + $0x70] sm:$0xff] %vm192, %v1175
    %1195 = vst.msk [vmem:[#allocation2 + $0x78] sm:$0xff] %vm192, %v1178
    %1196 = vrot.lane.b32.xlu0 %v131, 120
    %v1197 = vpop.permute.xlu0 %1196
    %1198 = vrot.lane.b32.xlu0 %v134, 120
    %v1199 = vpop.permute.xlu0 %1198
    %1200 = vrot.lane.b32.xlu0 %v131, 88
    %v1201 = vpop.permute.xlu0 %1200
    %1202 = vrot.lane.b32.xlu0 %v134, 88
    %v1203 = vpop.permute.xlu0 %1202
    %v1204 = vsel %vm192, %v1197, 0
    %v1206 = vsel %vm192, %v1199, 0
    %v1208 = vsel %vm192, %v1201, 0
    %v1210 = vsel %vm192, %v1203, 0
    %1212 = vmatpush.xpose.msra.mxu0 0.0
    %1213 = vmatpush.xpose.msra.mxu0 0.0
    %1214 = vmatpush.xpose.msra.mxu0 0.0
    %1215 = vmatpush.xpose.msra.mxu0 0.0
    %1216 = vmatpush.xpose.msra.mxu0 0.0
    %1217 = vmatpush.xpose.msra.mxu0 0.0
    %1218 = vmatpush.xpose.msra.mxu0 0.0
    %1219 = vmatpush.xpose.msra.mxu0 0.0
    %1220 = vmatpush.xpose.msra.mxu0 0.0
    %1221 = vmatpush.xpose.msra.mxu0 0.0
    %1222 = vmatpush.xpose.msra.mxu0 0.0
    %1223 = vmatpush.xpose.msra.mxu0 0.0
    %1224 = vmatpush.xpose.msra.mxu0 0.0
    %1225 = vmatpush.xpose.msra.mxu0 0.0
    %1226 = vmatpush.xpose.msra.mxu0 %v1210
    %1227 = vmatpush.xpose.msra.mxu0 %v1208
    %1228 = vmatmul.f32.gmra.mxu0 %v1204
    %v1229 = vpop.f32.mrf.mxu0
    %v1230 = vadd.f32 0.0, %v1229
    %1231 = vmatmul.f32.gmra.mxu0 %v1206
    %v1232 = vpop.f32.mrf.mxu0
    %v1233 = vadd.f32 0.0, %v1232
    %1234 = vdwg.mxu0
    %1235 = vrot.lane.b32.xlu0 %v137, 120
    %v1236 = vpop.permute.xlu0 %1235
    %1237 = vrot.lane.b32.xlu0 %v140, 120
    %v1238 = vpop.permute.xlu0 %1237
    %1239 = vrot.lane.b32.xlu0 %v137, 88
    %v1240 = vpop.permute.xlu0 %1239
    %1241 = vrot.lane.b32.xlu0 %v140, 88
    %v1242 = vpop.permute.xlu0 %1241
    %v1243 = vsel %vm192, %v1236, 0
    %v1245 = vsel %vm192, %v1238, 0
    %v1247 = vsel %vm192, %v1240, 0
    %v1249 = vsel %vm192, %v1242, 0
    %1251 = vmatpush.xpose.msra.mxu0 0.0
    %1252 = vmatpush.xpose.msra.mxu0 0.0
    %1253 = vmatpush.xpose.msra.mxu0 0.0
    %1254 = vmatpush.xpose.msra.mxu0 0.0
    %1255 = vmatpush.xpose.msra.mxu0 0.0
    %1256 = vmatpush.xpose.msra.mxu0 0.0
    %1257 = vmatpush.xpose.msra.mxu0 0.0
    %1258 = vmatpush.xpose.msra.mxu0 0.0
    %1259 = vmatpush.xpose.msra.mxu0 0.0
    %1260 = vmatpush.xpose.msra.mxu0 0.0
    %1261 = vmatpush.xpose.msra.mxu0 0.0
    %1262 = vmatpush.xpose.msra.mxu0 0.0
    %1263 = vmatpush.xpose.msra.mxu0 0.0
    %1264 = vmatpush.xpose.msra.mxu0 0.0
    %1265 = vmatpush.xpose.msra.mxu0 %v1249
    %1266 = vmatpush.xpose.msra.mxu0 %v1247
    %1267 = vmatmul.f32.gmra.mxu0 %v1243
    %v1268 = vpop.f32.mrf.mxu0
    %v1269 = vadd.f32 0.0, %v1268
    %1270 = vmatmul.f32.gmra.mxu0 %v1245
    %v1271 = vpop.f32.mrf.mxu0
    %v1272 = vadd.f32 0.0, %v1271
    %1273 = vdwg.mxu0
    %1274 = vrot.lane.b32.xlu0 %v143, 120
    %v1275 = vpop.permute.xlu0 %1274
    %1276 = vrot.lane.b32.xlu0 %v146, 120
    %v1277 = vpop.permute.xlu0 %1276
    %1278 = vrot.lane.b32.xlu0 %v143, 88
    %v1279 = vpop.permute.xlu0 %1278
    %1280 = vrot.lane.b32.xlu0 %v146, 88
    %v1281 = vpop.permute.xlu0 %1280
    %v1282 = vsel %vm192, %v1275, 0
    %v1284 = vsel %vm192, %v1277, 0
    %v1286 = vsel %vm192, %v1279, 0
    %v1288 = vsel %vm192, %v1281, 0
    %1290 = vmatpush.xpose.msra.mxu0 0.0
    %1291 = vmatpush.xpose.msra.mxu0 0.0
    %1292 = vmatpush.xpose.msra.mxu0 0.0
    %1293 = vmatpush.xpose.msra.mxu0 0.0
    %1294 = vmatpush.xpose.msra.mxu0 0.0
    %1295 = vmatpush.xpose.msra.mxu0 0.0
    %1296 = vmatpush.xpose.msra.mxu0 0.0
    %1297 = vmatpush.xpose.msra.mxu0 0.0
    %1298 = vmatpush.xpose.msra.mxu0 0.0
    %1299 = vmatpush.xpose.msra.mxu0 0.0
    %1300 = vmatpush.xpose.msra.mxu0 0.0
    %1301 = vmatpush.xpose.msra.mxu0 0.0
    %1302 = vmatpush.xpose.msra.mxu0 0.0
    %1303 = vmatpush.xpose.msra.mxu0 0.0
    %1304 = vmatpush.xpose.msra.mxu0 %v1288
    %1305 = vmatpush.xpose.msra.mxu0 %v1286
    %1306 = vmatmul.f32.gmra.mxu0 %v1282
    %v1307 = vpop.f32.mrf.mxu0
    %v1308 = vadd.f32 0.0, %v1307
    %1309 = vmatmul.f32.gmra.mxu0 %v1284
    %v1310 = vpop.f32.mrf.mxu0
    %v1311 = vadd.f32 0.0, %v1310
    %1312 = vdwg.mxu0
    %1313 = vrot.lane.b32.xlu0 %v149, 120
    %v1314 = vpop.permute.xlu0 %1313
    %1315 = vrot.lane.b32.xlu0 %v152, 120
    %v1316 = vpop.permute.xlu0 %1315
    %1317 = vrot.lane.b32.xlu0 %v149, 88
    %v1318 = vpop.permute.xlu0 %1317
    %1319 = vrot.lane.b32.xlu0 %v152, 88
    %v1320 = vpop.permute.xlu0 %1319
    %v1321 = vsel %vm192, %v1314, 0
    %v1323 = vsel %vm192, %v1316, 0
    %v1325 = vsel %vm192, %v1318, 0
    %v1327 = vsel %vm192, %v1320, 0
    %1329 = vmatpush.xpose.msra.mxu0 0.0
    %1330 = vmatpush.xpose.msra.mxu0 0.0
    %1331 = vmatpush.xpose.msra.mxu0 0.0
    %1332 = vmatpush.xpose.msra.mxu0 0.0
    %1333 = vmatpush.xpose.msra.mxu0 0.0
    %1334 = vmatpush.xpose.msra.mxu0 0.0
    %1335 = vmatpush.xpose.msra.mxu0 0.0
    %1336 = vmatpush.xpose.msra.mxu0 0.0
    %1337 = vmatpush.xpose.msra.mxu0 0.0
    %1338 = vmatpush.xpose.msra.mxu0 0.0
    %1339 = vmatpush.xpose.msra.mxu0 0.0
    %1340 = vmatpush.xpose.msra.mxu0 0.0
    %1341 = vmatpush.xpose.msra.mxu0 0.0
    %1342 = vmatpush.xpose.msra.mxu0 0.0
    %1343 = vmatpush.xpose.msra.mxu0 %v1327
    %1344 = vmatpush.xpose.msra.mxu0 %v1325
    %1345 = vmatmul.f32.gmra.mxu0 %v1321
    %v1346 = vpop.f32.mrf.mxu0
    %v1347 = vadd.f32 0.0, %v1346
    %1348 = vmatmul.f32.gmra.mxu0 %v1323
    %v1349 = vpop.f32.mrf.mxu0
    %v1350 = vadd.f32 0.0, %v1349
    %1351 = vdwg.mxu0
    %1352 = vrot.lane.b32.xlu0 %v155, 120
    %v1353 = vpop.permute.xlu0 %1352
    %1354 = vrot.lane.b32.xlu0 %v158, 120
    %v1355 = vpop.permute.xlu0 %1354
    %1356 = vrot.lane.b32.xlu0 %v155, 88
    %v1357 = vpop.permute.xlu0 %1356
    %1358 = vrot.lane.b32.xlu0 %v158, 88
    %v1359 = vpop.permute.xlu0 %1358
    %v1360 = vsel %vm192, %v1353, 0
    %v1362 = vsel %vm192, %v1355, 0
    %v1364 = vsel %vm192, %v1357, 0
    %v1366 = vsel %vm192, %v1359, 0
    %1368 = vmatpush.xpose.msra.mxu0 0.0
    %1369 = vmatpush.xpose.msra.mxu0 0.0
    %1370 = vmatpush.xpose.msra.mxu0 0.0
    %1371 = vmatpush.xpose.msra.mxu0 0.0
    %1372 = vmatpush.xpose.msra.mxu0 0.0
    %1373 = vmatpush.xpose.msra.mxu0 0.0
    %1374 = vmatpush.xpose.msra.mxu0 0.0
    %1375 = vmatpush.xpose.msra.mxu0 0.0
    %1376 = vmatpush.xpose.msra.mxu0 0.0
    %1377 = vmatpush.xpose.msra.mxu0 0.0
    %1378 = vmatpush.xpose.msra.mxu0 0.0
    %1379 = vmatpush.xpose.msra.mxu0 0.0
    %1380 = vmatpush.xpose.msra.mxu0 0.0
    %1381 = vmatpush.xpose.msra.mxu0 0.0
    %1382 = vmatpush.xpose.msra.mxu0 %v1366
    %1383 = vmatpush.xpose.msra.mxu0 %v1364
    %1384 = vmatmul.f32.gmra.mxu0 %v1360
    %v1385 = vpop.f32.mrf.mxu0
    %v1386 = vadd.f32 0.0, %v1385
    %1387 = vmatmul.f32.gmra.mxu0 %v1362
    %v1388 = vpop.f32.mrf.mxu0
    %v1389 = vadd.f32 0.0, %v1388
    %1390 = vdwg.mxu0
    %1391 = vrot.lane.b32.xlu0 %v161, 120
    %v1392 = vpop.permute.xlu0 %1391
    %1393 = vrot.lane.b32.xlu0 %v164, 120
    %v1394 = vpop.permute.xlu0 %1393
    %1395 = vrot.lane.b32.xlu0 %v161, 88
    %v1396 = vpop.permute.xlu0 %1395
    %1397 = vrot.lane.b32.xlu0 %v164, 88
    %v1398 = vpop.permute.xlu0 %1397
    %v1399 = vsel %vm192, %v1392, 0
    %v1401 = vsel %vm192, %v1394, 0
    %v1403 = vsel %vm192, %v1396, 0
    %v1405 = vsel %vm192, %v1398, 0
    %1407 = vmatpush.xpose.msra.mxu0 0.0
    %1408 = vmatpush.xpose.msra.mxu0 0.0
    %1409 = vmatpush.xpose.msra.mxu0 0.0
    %1410 = vmatpush.xpose.msra.mxu0 0.0
    %1411 = vmatpush.xpose.msra.mxu0 0.0
    %1412 = vmatpush.xpose.msra.mxu0 0.0
    %1413 = vmatpush.xpose.msra.mxu0 0.0
    %1414 = vmatpush.xpose.msra.mxu0 0.0
    %1415 = vmatpush.xpose.msra.mxu0 0.0
    %1416 = vmatpush.xpose.msra.mxu0 0.0
    %1417 = vmatpush.xpose.msra.mxu0 0.0
    %1418 = vmatpush.xpose.msra.mxu0 0.0
    %1419 = vmatpush.xpose.msra.mxu0 0.0
    %1420 = vmatpush.xpose.msra.mxu0 0.0
    %1421 = vmatpush.xpose.msra.mxu0 %v1405
    %1422 = vmatpush.xpose.msra.mxu0 %v1403
    %1423 = vmatmul.f32.gmra.mxu0 %v1399
    %v1424 = vpop.f32.mrf.mxu0
    %v1425 = vadd.f32 0.0, %v1424
    %1426 = vmatmul.f32.gmra.mxu0 %v1401
    %v1427 = vpop.f32.mrf.mxu0
    %v1428 = vadd.f32 0.0, %v1427
    %1429 = vdwg.mxu0
    %1430 = vrot.lane.b32.xlu0 %v167, 120
    %v1431 = vpop.permute.xlu0 %1430
    %1432 = vrot.lane.b32.xlu0 %v170, 120
    %v1433 = vpop.permute.xlu0 %1432
    %1434 = vrot.lane.b32.xlu0 %v167, 88
    %v1435 = vpop.permute.xlu0 %1434
    %1436 = vrot.lane.b32.xlu0 %v170, 88
    %v1437 = vpop.permute.xlu0 %1436
    %v1438 = vsel %vm192, %v1431, 0
    %v1440 = vsel %vm192, %v1433, 0
    %v1442 = vsel %vm192, %v1435, 0
    %v1444 = vsel %vm192, %v1437, 0
    %1446 = vmatpush.xpose.msra.mxu0 0.0
    %1447 = vmatpush.xpose.msra.mxu0 0.0
    %1448 = vmatpush.xpose.msra.mxu0 0.0
    %1449 = vmatpush.xpose.msra.mxu0 0.0
    %1450 = vmatpush.xpose.msra.mxu0 0.0
    %1451 = vmatpush.xpose.msra.mxu0 0.0
    %1452 = vmatpush.xpose.msra.mxu0 0.0
    %1453 = vmatpush.xpose.msra.mxu0 0.0
    %1454 = vmatpush.xpose.msra.mxu0 0.0
    %1455 = vmatpush.xpose.msra.mxu0 0.0
    %1456 = vmatpush.xpose.msra.mxu0 0.0
    %1457 = vmatpush.xpose.msra.mxu0 0.0
    %1458 = vmatpush.xpose.msra.mxu0 0.0
    %1459 = vmatpush.xpose.msra.mxu0 0.0
    %1460 = vmatpush.xpose.msra.mxu0 %v1444
    %1461 = vmatpush.xpose.msra.mxu0 %v1442
    %1462 = vmatmul.f32.gmra.mxu0 %v1438
    %v1463 = vpop.f32.mrf.mxu0
    %v1464 = vadd.f32 0.0, %v1463
    %1465 = vmatmul.f32.gmra.mxu0 %v1440
    %v1466 = vpop.f32.mrf.mxu0
    %v1467 = vadd.f32 0.0, %v1466
    %1468 = vdwg.mxu0
    %1469 = vrot.lane.b32.xlu0 %v173, 120
    %v1470 = vpop.permute.xlu0 %1469
    %1471 = vrot.lane.b32.xlu0 %v176, 120
    %v1472 = vpop.permute.xlu0 %1471
    %1473 = vrot.lane.b32.xlu0 %v173, 88
    %v1474 = vpop.permute.xlu0 %1473
    %1475 = vrot.lane.b32.xlu0 %v176, 88
    %v1476 = vpop.permute.xlu0 %1475
    %v1477 = vsel %vm192, %v1470, 0
    %v1479 = vsel %vm192, %v1472, 0
    %v1481 = vsel %vm192, %v1474, 0
    %v1483 = vsel %vm192, %v1476, 0
    %1485 = vmatpush.xpose.msra.mxu0 0.0
    %1486 = vmatpush.xpose.msra.mxu0 0.0
    %1487 = vmatpush.xpose.msra.mxu0 0.0
    %1488 = vmatpush.xpose.msra.mxu0 0.0
    %1489 = vmatpush.xpose.msra.mxu0 0.0
    %1490 = vmatpush.xpose.msra.mxu0 0.0
    %1491 = vmatpush.xpose.msra.mxu0 0.0
    %1492 = vmatpush.xpose.msra.mxu0 0.0
    %1493 = vmatpush.xpose.msra.mxu0 0.0
    %1494 = vmatpush.xpose.msra.mxu0 0.0
    %1495 = vmatpush.xpose.msra.mxu0 0.0
    %1496 = vmatpush.xpose.msra.mxu0 0.0
    %1497 = vmatpush.xpose.msra.mxu0 0.0
    %1498 = vmatpush.xpose.msra.mxu0 0.0
    %1499 = vmatpush.xpose.msra.mxu0 %v1483
    %1500 = vmatpush.xpose.msra.mxu0 %v1481
    %1501 = vmatmul.f32.gmra.mxu0 %v1477
    %v1502 = vpop.f32.mrf.mxu0
    %v1503 = vadd.f32 0.0, %v1502
    %1504 = vmatmul.f32.gmra.mxu0 %v1479
    %v1505 = vpop.f32.mrf.mxu0
    %v1506 = vadd.f32 0.0, %v1505
    %1507 = vdwg.mxu0
    %v1508 = vmul.f32 %v1230, 0.35355338
    %v1509 = vmul.f32 %v1233, 0.35355338
    %v1510 = vmul.f32 %v1269, 0.35355338
    %v1511 = vmul.f32 %v1272, 0.35355338
    %v1512 = vmul.f32 %v1308, 0.35355338
    %v1513 = vmul.f32 %v1311, 0.35355338
    %v1514 = vmul.f32 %v1347, 0.35355338
    %v1515 = vmul.f32 %v1350, 0.35355338
    %v1516 = vmul.f32 %v1386, 0.35355338
    %v1517 = vmul.f32 %v1389, 0.35355338
    %v1518 = vmul.f32 %v1425, 0.35355338
    %v1519 = vmul.f32 %v1428, 0.35355338
    %v1520 = vmul.f32 %v1464, 0.35355338
    %v1521 = vmul.f32 %v1467, 0.35355338
    %v1522 = vmul.f32 %v1503, 0.35355338
    %v1523 = vmul.f32 %v1506, 0.35355338
    %v1524 = vadd.f32 %v1508, %v180
    %v1525 = vadd.f32 %v1509, %v181
    %v1526 = vadd.f32 %v1510, %v180
    %v1527 = vadd.f32 %v1511, %v181
    %v1528 = vadd.f32 %v1512, %v180
    %v1529 = vadd.f32 %v1513, %v181
    %v1530 = vadd.f32 %v1514, %v180
    %v1531 = vadd.f32 %v1515, %v181
    %v1532 = vadd.f32 %v1516, %v180
    %v1533 = vadd.f32 %v1517, %v181
    %v1534 = vadd.f32 %v1518, %v180
    %v1535 = vadd.f32 %v1519, %v181
    %v1536 = vadd.f32 %v1520, %v180
    %v1537 = vadd.f32 %v1521, %v181
    %v1538 = vadd.f32 %v1522, %v180
    %v1539 = vadd.f32 %v1523, %v181
    %v1540 = vsel %vm515, %v1524, -inf
    %1541 = vmax.xlane.f32.xlu0 %v1540
    %v1542 = vpop.xlane.xlu0 %1541
    %v1543 = vsel %vm515, %v1525, -inf
    %1544 = vmax.xlane.f32.xlu0 %v1543
    %v1545 = vpop.xlane.xlu0 %1544
    %v1546 = vsel %vm515, %v1526, -inf
    %1547 = vmax.xlane.f32.xlu0 %v1546
    %v1548 = vpop.xlane.xlu0 %1547
    %v1549 = vsel %vm515, %v1527, -inf
    %1550 = vmax.xlane.f32.xlu0 %v1549
    %v1551 = vpop.xlane.xlu0 %1550
    %v1552 = vsel %vm515, %v1528, -inf
    %1553 = vmax.xlane.f32.xlu0 %v1552
    %v1554 = vpop.xlane.xlu0 %1553
    %v1555 = vsel %vm515, %v1529, -inf
    %1556 = vmax.xlane.f32.xlu0 %v1555
    %v1557 = vpop.xlane.xlu0 %1556
    %v1558 = vsel %vm515, %v1530, -inf
    %1559 = vmax.xlane.f32.xlu0 %v1558
    %v1560 = vpop.xlane.xlu0 %1559
    %v1561 = vsel %vm515, %v1531, -inf
    %1562 = vmax.xlane.f32.xlu0 %v1561
    %v1563 = vpop.xlane.xlu0 %1562
    %v1564 = vsel %vm515, %v1532, -inf
    %1565 = vmax.xlane.f32.xlu0 %v1564
    %v1566 = vpop.xlane.xlu0 %1565
    %v1567 = vsel %vm515, %v1533, -inf
    %1568 = vmax.xlane.f32.xlu0 %v1567
    %v1569 = vpop.xlane.xlu0 %1568
    %v1570 = vsel %vm515, %v1534, -inf
    %1571 = vmax.xlane.f32.xlu0 %v1570
    %v1572 = vpop.xlane.xlu0 %1571
    %v1573 = vsel %vm515, %v1535, -inf
    %1574 = vmax.xlane.f32.xlu0 %v1573
    %v1575 = vpop.xlane.xlu0 %1574
    %v1576 = vsel %vm515, %v1536, -inf
    %1577 = vmax.xlane.f32.xlu0 %v1576
    %v1578 = vpop.xlane.xlu0 %1577
    %v1579 = vsel %vm515, %v1537, -inf
    %1580 = vmax.xlane.f32.xlu0 %v1579
    %v1581 = vpop.xlane.xlu0 %1580
    %v1582 = vsel %vm515, %v1538, -inf
    %1583 = vmax.xlane.f32.xlu0 %v1582
    %v1584 = vpop.xlane.xlu0 %1583
    %v1585 = vsel %vm515, %v1539, -inf
    %1586 = vmax.xlane.f32.xlu0 %v1585
    %v1587 = vpop.xlane.xlu0 %1586
    %v1588 = vsub.f32 %v1524, %v1542
    %v1589 = vsub.f32 %v1525, %v1545
    %v1590 = vsub.f32 %v1526, %v1548
    %v1591 = vsub.f32 %v1527, %v1551
    %v1592 = vsub.f32 %v1528, %v1554
    %v1593 = vsub.f32 %v1529, %v1557
    %v1594 = vsub.f32 %v1530, %v1560
    %v1595 = vsub.f32 %v1531, %v1563
    %v1596 = vsub.f32 %v1532, %v1566
    %v1597 = vsub.f32 %v1533, %v1569
    %v1598 = vsub.f32 %v1534, %v1572
    %v1599 = vsub.f32 %v1535, %v1575
    %v1600 = vsub.f32 %v1536, %v1578
    %v1601 = vsub.f32 %v1537, %v1581
    %v1602 = vsub.f32 %v1538, %v1584
    %v1603 = vsub.f32 %v1539, %v1587
    %v1604 = vmul.f32 %v1588, 1.442695
    %v1605 = vpow.pop %v1604
    %v1606 = vmul.f32 %v1589, 1.442695
    %v1607 = vpow.pop %v1606
    %v1608 = vmul.f32 %v1590, 1.442695
    %v1609 = vpow.pop %v1608
    %v1610 = vmul.f32 %v1591, 1.442695
    %v1611 = vpow.pop %v1610
    %v1612 = vmul.f32 %v1592, 1.442695
    %v1613 = vpow.pop %v1612
    %v1614 = vmul.f32 %v1593, 1.442695
    %v1615 = vpow.pop %v1614
    %v1616 = vmul.f32 %v1594, 1.442695
    %v1617 = vpow.pop %v1616
    %v1618 = vmul.f32 %v1595, 1.442695
    %v1619 = vpow.pop %v1618
    %v1620 = vmul.f32 %v1596, 1.442695
    %v1621 = vpow.pop %v1620
    %v1622 = vmul.f32 %v1597, 1.442695
    %v1623 = vpow.pop %v1622
    %v1624 = vmul.f32 %v1598, 1.442695
    %v1625 = vpow.pop %v1624
    %v1626 = vmul.f32 %v1599, 1.442695
    %v1627 = vpow.pop %v1626
    %v1628 = vmul.f32 %v1600, 1.442695
    %v1629 = vpow.pop %v1628
    %v1630 = vmul.f32 %v1601, 1.442695
    %v1631 = vpow.pop %v1630
    %v1632 = vmul.f32 %v1602, 1.442695
    %v1633 = vpow.pop %v1632
    %v1634 = vmul.f32 %v1603, 1.442695
    %v1635 = vpow.pop %v1634
    %v1636 = vsel %vm515, %v1605, 0.0
    %1637 = vadd.xlane.f32.xlu0 %v1636
    %v1638 = vpop.xlane.xlu0 %1637
    %v1639 = vsel %vm515, %v1607, 0.0
    %1640 = vadd.xlane.f32.xlu0 %v1639
    %v1641 = vpop.xlane.xlu0 %1640
    %v1642 = vsel %vm515, %v1609, 0.0
    %1643 = vadd.xlane.f32.xlu0 %v1642
    %v1644 = vpop.xlane.xlu0 %1643
    %v1645 = vsel %vm515, %v1611, 0.0
    %1646 = vadd.xlane.f32.xlu0 %v1645
    %v1647 = vpop.xlane.xlu0 %1646
    %v1648 = vsel %vm515, %v1613, 0.0
    %1649 = vadd.xlane.f32.xlu0 %v1648
    %v1650 = vpop.xlane.xlu0 %1649
    %v1651 = vsel %vm515, %v1615, 0.0
    %1652 = vadd.xlane.f32.xlu0 %v1651
    %v1653 = vpop.xlane.xlu0 %1652
    %v1654 = vsel %vm515, %v1617, 0.0
    %1655 = vadd.xlane.f32.xlu0 %v1654
    %v1656 = vpop.xlane.xlu0 %1655
    %v1657 = vsel %vm515, %v1619, 0.0
    %1658 = vadd.xlane.f32.xlu0 %v1657
    %v1659 = vpop.xlane.xlu0 %1658
    %v1660 = vsel %vm515, %v1621, 0.0
    %1661 = vadd.xlane.f32.xlu0 %v1660
    %v1662 = vpop.xlane.xlu0 %1661
    %v1663 = vsel %vm515, %v1623, 0.0
    %1664 = vadd.xlane.f32.xlu0 %v1663
    %v1665 = vpop.xlane.xlu0 %1664
    %v1666 = vsel %vm515, %v1625, 0.0
    %1667 = vadd.xlane.f32.xlu0 %v1666
    %v1668 = vpop.xlane.xlu0 %1667
    %v1669 = vsel %vm515, %v1627, 0.0
    %1670 = vadd.xlane.f32.xlu0 %v1669
    %v1671 = vpop.xlane.xlu0 %1670
    %v1672 = vsel %vm515, %v1629, 0.0
    %1673 = vadd.xlane.f32.xlu0 %v1672
    %v1674 = vpop.xlane.xlu0 %1673
    %v1675 = vsel %vm515, %v1631, 0.0
    %1676 = vadd.xlane.f32.xlu0 %v1675
    %v1677 = vpop.xlane.xlu0 %1676
    %v1678 = vsel %vm515, %v1633, 0.0
    %1679 = vadd.xlane.f32.xlu0 %v1678
    %v1680 = vpop.xlane.xlu0 %1679
    %v1681 = vsel %vm515, %v1635, 0.0
    %1682 = vadd.xlane.f32.xlu0 %v1681
    %v1683 = vpop.xlane.xlu0 %1682
    %v1684 = vrcp.pop %v1638
    %v1685 = vmul.f32 %v1638, %v1684
    %v1686 = vsub.f32 1.0, %v1685
    %v1687 = vmul.f32 %v1684, %v1686
    %v1688 = vadd.f32 %v1684, %v1687
    %vm1689 = vweird.f32 %v1638
    %vm1690 = vweird.f32 %v1684
    %vm1691 = vmor %vm1689, %vm1690
    %v1692 = vsel %vm1691, %v1684, %v1688
    %v1693 = vand.u32 2147483647, %v1638
    %vm1694 = vcmp.eq.f32.partialorder %v1693, 8.507059e+37
    %v1695 = vand.u32 %v1638, 2147483648
    %v1696 = vor.u32 1.1754944e-38, %v1695
    %v1697 = vsel %vm1694, %v1696, %v1692
    %v1698 = vmul.f32 %v1605, %v1697
    %v1699 = vrcp.pop %v1641
    %v1700 = vmul.f32 %v1641, %v1699
    %v1701 = vsub.f32 1.0, %v1700
    %v1702 = vmul.f32 %v1699, %v1701
    %v1703 = vadd.f32 %v1699, %v1702
    %vm1704 = vweird.f32 %v1641
    %vm1705 = vweird.f32 %v1699
    %vm1706 = vmor %vm1704, %vm1705
    %v1707 = vsel %vm1706, %v1699, %v1703
    %v1708 = vand.u32 2147483647, %v1641
    %vm1709 = vcmp.eq.f32.partialorder %v1708, 8.507059e+37
    %v1710 = vand.u32 %v1641, 2147483648
    %v1711 = vor.u32 1.1754944e-38, %v1710
    %v1712 = vsel %vm1709, %v1711, %v1707
    %v1713 = vmul.f32 %v1607, %v1712
    %v1714 = vrcp.pop %v1644
    %v1715 = vmul.f32 %v1644, %v1714
    %v1716 = vsub.f32 1.0, %v1715
    %v1717 = vmul.f32 %v1714, %v1716
    %v1718 = vadd.f32 %v1714, %v1717
    %vm1719 = vweird.f32 %v1644
    %vm1720 = vweird.f32 %v1714
    %vm1721 = vmor %vm1719, %vm1720
    %v1722 = vsel %vm1721, %v1714, %v1718
    %v1723 = vand.u32 2147483647, %v1644
    %vm1724 = vcmp.eq.f32.partialorder %v1723, 8.507059e+37
    %v1725 = vand.u32 %v1644, 2147483648
    %v1726 = vor.u32 1.1754944e-38, %v1725
    %v1727 = vsel %vm1724, %v1726, %v1722
    %v1728 = vmul.f32 %v1609, %v1727
    %v1729 = vrcp.pop %v1647
    %v1730 = vmul.f32 %v1647, %v1729
    %v1731 = vsub.f32 1.0, %v1730
    %v1732 = vmul.f32 %v1729, %v1731
    %v1733 = vadd.f32 %v1729, %v1732
    %vm1734 = vweird.f32 %v1647
    %vm1735 = vweird.f32 %v1729
    %vm1736 = vmor %vm1734, %vm1735
    %v1737 = vsel %vm1736, %v1729, %v1733
    %v1738 = vand.u32 2147483647, %v1647
    %vm1739 = vcmp.eq.f32.partialorder %v1738, 8.507059e+37
    %v1740 = vand.u32 %v1647, 2147483648
    %v1741 = vor.u32 1.1754944e-38, %v1740
    %v1742 = vsel %vm1739, %v1741, %v1737
    %v1743 = vmul.f32 %v1611, %v1742
    %v1744 = vrcp.pop %v1650
    %v1745 = vmul.f32 %v1650, %v1744
    %v1746 = vsub.f32 1.0, %v1745
    %v1747 = vmul.f32 %v1744, %v1746
    %v1748 = vadd.f32 %v1744, %v1747
    %vm1749 = vweird.f32 %v1650
    %vm1750 = vweird.f32 %v1744
    %vm1751 = vmor %vm1749, %vm1750
    %v1752 = vsel %vm1751, %v1744, %v1748
    %v1753 = vand.u32 2147483647, %v1650
    %vm1754 = vcmp.eq.f32.partialorder %v1753, 8.507059e+37
    %v1755 = vand.u32 %v1650, 2147483648
    %v1756 = vor.u32 1.1754944e-38, %v1755
    %v1757 = vsel %vm1754, %v1756, %v1752
    %v1758 = vmul.f32 %v1613, %v1757
    %v1759 = vrcp.pop %v1653
    %v1760 = vmul.f32 %v1653, %v1759
    %v1761 = vsub.f32 1.0, %v1760
    %v1762 = vmul.f32 %v1759, %v1761
    %v1763 = vadd.f32 %v1759, %v1762
    %vm1764 = vweird.f32 %v1653
    %vm1765 = vweird.f32 %v1759
    %vm1766 = vmor %vm1764, %vm1765
    %v1767 = vsel %vm1766, %v1759, %v1763
    %v1768 = vand.u32 2147483647, %v1653
    %vm1769 = vcmp.eq.f32.partialorder %v1768, 8.507059e+37
    %v1770 = vand.u32 %v1653, 2147483648
    %v1771 = vor.u32 1.1754944e-38, %v1770
    %v1772 = vsel %vm1769, %v1771, %v1767
    %v1773 = vmul.f32 %v1615, %v1772
    %v1774 = vrcp.pop %v1656
    %v1775 = vmul.f32 %v1656, %v1774
    %v1776 = vsub.f32 1.0, %v1775
    %v1777 = vmul.f32 %v1774, %v1776
    %v1778 = vadd.f32 %v1774, %v1777
    %vm1779 = vweird.f32 %v1656
    %vm1780 = vweird.f32 %v1774
    %vm1781 = vmor %vm1779, %vm1780
    %v1782 = vsel %vm1781, %v1774, %v1778
    %v1783 = vand.u32 2147483647, %v1656
    %vm1784 = vcmp.eq.f32.partialorder %v1783, 8.507059e+37
    %v1785 = vand.u32 %v1656, 2147483648
    %v1786 = vor.u32 1.1754944e-38, %v1785
    %v1787 = vsel %vm1784, %v1786, %v1782
    %v1788 = vmul.f32 %v1617, %v1787
    %v1789 = vrcp.pop %v1659
    %v1790 = vmul.f32 %v1659, %v1789
    %v1791 = vsub.f32 1.0, %v1790
    %v1792 = vmul.f32 %v1789, %v1791
    %v1793 = vadd.f32 %v1789, %v1792
    %vm1794 = vweird.f32 %v1659
    %vm1795 = vweird.f32 %v1789
    %vm1796 = vmor %vm1794, %vm1795
    %v1797 = vsel %vm1796, %v1789, %v1793
    %v1798 = vand.u32 2147483647, %v1659
    %vm1799 = vcmp.eq.f32.partialorder %v1798, 8.507059e+37
    %v1800 = vand.u32 %v1659, 2147483648
    %v1801 = vor.u32 1.1754944e-38, %v1800
    %v1802 = vsel %vm1799, %v1801, %v1797
    %v1803 = vmul.f32 %v1619, %v1802
    %v1804 = vrcp.pop %v1662
    %v1805 = vmul.f32 %v1662, %v1804
    %v1806 = vsub.f32 1.0, %v1805
    %v1807 = vmul.f32 %v1804, %v1806
    %v1808 = vadd.f32 %v1804, %v1807
    %vm1809 = vweird.f32 %v1662
    %vm1810 = vweird.f32 %v1804
    %vm1811 = vmor %vm1809, %vm1810
    %v1812 = vsel %vm1811, %v1804, %v1808
    %v1813 = vand.u32 2147483647, %v1662
    %vm1814 = vcmp.eq.f32.partialorder %v1813, 8.507059e+37
    %v1815 = vand.u32 %v1662, 2147483648
    %v1816 = vor.u32 1.1754944e-38, %v1815
    %v1817 = vsel %vm1814, %v1816, %v1812
    %v1818 = vmul.f32 %v1621, %v1817
    %v1819 = vrcp.pop %v1665
    %v1820 = vmul.f32 %v1665, %v1819
    %v1821 = vsub.f32 1.0, %v1820
    %v1822 = vmul.f32 %v1819, %v1821
    %v1823 = vadd.f32 %v1819, %v1822
    %vm1824 = vweird.f32 %v1665
    %vm1825 = vweird.f32 %v1819
    %vm1826 = vmor %vm1824, %vm1825
    %v1827 = vsel %vm1826, %v1819, %v1823
    %v1828 = vand.u32 2147483647, %v1665
    %vm1829 = vcmp.eq.f32.partialorder %v1828, 8.507059e+37
    %v1830 = vand.u32 %v1665, 2147483648
    %v1831 = vor.u32 1.1754944e-38, %v1830
    %v1832 = vsel %vm1829, %v1831, %v1827
    %v1833 = vmul.f32 %v1623, %v1832
    %v1834 = vrcp.pop %v1668
    %v1835 = vmul.f32 %v1668, %v1834
    %v1836 = vsub.f32 1.0, %v1835
    %v1837 = vmul.f32 %v1834, %v1836
    %v1838 = vadd.f32 %v1834, %v1837
    %vm1839 = vweird.f32 %v1668
    %vm1840 = vweird.f32 %v1834
    %vm1841 = vmor %vm1839, %vm1840
    %v1842 = vsel %vm1841, %v1834, %v1838
    %v1843 = vand.u32 2147483647, %v1668
    %vm1844 = vcmp.eq.f32.partialorder %v1843, 8.507059e+37
    %v1845 = vand.u32 %v1668, 2147483648
    %v1846 = vor.u32 1.1754944e-38, %v1845
    %v1847 = vsel %vm1844, %v1846, %v1842
    %v1848 = vmul.f32 %v1625, %v1847
    %v1849 = vrcp.pop %v1671
    %v1850 = vmul.f32 %v1671, %v1849
    %v1851 = vsub.f32 1.0, %v1850
    %v1852 = vmul.f32 %v1849, %v1851
    %v1853 = vadd.f32 %v1849, %v1852
    %vm1854 = vweird.f32 %v1671
    %vm1855 = vweird.f32 %v1849
    %vm1856 = vmor %vm1854, %vm1855
    %v1857 = vsel %vm1856, %v1849, %v1853
    %v1858 = vand.u32 2147483647, %v1671
    %vm1859 = vcmp.eq.f32.partialorder %v1858, 8.507059e+37
    %v1860 = vand.u32 %v1671, 2147483648
    %v1861 = vor.u32 1.1754944e-38, %v1860
    %v1862 = vsel %vm1859, %v1861, %v1857
    %v1863 = vmul.f32 %v1627, %v1862
    %v1864 = vrcp.pop %v1674
    %v1865 = vmul.f32 %v1674, %v1864
    %v1866 = vsub.f32 1.0, %v1865
    %v1867 = vmul.f32 %v1864, %v1866
    %v1868 = vadd.f32 %v1864, %v1867
    %vm1869 = vweird.f32 %v1674
    %vm1870 = vweird.f32 %v1864
    %vm1871 = vmor %vm1869, %vm1870
    %v1872 = vsel %vm1871, %v1864, %v1868
    %v1873 = vand.u32 2147483647, %v1674
    %vm1874 = vcmp.eq.f32.partialorder %v1873, 8.507059e+37
    %v1875 = vand.u32 %v1674, 2147483648
    %v1876 = vor.u32 1.1754944e-38, %v1875
    %v1877 = vsel %vm1874, %v1876, %v1872
    %v1878 = vmul.f32 %v1629, %v1877
    %v1879 = vrcp.pop %v1677
    %v1880 = vmul.f32 %v1677, %v1879
    %v1881 = vsub.f32 1.0, %v1880
    %v1882 = vmul.f32 %v1879, %v1881
    %v1883 = vadd.f32 %v1879, %v1882
    %vm1884 = vweird.f32 %v1677
    %vm1885 = vweird.f32 %v1879
    %vm1886 = vmor %vm1884, %vm1885
    %v1887 = vsel %vm1886, %v1879, %v1883
    %v1888 = vand.u32 2147483647, %v1677
    %vm1889 = vcmp.eq.f32.partialorder %v1888, 8.507059e+37
    %v1890 = vand.u32 %v1677, 2147483648
    %v1891 = vor.u32 1.1754944e-38, %v1890
    %v1892 = vsel %vm1889, %v1891, %v1887
    %v1893 = vmul.f32 %v1631, %v1892
    %v1894 = vrcp.pop %v1680
    %v1895 = vmul.f32 %v1680, %v1894
    %v1896 = vsub.f32 1.0, %v1895
    %v1897 = vmul.f32 %v1894, %v1896
    %v1898 = vadd.f32 %v1894, %v1897
    %vm1899 = vweird.f32 %v1680
    %vm1900 = vweird.f32 %v1894
    %vm1901 = vmor %vm1899, %vm1900
    %v1902 = vsel %vm1901, %v1894, %v1898
    %v1903 = vand.u32 2147483647, %v1680
    %vm1904 = vcmp.eq.f32.partialorder %v1903, 8.507059e+37
    %v1905 = vand.u32 %v1680, 2147483648
    %v1906 = vor.u32 1.1754944e-38, %v1905
    %v1907 = vsel %vm1904, %v1906, %v1902
    %v1908 = vmul.f32 %v1633, %v1907
    %v1909 = vrcp.pop %v1683
    %v1910 = vmul.f32 %v1683, %v1909
    %v1911 = vsub.f32 1.0, %v1910
    %v1912 = vmul.f32 %v1909, %v1911
    %v1913 = vadd.f32 %v1909, %v1912
    %vm1914 = vweird.f32 %v1683
    %vm1915 = vweird.f32 %v1909
    %vm1916 = vmor %vm1914, %vm1915
    %v1917 = vsel %vm1916, %v1909, %v1913
    %v1918 = vand.u32 2147483647, %v1683
    %vm1919 = vcmp.eq.f32.partialorder %v1918, 8.507059e+37
    %v1920 = vand.u32 %v1683, 2147483648
    %v1921 = vor.u32 1.1754944e-38, %v1920
    %v1922 = vsel %vm1919, %v1921, %v1917
    %v1923 = vmul.f32 %v1635, %v1922
    %1924 = vrot.lane.b32.xlu0 %v131, 56
    %v1925 = vpop.permute.xlu0 %1924
    %1926 = vrot.lane.b32.xlu0 %v134, 56
    %v1927 = vpop.permute.xlu0 %1926
    %v1931 = vsel %vm515, %v1698, 0
    %v1934 = vsel %vm515, %v1713, 0
    %1936 = vmatpush.msra.mxu0 0.0
    %1937 = vmatpush.msra.mxu0 0.0
    %1938 = vmatpush.msra.mxu0 0.0
    %1939 = vmatpush.msra.mxu0 0.0
    %1940 = vmatpush.msra.mxu0 0.0
    %1941 = vmatpush.msra.mxu0 0.0
    %1942 = vmatpush.msra.mxu0 0.0
    %1943 = vmatpush.msra.mxu0 0.0
    %1944 = vmatpush.msra.mxu0 0.0
    %1945 = vmatpush.msra.mxu0 0.0
    %1946 = vmatpush.msra.mxu0 0.0
    %1947 = vmatpush.msra.mxu0 0.0
    %1948 = vmatpush.msra.mxu0 0.0
    %1949 = vmatpush.msra.mxu0 0.0
    %1950 = vmatpush.msra.mxu0 %v1927
    %1951 = vmatpush.msra.mxu0 %v1925
    %1952 = vmatmul.f32.gmra.mxu0 %v1931
    %v1953 = vpop.f32.mrf.mxu0
    %v1954 = vadd.f32 0.0, %v1953
    %1955 = vmatmul.f32.gmra.mxu0 %v1934
    %v1956 = vpop.f32.mrf.mxu0
    %v1957 = vadd.f32 0.0, %v1956
    %1958 = vdwg.mxu0
    %1959 = vrot.lane.b32.xlu0 %v137, 56
    %v1960 = vpop.permute.xlu0 %1959
    %1961 = vrot.lane.b32.xlu0 %v140, 56
    %v1962 = vpop.permute.xlu0 %1961
    %v1966 = vsel %vm515, %v1728, 0
    %v1969 = vsel %vm515, %v1743, 0
    %1971 = vmatpush.msra.mxu0 0.0
    %1972 = vmatpush.msra.mxu0 0.0
    %1973 = vmatpush.msra.mxu0 0.0
    %1974 = vmatpush.msra.mxu0 0.0
    %1975 = vmatpush.msra.mxu0 0.0
    %1976 = vmatpush.msra.mxu0 0.0
    %1977 = vmatpush.msra.mxu0 0.0
    %1978 = vmatpush.msra.mxu0 0.0
    %1979 = vmatpush.msra.mxu0 0.0
    %1980 = vmatpush.msra.mxu0 0.0
    %1981 = vmatpush.msra.mxu0 0.0
    %1982 = vmatpush.msra.mxu0 0.0
    %1983 = vmatpush.msra.mxu0 0.0
    %1984 = vmatpush.msra.mxu0 0.0
    %1985 = vmatpush.msra.mxu0 %v1962
    %1986 = vmatpush.msra.mxu0 %v1960
    %1987 = vmatmul.f32.gmra.mxu0 %v1966
    %v1988 = vpop.f32.mrf.mxu0
    %v1989 = vadd.f32 0.0, %v1988
    %1990 = vmatmul.f32.gmra.mxu0 %v1969
    %v1991 = vpop.f32.mrf.mxu0
    %v1992 = vadd.f32 0.0, %v1991
    %1993 = vdwg.mxu0
    %1994 = vrot.lane.b32.xlu0 %v143, 56
    %v1995 = vpop.permute.xlu0 %1994
    %1996 = vrot.lane.b32.xlu0 %v146, 56
    %v1997 = vpop.permute.xlu0 %1996
    %v2001 = vsel %vm515, %v1758, 0
    %v2004 = vsel %vm515, %v1773, 0
    %2006 = vmatpush.msra.mxu0 0.0
    %2007 = vmatpush.msra.mxu0 0.0
    %2008 = vmatpush.msra.mxu0 0.0
    %2009 = vmatpush.msra.mxu0 0.0
    %2010 = vmatpush.msra.mxu0 0.0
    %2011 = vmatpush.msra.mxu0 0.0
    %2012 = vmatpush.msra.mxu0 0.0
    %2013 = vmatpush.msra.mxu0 0.0
    %2014 = vmatpush.msra.mxu0 0.0
    %2015 = vmatpush.msra.mxu0 0.0
    %2016 = vmatpush.msra.mxu0 0.0
    %2017 = vmatpush.msra.mxu0 0.0
    %2018 = vmatpush.msra.mxu0 0.0
    %2019 = vmatpush.msra.mxu0 0.0
    %2020 = vmatpush.msra.mxu0 %v1997
    %2021 = vmatpush.msra.mxu0 %v1995
    %2022 = vmatmul.f32.gmra.mxu0 %v2001
    %v2023 = vpop.f32.mrf.mxu0
    %v2024 = vadd.f32 0.0, %v2023
    %2025 = vmatmul.f32.gmra.mxu0 %v2004
    %v2026 = vpop.f32.mrf.mxu0
    %v2027 = vadd.f32 0.0, %v2026
    %2028 = vdwg.mxu0
    %2029 = vrot.lane.b32.xlu0 %v149, 56
    %v2030 = vpop.permute.xlu0 %2029
    %2031 = vrot.lane.b32.xlu0 %v152, 56
    %v2032 = vpop.permute.xlu0 %2031
    %v2036 = vsel %vm515, %v1788, 0
    %v2039 = vsel %vm515, %v1803, 0
    %2041 = vmatpush.msra.mxu0 0.0
    %2042 = vmatpush.msra.mxu0 0.0
    %2043 = vmatpush.msra.mxu0 0.0
    %2044 = vmatpush.msra.mxu0 0.0
    %2045 = vmatpush.msra.mxu0 0.0
    %2046 = vmatpush.msra.mxu0 0.0
    %2047 = vmatpush.msra.mxu0 0.0
    %2048 = vmatpush.msra.mxu0 0.0
    %2049 = vmatpush.msra.mxu0 0.0
    %2050 = vmatpush.msra.mxu0 0.0
    %2051 = vmatpush.msra.mxu0 0.0
    %2052 = vmatpush.msra.mxu0 0.0
    %2053 = vmatpush.msra.mxu0 0.0
    %2054 = vmatpush.msra.mxu0 0.0
    %2055 = vmatpush.msra.mxu0 %v2032
    %2056 = vmatpush.msra.mxu0 %v2030
    %2057 = vmatmul.f32.gmra.mxu0 %v2036
    %v2058 = vpop.f32.mrf.mxu0
    %v2059 = vadd.f32 0.0, %v2058
    %2060 = vmatmul.f32.gmra.mxu0 %v2039
    %v2061 = vpop.f32.mrf.mxu0
    %v2062 = vadd.f32 0.0, %v2061
    %2063 = vdwg.mxu0
    %2064 = vrot.lane.b32.xlu0 %v155, 56
    %v2065 = vpop.permute.xlu0 %2064
    %2066 = vrot.lane.b32.xlu0 %v158, 56
    %v2067 = vpop.permute.xlu0 %2066
    %v2071 = vsel %vm515, %v1818, 0
    %v2074 = vsel %vm515, %v1833, 0
    %2076 = vmatpush.msra.mxu0 0.0
    %2077 = vmatpush.msra.mxu0 0.0
    %2078 = vmatpush.msra.mxu0 0.0
    %2079 = vmatpush.msra.mxu0 0.0
    %2080 = vmatpush.msra.mxu0 0.0
    %2081 = vmatpush.msra.mxu0 0.0
    %2082 = vmatpush.msra.mxu0 0.0
    %2083 = vmatpush.msra.mxu0 0.0
    %2084 = vmatpush.msra.mxu0 0.0
    %2085 = vmatpush.msra.mxu0 0.0
    %2086 = vmatpush.msra.mxu0 0.0
    %2087 = vmatpush.msra.mxu0 0.0
    %2088 = vmatpush.msra.mxu0 0.0
    %2089 = vmatpush.msra.mxu0 0.0
    %2090 = vmatpush.msra.mxu0 %v2067
    %2091 = vmatpush.msra.mxu0 %v2065
    %2092 = vmatmul.f32.gmra.mxu0 %v2071
    %v2093 = vpop.f32.mrf.mxu0
    %v2094 = vadd.f32 0.0, %v2093
    %2095 = vmatmul.f32.gmra.mxu0 %v2074
    %v2096 = vpop.f32.mrf.mxu0
    %v2097 = vadd.f32 0.0, %v2096
    %2098 = vdwg.mxu0
    %2099 = vrot.lane.b32.xlu0 %v161, 56
    %v2100 = vpop.permute.xlu0 %2099
    %2101 = vrot.lane.b32.xlu0 %v164, 56
    %v2102 = vpop.permute.xlu0 %2101
    %v2106 = vsel %vm515, %v1848, 0
    %v2109 = vsel %vm515, %v1863, 0
    %2111 = vmatpush.msra.mxu0 0.0
    %2112 = vmatpush.msra.mxu0 0.0
    %2113 = vmatpush.msra.mxu0 0.0
    %2114 = vmatpush.msra.mxu0 0.0
    %2115 = vmatpush.msra.mxu0 0.0
    %2116 = vmatpush.msra.mxu0 0.0
    %2117 = vmatpush.msra.mxu0 0.0
    %2118 = vmatpush.msra.mxu0 0.0
    %2119 = vmatpush.msra.mxu0 0.0
    %2120 = vmatpush.msra.mxu0 0.0
    %2121 = vmatpush.msra.mxu0 0.0
    %2122 = vmatpush.msra.mxu0 0.0
    %2123 = vmatpush.msra.mxu0 0.0
    %2124 = vmatpush.msra.mxu0 0.0
    %2125 = vmatpush.msra.mxu0 %v2102
    %2126 = vmatpush.msra.mxu0 %v2100
    %2127 = vmatmul.f32.gmra.mxu0 %v2106
    %v2128 = vpop.f32.mrf.mxu0
    %v2129 = vadd.f32 0.0, %v2128
    %2130 = vmatmul.f32.gmra.mxu0 %v2109
    %v2131 = vpop.f32.mrf.mxu0
    %v2132 = vadd.f32 0.0, %v2131
    %2133 = vdwg.mxu0
    %2134 = vrot.lane.b32.xlu0 %v167, 56
    %v2135 = vpop.permute.xlu0 %2134
    %2136 = vrot.lane.b32.xlu0 %v170, 56
    %v2137 = vpop.permute.xlu0 %2136
    %v2141 = vsel %vm515, %v1878, 0
    %v2144 = vsel %vm515, %v1893, 0
    %2146 = vmatpush.msra.mxu0 0.0
    %2147 = vmatpush.msra.mxu0 0.0
    %2148 = vmatpush.msra.mxu0 0.0
    %2149 = vmatpush.msra.mxu0 0.0
    %2150 = vmatpush.msra.mxu0 0.0
    %2151 = vmatpush.msra.mxu0 0.0
    %2152 = vmatpush.msra.mxu0 0.0
    %2153 = vmatpush.msra.mxu0 0.0
    %2154 = vmatpush.msra.mxu0 0.0
    %2155 = vmatpush.msra.mxu0 0.0
    %2156 = vmatpush.msra.mxu0 0.0
    %2157 = vmatpush.msra.mxu0 0.0
    %2158 = vmatpush.msra.mxu0 0.0
    %2159 = vmatpush.msra.mxu0 0.0
    %2160 = vmatpush.msra.mxu0 %v2137
    %2161 = vmatpush.msra.mxu0 %v2135
    %2162 = vmatmul.f32.gmra.mxu0 %v2141
    %v2163 = vpop.f32.mrf.mxu0
    %v2164 = vadd.f32 0.0, %v2163
    %2165 = vmatmul.f32.gmra.mxu0 %v2144
    %v2166 = vpop.f32.mrf.mxu0
    %v2167 = vadd.f32 0.0, %v2166
    %2168 = vdwg.mxu0
    %2169 = vrot.lane.b32.xlu0 %v173, 56
    %v2170 = vpop.permute.xlu0 %2169
    %2171 = vrot.lane.b32.xlu0 %v176, 56
    %v2172 = vpop.permute.xlu0 %2171
    %v2176 = vsel %vm515, %v1908, 0
    %v2179 = vsel %vm515, %v1923, 0
    %2181 = vmatpush.msra.mxu0 0.0
    %2182 = vmatpush.msra.mxu0 0.0
    %2183 = vmatpush.msra.mxu0 0.0
    %2184 = vmatpush.msra.mxu0 0.0
    %2185 = vmatpush.msra.mxu0 0.0
    %2186 = vmatpush.msra.mxu0 0.0
    %2187 = vmatpush.msra.mxu0 0.0
    %2188 = vmatpush.msra.mxu0 0.0
    %2189 = vmatpush.msra.mxu0 0.0
    %2190 = vmatpush.msra.mxu0 0.0
    %2191 = vmatpush.msra.mxu0 0.0
    %2192 = vmatpush.msra.mxu0 0.0
    %2193 = vmatpush.msra.mxu0 0.0
    %2194 = vmatpush.msra.mxu0 0.0
    %2195 = vmatpush.msra.mxu0 %v2172
    %2196 = vmatpush.msra.mxu0 %v2170
    %2197 = vmatmul.f32.gmra.mxu0 %v2176
    %v2198 = vpop.f32.mrf.mxu0
    %v2199 = vadd.f32 0.0, %v2198
    %2200 = vmatmul.f32.gmra.mxu0 %v2179
    %v2201 = vpop.f32.mrf.mxu0
    %v2202 = vadd.f32 0.0, %v2201
    %2203 = vdwg.mxu0
    %2220 = vrot.lane.b32.xlu0 %v1954, 8
    %v2221 = vpop.permute.xlu0 %2220
    %2222 = vrot.lane.b32.xlu0 %v1957, 8
    %v2223 = vpop.permute.xlu0 %2222
    %2224 = vrot.lane.b32.xlu0 %v1989, 8
    %v2225 = vpop.permute.xlu0 %2224
    %2226 = vrot.lane.b32.xlu0 %v1992, 8
    %v2227 = vpop.permute.xlu0 %2226
    %2228 = vrot.lane.b32.xlu0 %v2024, 8
    %v2229 = vpop.permute.xlu0 %2228
    %2230 = vrot.lane.b32.xlu0 %v2027, 8
    %v2231 = vpop.permute.xlu0 %2230
    %2232 = vrot.lane.b32.xlu0 %v2059, 8
    %v2233 = vpop.permute.xlu0 %2232
    %2234 = vrot.lane.b32.xlu0 %v2062, 8
    %v2235 = vpop.permute.xlu0 %2234
    %2236 = vrot.lane.b32.xlu0 %v2094, 8
    %v2237 = vpop.permute.xlu0 %2236
    %2238 = vrot.lane.b32.xlu0 %v2097, 8
    %v2239 = vpop.permute.xlu0 %2238
    %2240 = vrot.lane.b32.xlu0 %v2129, 8
    %v2241 = vpop.permute.xlu0 %2240
    %2242 = vrot.lane.b32.xlu0 %v2132, 8
    %v2243 = vpop.permute.xlu0 %2242
    %2244 = vrot.lane.b32.xlu0 %v2164, 8
    %v2245 = vpop.permute.xlu0 %2244
    %2246 = vrot.lane.b32.xlu0 %v2167, 8
    %v2247 = vpop.permute.xlu0 %2246
    %2248 = vrot.lane.b32.xlu0 %v2199, 8
    %v2249 = vpop.permute.xlu0 %2248
    %2250 = vrot.lane.b32.xlu0 %v2202, 8
    %v2251 = vpop.permute.xlu0 %2250
    %vm2268 = vcmask 130112
    %2269 = vst.msk [vmem:[#allocation2] sm:$0xff] %vm2268, %v2221
    %2270 = vst.msk [vmem:[#allocation2 + $0x8] sm:$0xff] %vm2268, %v2223
    %2271 = vst.msk [vmem:[#allocation2 + $0x10] sm:$0xff] %vm2268, %v2225
    %2272 = vst.msk [vmem:[#allocation2 + $0x18] sm:$0xff] %vm2268, %v2227
    %2273 = vst.msk [vmem:[#allocation2 + $0x20] sm:$0xff] %vm2268, %v2229
    %2274 = vst.msk [vmem:[#allocation2 + $0x28] sm:$0xff] %vm2268, %v2231
    %2275 = vst.msk [vmem:[#allocation2 + $0x30] sm:$0xff] %vm2268, %v2233
    %2276 = vst.msk [vmem:[#allocation2 + $0x38] sm:$0xff] %vm2268, %v2235
    %2277 = vst.msk [vmem:[#allocation2 + $0x40] sm:$0xff] %vm2268, %v2237
    %2278 = vst.msk [vmem:[#allocation2 + $0x48] sm:$0xff] %vm2268, %v2239
    %2279 = vst.msk [vmem:[#allocation2 + $0x50] sm:$0xff] %vm2268, %v2241
    %2280 = vst.msk [vmem:[#allocation2 + $0x58] sm:$0xff] %vm2268, %v2243
    %2281 = vst.msk [vmem:[#allocation2 + $0x60] sm:$0xff] %vm2268, %v2245
    %2282 = vst.msk [vmem:[#allocation2 + $0x68] sm:$0xff] %vm2268, %v2247
    %2283 = vst.msk [vmem:[#allocation2 + $0x70] sm:$0xff] %vm2268, %v2249
    %2284 = vst.msk [vmem:[#allocation2 + $0x78] sm:$0xff] %vm2268, %v2251
    %2285 = vrot.lane.b32.xlu0 %v131, 112
    %v2286 = vpop.permute.xlu0 %2285
    %2287 = vrot.lane.b32.xlu0 %v134, 112
    %v2288 = vpop.permute.xlu0 %2287
    %2289 = vrot.lane.b32.xlu0 %v131, 80
    %v2290 = vpop.permute.xlu0 %2289
    %2291 = vrot.lane.b32.xlu0 %v134, 80
    %v2292 = vpop.permute.xlu0 %2291
    %v2293 = vsel %vm192, %v2286, 0
    %v2295 = vsel %vm192, %v2288, 0
    %v2297 = vsel %vm192, %v2290, 0
    %v2299 = vsel %vm192, %v2292, 0
    %2301 = vmatpush.xpose.msra.mxu0 0.0
    %2302 = vmatpush.xpose.msra.mxu0 0.0
    %2303 = vmatpush.xpose.msra.mxu0 0.0
    %2304 = vmatpush.xpose.msra.mxu0 0.0
    %2305 = vmatpush.xpose.msra.mxu0 0.0
    %2306 = vmatpush.xpose.msra.mxu0 0.0
    %2307 = vmatpush.xpose.msra.mxu0 0.0
    %2308 = vmatpush.xpose.msra.mxu0 0.0
    %2309 = vmatpush.xpose.msra.mxu0 0.0
    %2310 = vmatpush.xpose.msra.mxu0 0.0
    %2311 = vmatpush.xpose.msra.mxu0 0.0
    %2312 = vmatpush.xpose.msra.mxu0 0.0
    %2313 = vmatpush.xpose.msra.mxu0 0.0
    %2314 = vmatpush.xpose.msra.mxu0 0.0
    %2315 = vmatpush.xpose.msra.mxu0 %v2299
    %2316 = vmatpush.xpose.msra.mxu0 %v2297
    %2317 = vmatmul.f32.gmra.mxu0 %v2293
    %v2318 = vpop.f32.mrf.mxu0
    %v2319 = vadd.f32 0.0, %v2318
    %2320 = vmatmul.f32.gmra.mxu0 %v2295
    %v2321 = vpop.f32.mrf.mxu0
    %v2322 = vadd.f32 0.0, %v2321
    %2323 = vdwg.mxu0
    %2324 = vrot.lane.b32.xlu0 %v137, 112
    %v2325 = vpop.permute.xlu0 %2324
    %2326 = vrot.lane.b32.xlu0 %v140, 112
    %v2327 = vpop.permute.xlu0 %2326
    %2328 = vrot.lane.b32.xlu0 %v137, 80
    %v2329 = vpop.permute.xlu0 %2328
    %2330 = vrot.lane.b32.xlu0 %v140, 80
    %v2331 = vpop.permute.xlu0 %2330
    %v2332 = vsel %vm192, %v2325, 0
    %v2334 = vsel %vm192, %v2327, 0
    %v2336 = vsel %vm192, %v2329, 0
    %v2338 = vsel %vm192, %v2331, 0
    %2340 = vmatpush.xpose.msra.mxu0 0.0
    %2341 = vmatpush.xpose.msra.mxu0 0.0
    %2342 = vmatpush.xpose.msra.mxu0 0.0
    %2343 = vmatpush.xpose.msra.mxu0 0.0
    %2344 = vmatpush.xpose.msra.mxu0 0.0
    %2345 = vmatpush.xpose.msra.mxu0 0.0
    %2346 = vmatpush.xpose.msra.mxu0 0.0
    %2347 = vmatpush.xpose.msra.mxu0 0.0
    %2348 = vmatpush.xpose.msra.mxu0 0.0
    %2349 = vmatpush.xpose.msra.mxu0 0.0
    %2350 = vmatpush.xpose.msra.mxu0 0.0
    %2351 = vmatpush.xpose.msra.mxu0 0.0
    %2352 = vmatpush.xpose.msra.mxu0 0.0
    %2353 = vmatpush.xpose.msra.mxu0 0.0
    %2354 = vmatpush.xpose.msra.mxu0 %v2338
    %2355 = vmatpush.xpose.msra.mxu0 %v2336
    %2356 = vmatmul.f32.gmra.mxu0 %v2332
    %v2357 = vpop.f32.mrf.mxu0
    %v2358 = vadd.f32 0.0, %v2357
    %2359 = vmatmul.f32.gmra.mxu0 %v2334
    %v2360 = vpop.f32.mrf.mxu0
    %v2361 = vadd.f32 0.0, %v2360
    %2362 = vdwg.mxu0
    %2363 = vrot.lane.b32.xlu0 %v143, 112
    %v2364 = vpop.permute.xlu0 %2363
    %2365 = vrot.lane.b32.xlu0 %v146, 112
    %v2366 = vpop.permute.xlu0 %2365
    %2367 = vrot.lane.b32.xlu0 %v143, 80
    %v2368 = vpop.permute.xlu0 %2367
    %2369 = vrot.lane.b32.xlu0 %v146, 80
    %v2370 = vpop.permute.xlu0 %2369
    %v2371 = vsel %vm192, %v2364, 0
    %v2373 = vsel %vm192, %v2366, 0
    %v2375 = vsel %vm192, %v2368, 0
    %v2377 = vsel %vm192, %v2370, 0
    %2379 = vmatpush.xpose.msra.mxu0 0.0
    %2380 = vmatpush.xpose.msra.mxu0 0.0
    %2381 = vmatpush.xpose.msra.mxu0 0.0
    %2382 = vmatpush.xpose.msra.mxu0 0.0
    %2383 = vmatpush.xpose.msra.mxu0 0.0
    %2384 = vmatpush.xpose.msra.mxu0 0.0
    %2385 = vmatpush.xpose.msra.mxu0 0.0
    %2386 = vmatpush.xpose.msra.mxu0 0.0
    %2387 = vmatpush.xpose.msra.mxu0 0.0
    %2388 = vmatpush.xpose.msra.mxu0 0.0
    %2389 = vmatpush.xpose.msra.mxu0 0.0
    %2390 = vmatpush.xpose.msra.mxu0 0.0
    %2391 = vmatpush.xpose.msra.mxu0 0.0
    %2392 = vmatpush.xpose.msra.mxu0 0.0
    %2393 = vmatpush.xpose.msra.mxu0 %v2377
    %2394 = vmatpush.xpose.msra.mxu0 %v2375
    %2395 = vmatmul.f32.gmra.mxu0 %v2371
    %v2396 = vpop.f32.mrf.mxu0
    %v2397 = vadd.f32 0.0, %v2396
    %2398 = vmatmul.f32.gmra.mxu0 %v2373
    %v2399 = vpop.f32.mrf.mxu0
    %v2400 = vadd.f32 0.0, %v2399
    %2401 = vdwg.mxu0
    %2402 = vrot.lane.b32.xlu0 %v149, 112
    %v2403 = vpop.permute.xlu0 %2402
    %2404 = vrot.lane.b32.xlu0 %v152, 112
    %v2405 = vpop.permute.xlu0 %2404
    %2406 = vrot.lane.b32.xlu0 %v149, 80
    %v2407 = vpop.permute.xlu0 %2406
    %2408 = vrot.lane.b32.xlu0 %v152, 80
    %v2409 = vpop.permute.xlu0 %2408
    %v2410 = vsel %vm192, %v2403, 0
    %v2412 = vsel %vm192, %v2405, 0
    %v2414 = vsel %vm192, %v2407, 0
    %v2416 = vsel %vm192, %v2409, 0
    %2418 = vmatpush.xpose.msra.mxu0 0.0
    %2419 = vmatpush.xpose.msra.mxu0 0.0
    %2420 = vmatpush.xpose.msra.mxu0 0.0
    %2421 = vmatpush.xpose.msra.mxu0 0.0
    %2422 = vmatpush.xpose.msra.mxu0 0.0
    %2423 = vmatpush.xpose.msra.mxu0 0.0
    %2424 = vmatpush.xpose.msra.mxu0 0.0
    %2425 = vmatpush.xpose.msra.mxu0 0.0
    %2426 = vmatpush.xpose.msra.mxu0 0.0
    %2427 = vmatpush.xpose.msra.mxu0 0.0
    %2428 = vmatpush.xpose.msra.mxu0 0.0
    %2429 = vmatpush.xpose.msra.mxu0 0.0
    %2430 = vmatpush.xpose.msra.mxu0 0.0
    %2431 = vmatpush.xpose.msra.mxu0 0.0
    %2432 = vmatpush.xpose.msra.mxu0 %v2416
    %2433 = vmatpush.xpose.msra.mxu0 %v2414
    %2434 = vmatmul.f32.gmra.mxu0 %v2410
    %v2435 = vpop.f32.mrf.mxu0
    %v2436 = vadd.f32 0.0, %v2435
    %2437 = vmatmul.f32.gmra.mxu0 %v2412
    %v2438 = vpop.f32.mrf.mxu0
    %v2439 = vadd.f32 0.0, %v2438
    %2440 = vdwg.mxu0
    %2441 = vrot.lane.b32.xlu0 %v155, 112
    %v2442 = vpop.permute.xlu0 %2441
    %2443 = vrot.lane.b32.xlu0 %v158, 112
    %v2444 = vpop.permute.xlu0 %2443
    %2445 = vrot.lane.b32.xlu0 %v155, 80
    %v2446 = vpop.permute.xlu0 %2445
    %2447 = vrot.lane.b32.xlu0 %v158, 80
    %v2448 = vpop.permute.xlu0 %2447
    %v2449 = vsel %vm192, %v2442, 0
    %v2451 = vsel %vm192, %v2444, 0
    %v2453 = vsel %vm192, %v2446, 0
    %v2455 = vsel %vm192, %v2448, 0
    %2457 = vmatpush.xpose.msra.mxu0 0.0
    %2458 = vmatpush.xpose.msra.mxu0 0.0
    %2459 = vmatpush.xpose.msra.mxu0 0.0
    %2460 = vmatpush.xpose.msra.mxu0 0.0
    %2461 = vmatpush.xpose.msra.mxu0 0.0
    %2462 = vmatpush.xpose.msra.mxu0 0.0
    %2463 = vmatpush.xpose.msra.mxu0 0.0
    %2464 = vmatpush.xpose.msra.mxu0 0.0
    %2465 = vmatpush.xpose.msra.mxu0 0.0
    %2466 = vmatpush.xpose.msra.mxu0 0.0
    %2467 = vmatpush.xpose.msra.mxu0 0.0
    %2468 = vmatpush.xpose.msra.mxu0 0.0
    %2469 = vmatpush.xpose.msra.mxu0 0.0
    %2470 = vmatpush.xpose.msra.mxu0 0.0
    %2471 = vmatpush.xpose.msra.mxu0 %v2455
    %2472 = vmatpush.xpose.msra.mxu0 %v2453
    %2473 = vmatmul.f32.gmra.mxu0 %v2449
    %v2474 = vpop.f32.mrf.mxu0
    %v2475 = vadd.f32 0.0, %v2474
    %2476 = vmatmul.f32.gmra.mxu0 %v2451
    %v2477 = vpop.f32.mrf.mxu0
    %v2478 = vadd.f32 0.0, %v2477
    %2479 = vdwg.mxu0
    %2480 = vrot.lane.b32.xlu0 %v161, 112
    %v2481 = vpop.permute.xlu0 %2480
    %2482 = vrot.lane.b32.xlu0 %v164, 112
    %v2483 = vpop.permute.xlu0 %2482
    %2484 = vrot.lane.b32.xlu0 %v161, 80
    %v2485 = vpop.permute.xlu0 %2484
    %2486 = vrot.lane.b32.xlu0 %v164, 80
    %v2487 = vpop.permute.xlu0 %2486
    %v2488 = vsel %vm192, %v2481, 0
    %v2490 = vsel %vm192, %v2483, 0
    %v2492 = vsel %vm192, %v2485, 0
    %v2494 = vsel %vm192, %v2487, 0
    %2496 = vmatpush.xpose.msra.mxu0 0.0
    %2497 = vmatpush.xpose.msra.mxu0 0.0
    %2498 = vmatpush.xpose.msra.mxu0 0.0
    %2499 = vmatpush.xpose.msra.mxu0 0.0
    %2500 = vmatpush.xpose.msra.mxu0 0.0
    %2501 = vmatpush.xpose.msra.mxu0 0.0
    %2502 = vmatpush.xpose.msra.mxu0 0.0
    %2503 = vmatpush.xpose.msra.mxu0 0.0
    %2504 = vmatpush.xpose.msra.mxu0 0.0
    %2505 = vmatpush.xpose.msra.mxu0 0.0
    %2506 = vmatpush.xpose.msra.mxu0 0.0
    %2507 = vmatpush.xpose.msra.mxu0 0.0
    %2508 = vmatpush.xpose.msra.mxu0 0.0
    %2509 = vmatpush.xpose.msra.mxu0 0.0
    %2510 = vmatpush.xpose.msra.mxu0 %v2494
    %2511 = vmatpush.xpose.msra.mxu0 %v2492
    %2512 = vmatmul.f32.gmra.mxu0 %v2488
    %v2513 = vpop.f32.mrf.mxu0
    %v2514 = vadd.f32 0.0, %v2513
    %2515 = vmatmul.f32.gmra.mxu0 %v2490
    %v2516 = vpop.f32.mrf.mxu0
    %v2517 = vadd.f32 0.0, %v2516
    %2518 = vdwg.mxu0
    %2519 = vrot.lane.b32.xlu0 %v167, 112
    %v2520 = vpop.permute.xlu0 %2519
    %2521 = vrot.lane.b32.xlu0 %v170, 112
    %v2522 = vpop.permute.xlu0 %2521
    %2523 = vrot.lane.b32.xlu0 %v167, 80
    %v2524 = vpop.permute.xlu0 %2523
    %2525 = vrot.lane.b32.xlu0 %v170, 80
    %v2526 = vpop.permute.xlu0 %2525
    %v2527 = vsel %vm192, %v2520, 0
    %v2529 = vsel %vm192, %v2522, 0
    %v2531 = vsel %vm192, %v2524, 0
    %v2533 = vsel %vm192, %v2526, 0
    %2535 = vmatpush.xpose.msra.mxu0 0.0
    %2536 = vmatpush.xpose.msra.mxu0 0.0
    %2537 = vmatpush.xpose.msra.mxu0 0.0
    %2538 = vmatpush.xpose.msra.mxu0 0.0
    %2539 = vmatpush.xpose.msra.mxu0 0.0
    %2540 = vmatpush.xpose.msra.mxu0 0.0
    %2541 = vmatpush.xpose.msra.mxu0 0.0
    %2542 = vmatpush.xpose.msra.mxu0 0.0
    %2543 = vmatpush.xpose.msra.mxu0 0.0
    %2544 = vmatpush.xpose.msra.mxu0 0.0
    %2545 = vmatpush.xpose.msra.mxu0 0.0
    %2546 = vmatpush.xpose.msra.mxu0 0.0
    %2547 = vmatpush.xpose.msra.mxu0 0.0
    %2548 = vmatpush.xpose.msra.mxu0 0.0
    %2549 = vmatpush.xpose.msra.mxu0 %v2533
    %2550 = vmatpush.xpose.msra.mxu0 %v2531
    %2551 = vmatmul.f32.gmra.mxu0 %v2527
    %v2552 = vpop.f32.mrf.mxu0
    %v2553 = vadd.f32 0.0, %v2552
    %2554 = vmatmul.f32.gmra.mxu0 %v2529
    %v2555 = vpop.f32.mrf.mxu0
    %v2556 = vadd.f32 0.0, %v2555
    %2557 = vdwg.mxu0
    %2558 = vrot.lane.b32.xlu0 %v173, 112
    %v2559 = vpop.permute.xlu0 %2558
    %2560 = vrot.lane.b32.xlu0 %v176, 112
    %v2561 = vpop.permute.xlu0 %2560
    %2562 = vrot.lane.b32.xlu0 %v173, 80
    %v2563 = vpop.permute.xlu0 %2562
    %2564 = vrot.lane.b32.xlu0 %v176, 80
    %v2565 = vpop.permute.xlu0 %2564
    %v2566 = vsel %vm192, %v2559, 0
    %v2568 = vsel %vm192, %v2561, 0
    %v2570 = vsel %vm192, %v2563, 0
    %v2572 = vsel %vm192, %v2565, 0
    %2574 = vmatpush.xpose.msra.mxu0 0.0
    %2575 = vmatpush.xpose.msra.mxu0 0.0
    %2576 = vmatpush.xpose.msra.mxu0 0.0
    %2577 = vmatpush.xpose.msra.mxu0 0.0
    %2578 = vmatpush.xpose.msra.mxu0 0.0
    %2579 = vmatpush.xpose.msra.mxu0 0.0
    %2580 = vmatpush.xpose.msra.mxu0 0.0
    %2581 = vmatpush.xpose.msra.mxu0 0.0
    %2582 = vmatpush.xpose.msra.mxu0 0.0
    %2583 = vmatpush.xpose.msra.mxu0 0.0
    %2584 = vmatpush.xpose.msra.mxu0 0.0
    %2585 = vmatpush.xpose.msra.mxu0 0.0
    %2586 = vmatpush.xpose.msra.mxu0 0.0
    %2587 = vmatpush.xpose.msra.mxu0 0.0
    %2588 = vmatpush.xpose.msra.mxu0 %v2572
    %2589 = vmatpush.xpose.msra.mxu0 %v2570
    %2590 = vmatmul.f32.gmra.mxu0 %v2566
    %v2591 = vpop.f32.mrf.mxu0
    %v2592 = vadd.f32 0.0, %v2591
    %2593 = vmatmul.f32.gmra.mxu0 %v2568
    %v2594 = vpop.f32.mrf.mxu0
    %v2595 = vadd.f32 0.0, %v2594
    %2596 = vdwg.mxu0
    %v2597 = vmul.f32 %v2319, 0.35355338
    %v2598 = vmul.f32 %v2322, 0.35355338
    %v2599 = vmul.f32 %v2358, 0.35355338
    %v2600 = vmul.f32 %v2361, 0.35355338
    %v2601 = vmul.f32 %v2397, 0.35355338
    %v2602 = vmul.f32 %v2400, 0.35355338
    %v2603 = vmul.f32 %v2436, 0.35355338
    %v2604 = vmul.f32 %v2439, 0.35355338
    %v2605 = vmul.f32 %v2475, 0.35355338
    %v2606 = vmul.f32 %v2478, 0.35355338
    %v2607 = vmul.f32 %v2514, 0.35355338
    %v2608 = vmul.f32 %v2517, 0.35355338
    %v2609 = vmul.f32 %v2553, 0.35355338
    %v2610 = vmul.f32 %v2556, 0.35355338
    %v2611 = vmul.f32 %v2592, 0.35355338
    %v2612 = vmul.f32 %v2595, 0.35355338
    %v2613 = vadd.f32 %v2597, %v182
    %v2614 = vadd.f32 %v2598, %v183
    %v2615 = vadd.f32 %v2599, %v182
    %v2616 = vadd.f32 %v2600, %v183
    %v2617 = vadd.f32 %v2601, %v182
    %v2618 = vadd.f32 %v2602, %v183
    %v2619 = vadd.f32 %v2603, %v182
    %v2620 = vadd.f32 %v2604, %v183
    %v2621 = vadd.f32 %v2605, %v182
    %v2622 = vadd.f32 %v2606, %v183
    %v2623 = vadd.f32 %v2607, %v182
    %v2624 = vadd.f32 %v2608, %v183
    %v2625 = vadd.f32 %v2609, %v182
    %v2626 = vadd.f32 %v2610, %v183
    %v2627 = vadd.f32 %v2611, %v182
    %v2628 = vadd.f32 %v2612, %v183
    %v2629 = vsel %vm515, %v2613, -inf
    %2630 = vmax.xlane.f32.xlu0 %v2629
    %v2631 = vpop.xlane.xlu0 %2630
    %v2632 = vsel %vm515, %v2614, -inf
    %2633 = vmax.xlane.f32.xlu0 %v2632
    %v2634 = vpop.xlane.xlu0 %2633
    %v2635 = vsel %vm515, %v2615, -inf
    %2636 = vmax.xlane.f32.xlu0 %v2635
    %v2637 = vpop.xlane.xlu0 %2636
    %v2638 = vsel %vm515, %v2616, -inf
    %2639 = vmax.xlane.f32.xlu0 %v2638
    %v2640 = vpop.xlane.xlu0 %2639
    %v2641 = vsel %vm515, %v2617, -inf
    %2642 = vmax.xlane.f32.xlu0 %v2641
    %v2643 = vpop.xlane.xlu0 %2642
    %v2644 = vsel %vm515, %v2618, -inf
    %2645 = vmax.xlane.f32.xlu0 %v2644
    %v2646 = vpop.xlane.xlu0 %2645
    %v2647 = vsel %vm515, %v2619, -inf
    %2648 = vmax.xlane.f32.xlu0 %v2647
    %v2649 = vpop.xlane.xlu0 %2648
    %v2650 = vsel %vm515, %v2620, -inf
    %2651 = vmax.xlane.f32.xlu0 %v2650
    %v2652 = vpop.xlane.xlu0 %2651
    %v2653 = vsel %vm515, %v2621, -inf
    %2654 = vmax.xlane.f32.xlu0 %v2653
    %v2655 = vpop.xlane.xlu0 %2654
    %v2656 = vsel %vm515, %v2622, -inf
    %2657 = vmax.xlane.f32.xlu0 %v2656
    %v2658 = vpop.xlane.xlu0 %2657
    %v2659 = vsel %vm515, %v2623, -inf
    %2660 = vmax.xlane.f32.xlu0 %v2659
    %v2661 = vpop.xlane.xlu0 %2660
    %v2662 = vsel %vm515, %v2624, -inf
    %2663 = vmax.xlane.f32.xlu0 %v2662
    %v2664 = vpop.xlane.xlu0 %2663
    %v2665 = vsel %vm515, %v2625, -inf
    %2666 = vmax.xlane.f32.xlu0 %v2665
    %v2667 = vpop.xlane.xlu0 %2666
    %v2668 = vsel %vm515, %v2626, -inf
    %2669 = vmax.xlane.f32.xlu0 %v2668
    %v2670 = vpop.xlane.xlu0 %2669
    %v2671 = vsel %vm515, %v2627, -inf
    %2672 = vmax.xlane.f32.xlu0 %v2671
    %v2673 = vpop.xlane.xlu0 %2672
    %v2674 = vsel %vm515, %v2628, -inf
    %2675 = vmax.xlane.f32.xlu0 %v2674
    %v2676 = vpop.xlane.xlu0 %2675
    %v2677 = vsub.f32 %v2613, %v2631
    %v2678 = vsub.f32 %v2614, %v2634
    %v2679 = vsub.f32 %v2615, %v2637
    %v2680 = vsub.f32 %v2616, %v2640
    %v2681 = vsub.f32 %v2617, %v2643
    %v2682 = vsub.f32 %v2618, %v2646
    %v2683 = vsub.f32 %v2619, %v2649
    %v2684 = vsub.f32 %v2620, %v2652
    %v2685 = vsub.f32 %v2621, %v2655
    %v2686 = vsub.f32 %v2622, %v2658
    %v2687 = vsub.f32 %v2623, %v2661
    %v2688 = vsub.f32 %v2624, %v2664
    %v2689 = vsub.f32 %v2625, %v2667
    %v2690 = vsub.f32 %v2626, %v2670
    %v2691 = vsub.f32 %v2627, %v2673
    %v2692 = vsub.f32 %v2628, %v2676
    %v2693 = vmul.f32 %v2677, 1.442695
    %v2694 = vpow.pop %v2693
    %v2695 = vmul.f32 %v2678, 1.442695
    %v2696 = vpow.pop %v2695
    %v2697 = vmul.f32 %v2679, 1.442695
    %v2698 = vpow.pop %v2697
    %v2699 = vmul.f32 %v2680, 1.442695
    %v2700 = vpow.pop %v2699
    %v2701 = vmul.f32 %v2681, 1.442695
    %v2702 = vpow.pop %v2701
    %v2703 = vmul.f32 %v2682, 1.442695
    %v2704 = vpow.pop %v2703
    %v2705 = vmul.f32 %v2683, 1.442695
    %v2706 = vpow.pop %v2705
    %v2707 = vmul.f32 %v2684, 1.442695
    %v2708 = vpow.pop %v2707
    %v2709 = vmul.f32 %v2685, 1.442695
    %v2710 = vpow.pop %v2709
    %v2711 = vmul.f32 %v2686, 1.442695
    %v2712 = vpow.pop %v2711
    %v2713 = vmul.f32 %v2687, 1.442695
    %v2714 = vpow.pop %v2713
    %v2715 = vmul.f32 %v2688, 1.442695
    %v2716 = vpow.pop %v2715
    %v2717 = vmul.f32 %v2689, 1.442695
    %v2718 = vpow.pop %v2717
    %v2719 = vmul.f32 %v2690, 1.442695
    %v2720 = vpow.pop %v2719
    %v2721 = vmul.f32 %v2691, 1.442695
    %v2722 = vpow.pop %v2721
    %v2723 = vmul.f32 %v2692, 1.442695
    %v2724 = vpow.pop %v2723
    %v2725 = vsel %vm515, %v2694, 0.0
    %2726 = vadd.xlane.f32.xlu0 %v2725
    %v2727 = vpop.xlane.xlu0 %2726
    %v2728 = vsel %vm515, %v2696, 0.0
    %2729 = vadd.xlane.f32.xlu0 %v2728
    %v2730 = vpop.xlane.xlu0 %2729
    %v2731 = vsel %vm515, %v2698, 0.0
    %2732 = vadd.xlane.f32.xlu0 %v2731
    %v2733 = vpop.xlane.xlu0 %2732
    %v2734 = vsel %vm515, %v2700, 0.0
    %2735 = vadd.xlane.f32.xlu0 %v2734
    %v2736 = vpop.xlane.xlu0 %2735
    %v2737 = vsel %vm515, %v2702, 0.0
    %2738 = vadd.xlane.f32.xlu0 %v2737
    %v2739 = vpop.xlane.xlu0 %2738
    %v2740 = vsel %vm515, %v2704, 0.0
    %2741 = vadd.xlane.f32.xlu0 %v2740
    %v2742 = vpop.xlane.xlu0 %2741
    %v2743 = vsel %vm515, %v2706, 0.0
    %2744 = vadd.xlane.f32.xlu0 %v2743
    %v2745 = vpop.xlane.xlu0 %2744
    %v2746 = vsel %vm515, %v2708, 0.0
    %2747 = vadd.xlane.f32.xlu0 %v2746
    %v2748 = vpop.xlane.xlu0 %2747
    %v2749 = vsel %vm515, %v2710, 0.0
    %2750 = vadd.xlane.f32.xlu0 %v2749
    %v2751 = vpop.xlane.xlu0 %2750
    %v2752 = vsel %vm515, %v2712, 0.0
    %2753 = vadd.xlane.f32.xlu0 %v2752
    %v2754 = vpop.xlane.xlu0 %2753
    %v2755 = vsel %vm515, %v2714, 0.0
    %2756 = vadd.xlane.f32.xlu0 %v2755
    %v2757 = vpop.xlane.xlu0 %2756
    %v2758 = vsel %vm515, %v2716, 0.0
    %2759 = vadd.xlane.f32.xlu0 %v2758
    %v2760 = vpop.xlane.xlu0 %2759
    %v2761 = vsel %vm515, %v2718, 0.0
    %2762 = vadd.xlane.f32.xlu0 %v2761
    %v2763 = vpop.xlane.xlu0 %2762
    %v2764 = vsel %vm515, %v2720, 0.0
    %2765 = vadd.xlane.f32.xlu0 %v2764
    %v2766 = vpop.xlane.xlu0 %2765
    %v2767 = vsel %vm515, %v2722, 0.0
    %2768 = vadd.xlane.f32.xlu0 %v2767
    %v2769 = vpop.xlane.xlu0 %2768
    %v2770 = vsel %vm515, %v2724, 0.0
    %2771 = vadd.xlane.f32.xlu0 %v2770
    %v2772 = vpop.xlane.xlu0 %2771
    %v2773 = vrcp.pop %v2727
    %v2774 = vmul.f32 %v2727, %v2773
    %v2775 = vsub.f32 1.0, %v2774
    %v2776 = vmul.f32 %v2773, %v2775
    %v2777 = vadd.f32 %v2773, %v2776
    %vm2778 = vweird.f32 %v2727
    %vm2779 = vweird.f32 %v2773
    %vm2780 = vmor %vm2778, %vm2779
    %v2781 = vsel %vm2780, %v2773, %v2777
    %v2782 = vand.u32 2147483647, %v2727
    %vm2783 = vcmp.eq.f32.partialorder %v2782, 8.507059e+37
    %v2784 = vand.u32 %v2727, 2147483648
    %v2785 = vor.u32 1.1754944e-38, %v2784
    %v2786 = vsel %vm2783, %v2785, %v2781
    %v2787 = vmul.f32 %v2694, %v2786
    %v2788 = vrcp.pop %v2730
    %v2789 = vmul.f32 %v2730, %v2788
    %v2790 = vsub.f32 1.0, %v2789
    %v2791 = vmul.f32 %v2788, %v2790
    %v2792 = vadd.f32 %v2788, %v2791
    %vm2793 = vweird.f32 %v2730
    %vm2794 = vweird.f32 %v2788
    %vm2795 = vmor %vm2793, %vm2794
    %v2796 = vsel %vm2795, %v2788, %v2792
    %v2797 = vand.u32 2147483647, %v2730
    %vm2798 = vcmp.eq.f32.partialorder %v2797, 8.507059e+37
    %v2799 = vand.u32 %v2730, 2147483648
    %v2800 = vor.u32 1.1754944e-38, %v2799
    %v2801 = vsel %vm2798, %v2800, %v2796
    %v2802 = vmul.f32 %v2696, %v2801
    %v2803 = vrcp.pop %v2733
    %v2804 = vmul.f32 %v2733, %v2803
    %v2805 = vsub.f32 1.0, %v2804
    %v2806 = vmul.f32 %v2803, %v2805
    %v2807 = vadd.f32 %v2803, %v2806
    %vm2808 = vweird.f32 %v2733
    %vm2809 = vweird.f32 %v2803
    %vm2810 = vmor %vm2808, %vm2809
    %v2811 = vsel %vm2810, %v2803, %v2807
    %v2812 = vand.u32 2147483647, %v2733
    %vm2813 = vcmp.eq.f32.partialorder %v2812, 8.507059e+37
    %v2814 = vand.u32 %v2733, 2147483648
    %v2815 = vor.u32 1.1754944e-38, %v2814
    %v2816 = vsel %vm2813, %v2815, %v2811
    %v2817 = vmul.f32 %v2698, %v2816
    %v2818 = vrcp.pop %v2736
    %v2819 = vmul.f32 %v2736, %v2818
    %v2820 = vsub.f32 1.0, %v2819
    %v2821 = vmul.f32 %v2818, %v2820
    %v2822 = vadd.f32 %v2818, %v2821
    %vm2823 = vweird.f32 %v2736
    %vm2824 = vweird.f32 %v2818
    %vm2825 = vmor %vm2823, %vm2824
    %v2826 = vsel %vm2825, %v2818, %v2822
    %v2827 = vand.u32 2147483647, %v2736
    %vm2828 = vcmp.eq.f32.partialorder %v2827, 8.507059e+37
    %v2829 = vand.u32 %v2736, 2147483648
    %v2830 = vor.u32 1.1754944e-38, %v2829
    %v2831 = vsel %vm2828, %v2830, %v2826
    %v2832 = vmul.f32 %v2700, %v2831
    %v2833 = vrcp.pop %v2739
    %v2834 = vmul.f32 %v2739, %v2833
    %v2835 = vsub.f32 1.0, %v2834
    %v2836 = vmul.f32 %v2833, %v2835
    %v2837 = vadd.f32 %v2833, %v2836
    %vm2838 = vweird.f32 %v2739
    %vm2839 = vweird.f32 %v2833
    %vm2840 = vmor %vm2838, %vm2839
    %v2841 = vsel %vm2840, %v2833, %v2837
    %v2842 = vand.u32 2147483647, %v2739
    %vm2843 = vcmp.eq.f32.partialorder %v2842, 8.507059e+37
    %v2844 = vand.u32 %v2739, 2147483648
    %v2845 = vor.u32 1.1754944e-38, %v2844
    %v2846 = vsel %vm2843, %v2845, %v2841
    %v2847 = vmul.f32 %v2702, %v2846
    %v2848 = vrcp.pop %v2742
    %v2849 = vmul.f32 %v2742, %v2848
    %v2850 = vsub.f32 1.0, %v2849
    %v2851 = vmul.f32 %v2848, %v2850
    %v2852 = vadd.f32 %v2848, %v2851
    %vm2853 = vweird.f32 %v2742
    %vm2854 = vweird.f32 %v2848
    %vm2855 = vmor %vm2853, %vm2854
    %v2856 = vsel %vm2855, %v2848, %v2852
    %v2857 = vand.u32 2147483647, %v2742
    %vm2858 = vcmp.eq.f32.partialorder %v2857, 8.507059e+37
    %v2859 = vand.u32 %v2742, 2147483648
    %v2860 = vor.u32 1.1754944e-38, %v2859
    %v2861 = vsel %vm2858, %v2860, %v2856
    %v2862 = vmul.f32 %v2704, %v2861
    %v2863 = vrcp.pop %v2745
    %v2864 = vmul.f32 %v2745, %v2863
    %v2865 = vsub.f32 1.0, %v2864
    %v2866 = vmul.f32 %v2863, %v2865
    %v2867 = vadd.f32 %v2863, %v2866
    %vm2868 = vweird.f32 %v2745
    %vm2869 = vweird.f32 %v2863
    %vm2870 = vmor %vm2868, %vm2869
    %v2871 = vsel %vm2870, %v2863, %v2867
    %v2872 = vand.u32 2147483647, %v2745
    %vm2873 = vcmp.eq.f32.partialorder %v2872, 8.507059e+37
    %v2874 = vand.u32 %v2745, 2147483648
    %v2875 = vor.u32 1.1754944e-38, %v2874
    %v2876 = vsel %vm2873, %v2875, %v2871
    %v2877 = vmul.f32 %v2706, %v2876
    %v2878 = vrcp.pop %v2748
    %v2879 = vmul.f32 %v2748, %v2878
    %v2880 = vsub.f32 1.0, %v2879
    %v2881 = vmul.f32 %v2878, %v2880
    %v2882 = vadd.f32 %v2878, %v2881
    %vm2883 = vweird.f32 %v2748
    %vm2884 = vweird.f32 %v2878
    %vm2885 = vmor %vm2883, %vm2884
    %v2886 = vsel %vm2885, %v2878, %v2882
    %v2887 = vand.u32 2147483647, %v2748
    %vm2888 = vcmp.eq.f32.partialorder %v2887, 8.507059e+37
    %v2889 = vand.u32 %v2748, 2147483648
    %v2890 = vor.u32 1.1754944e-38, %v2889
    %v2891 = vsel %vm2888, %v2890, %v2886
    %v2892 = vmul.f32 %v2708, %v2891
    %v2893 = vrcp.pop %v2751
    %v2894 = vmul.f32 %v2751, %v2893
    %v2895 = vsub.f32 1.0, %v2894
    %v2896 = vmul.f32 %v2893, %v2895
    %v2897 = vadd.f32 %v2893, %v2896
    %vm2898 = vweird.f32 %v2751
    %vm2899 = vweird.f32 %v2893
    %vm2900 = vmor %vm2898, %vm2899
    %v2901 = vsel %vm2900, %v2893, %v2897
    %v2902 = vand.u32 2147483647, %v2751
    %vm2903 = vcmp.eq.f32.partialorder %v2902, 8.507059e+37
    %v2904 = vand.u32 %v2751, 2147483648
    %v2905 = vor.u32 1.1754944e-38, %v2904
    %v2906 = vsel %vm2903, %v2905, %v2901
    %v2907 = vmul.f32 %v2710, %v2906
    %v2908 = vrcp.pop %v2754
    %v2909 = vmul.f32 %v2754, %v2908
    %v2910 = vsub.f32 1.0, %v2909
    %v2911 = vmul.f32 %v2908, %v2910
    %v2912 = vadd.f32 %v2908, %v2911
    %vm2913 = vweird.f32 %v2754
    %vm2914 = vweird.f32 %v2908
    %vm2915 = vmor %vm2913, %vm2914
    %v2916 = vsel %vm2915, %v2908, %v2912
    %v2917 = vand.u32 2147483647, %v2754
    %vm2918 = vcmp.eq.f32.partialorder %v2917, 8.507059e+37
    %v2919 = vand.u32 %v2754, 2147483648
    %v2920 = vor.u32 1.1754944e-38, %v2919
    %v2921 = vsel %vm2918, %v2920, %v2916
    %v2922 = vmul.f32 %v2712, %v2921
    %v2923 = vrcp.pop %v2757
    %v2924 = vmul.f32 %v2757, %v2923
    %v2925 = vsub.f32 1.0, %v2924
    %v2926 = vmul.f32 %v2923, %v2925
    %v2927 = vadd.f32 %v2923, %v2926
    %vm2928 = vweird.f32 %v2757
    %vm2929 = vweird.f32 %v2923
    %vm2930 = vmor %vm2928, %vm2929
    %v2931 = vsel %vm2930, %v2923, %v2927
    %v2932 = vand.u32 2147483647, %v2757
    %vm2933 = vcmp.eq.f32.partialorder %v2932, 8.507059e+37
    %v2934 = vand.u32 %v2757, 2147483648
    %v2935 = vor.u32 1.1754944e-38, %v2934
    %v2936 = vsel %vm2933, %v2935, %v2931
    %v2937 = vmul.f32 %v2714, %v2936
    %v2938 = vrcp.pop %v2760
    %v2939 = vmul.f32 %v2760, %v2938
    %v2940 = vsub.f32 1.0, %v2939
    %v2941 = vmul.f32 %v2938, %v2940
    %v2942 = vadd.f32 %v2938, %v2941
    %vm2943 = vweird.f32 %v2760
    %vm2944 = vweird.f32 %v2938
    %vm2945 = vmor %vm2943, %vm2944
    %v2946 = vsel %vm2945, %v2938, %v2942
    %v2947 = vand.u32 2147483647, %v2760
    %vm2948 = vcmp.eq.f32.partialorder %v2947, 8.507059e+37
    %v2949 = vand.u32 %v2760, 2147483648
    %v2950 = vor.u32 1.1754944e-38, %v2949
    %v2951 = vsel %vm2948, %v2950, %v2946
    %v2952 = vmul.f32 %v2716, %v2951
    %v2953 = vrcp.pop %v2763
    %v2954 = vmul.f32 %v2763, %v2953
    %v2955 = vsub.f32 1.0, %v2954
    %v2956 = vmul.f32 %v2953, %v2955
    %v2957 = vadd.f32 %v2953, %v2956
    %vm2958 = vweird.f32 %v2763
    %vm2959 = vweird.f32 %v2953
    %vm2960 = vmor %vm2958, %vm2959
    %v2961 = vsel %vm2960, %v2953, %v2957
    %v2962 = vand.u32 2147483647, %v2763
    %vm2963 = vcmp.eq.f32.partialorder %v2962, 8.507059e+37
    %v2964 = vand.u32 %v2763, 2147483648
    %v2965 = vor.u32 1.1754944e-38, %v2964
    %v2966 = vsel %vm2963, %v2965, %v2961
    %v2967 = vmul.f32 %v2718, %v2966
    %v2968 = vrcp.pop %v2766
    %v2969 = vmul.f32 %v2766, %v2968
    %v2970 = vsub.f32 1.0, %v2969
    %v2971 = vmul.f32 %v2968, %v2970
    %v2972 = vadd.f32 %v2968, %v2971
    %vm2973 = vweird.f32 %v2766
    %vm2974 = vweird.f32 %v2968
    %vm2975 = vmor %vm2973, %vm2974
    %v2976 = vsel %vm2975, %v2968, %v2972
    %v2977 = vand.u32 2147483647, %v2766
    %vm2978 = vcmp.eq.f32.partialorder %v2977, 8.507059e+37
    %v2979 = vand.u32 %v2766, 2147483648
    %v2980 = vor.u32 1.1754944e-38, %v2979
    %v2981 = vsel %vm2978, %v2980, %v2976
    %v2982 = vmul.f32 %v2720, %v2981
    %v2983 = vrcp.pop %v2769
    %v2984 = vmul.f32 %v2769, %v2983
    %v2985 = vsub.f32 1.0, %v2984
    %v2986 = vmul.f32 %v2983, %v2985
    %v2987 = vadd.f32 %v2983, %v2986
    %vm2988 = vweird.f32 %v2769
    %vm2989 = vweird.f32 %v2983
    %vm2990 = vmor %vm2988, %vm2989
    %v2991 = vsel %vm2990, %v2983, %v2987
    %v2992 = vand.u32 2147483647, %v2769
    %vm2993 = vcmp.eq.f32.partialorder %v2992, 8.507059e+37
    %v2994 = vand.u32 %v2769, 2147483648
    %v2995 = vor.u32 1.1754944e-38, %v2994
    %v2996 = vsel %vm2993, %v2995, %v2991
    %v2997 = vmul.f32 %v2722, %v2996
    %v2998 = vrcp.pop %v2772
    %v2999 = vmul.f32 %v2772, %v2998
    %v3000 = vsub.f32 1.0, %v2999
    %v3001 = vmul.f32 %v2998, %v3000
    %v3002 = vadd.f32 %v2998, %v3001
    %vm3003 = vweird.f32 %v2772
    %vm3004 = vweird.f32 %v2998
    %vm3005 = vmor %vm3003, %vm3004
    %v3006 = vsel %vm3005, %v2998, %v3002
    %v3007 = vand.u32 2147483647, %v2772
    %vm3008 = vcmp.eq.f32.partialorder %v3007, 8.507059e+37
    %v3009 = vand.u32 %v2772, 2147483648
    %v3010 = vor.u32 1.1754944e-38, %v3009
    %v3011 = vsel %vm3008, %v3010, %v3006
    %v3012 = vmul.f32 %v2724, %v3011
    %3013 = vrot.lane.b32.xlu0 %v131, 48
    %v3014 = vpop.permute.xlu0 %3013
    %3015 = vrot.lane.b32.xlu0 %v134, 48
    %v3016 = vpop.permute.xlu0 %3015
    %v3020 = vsel %vm515, %v2787, 0
    %v3023 = vsel %vm515, %v2802, 0
    %3025 = vmatpush.msra.mxu0 0.0
    %3026 = vmatpush.msra.mxu0 0.0
    %3027 = vmatpush.msra.mxu0 0.0
    %3028 = vmatpush.msra.mxu0 0.0
    %3029 = vmatpush.msra.mxu0 0.0
    %3030 = vmatpush.msra.mxu0 0.0
    %3031 = vmatpush.msra.mxu0 0.0
    %3032 = vmatpush.msra.mxu0 0.0
    %3033 = vmatpush.msra.mxu0 0.0
    %3034 = vmatpush.msra.mxu0 0.0
    %3035 = vmatpush.msra.mxu0 0.0
    %3036 = vmatpush.msra.mxu0 0.0
    %3037 = vmatpush.msra.mxu0 0.0
    %3038 = vmatpush.msra.mxu0 0.0
    %3039 = vmatpush.msra.mxu0 %v3016
    %3040 = vmatpush.msra.mxu0 %v3014
    %3041 = vmatmul.f32.gmra.mxu0 %v3020
    %v3042 = vpop.f32.mrf.mxu0
    %v3043 = vadd.f32 0.0, %v3042
    %3044 = vmatmul.f32.gmra.mxu0 %v3023
    %v3045 = vpop.f32.mrf.mxu0
    %v3046 = vadd.f32 0.0, %v3045
    %3047 = vdwg.mxu0
    %3048 = vrot.lane.b32.xlu0 %v137, 48
    %v3049 = vpop.permute.xlu0 %3048
    %3050 = vrot.lane.b32.xlu0 %v140, 48
    %v3051 = vpop.permute.xlu0 %3050
    %v3055 = vsel %vm515, %v2817, 0
    %v3058 = vsel %vm515, %v2832, 0
    %3060 = vmatpush.msra.mxu0 0.0
    %3061 = vmatpush.msra.mxu0 0.0
    %3062 = vmatpush.msra.mxu0 0.0
    %3063 = vmatpush.msra.mxu0 0.0
    %3064 = vmatpush.msra.mxu0 0.0
    %3065 = vmatpush.msra.mxu0 0.0
    %3066 = vmatpush.msra.mxu0 0.0
    %3067 = vmatpush.msra.mxu0 0.0
    %3068 = vmatpush.msra.mxu0 0.0
    %3069 = vmatpush.msra.mxu0 0.0
    %3070 = vmatpush.msra.mxu0 0.0
    %3071 = vmatpush.msra.mxu0 0.0
    %3072 = vmatpush.msra.mxu0 0.0
    %3073 = vmatpush.msra.mxu0 0.0
    %3074 = vmatpush.msra.mxu0 %v3051
    %3075 = vmatpush.msra.mxu0 %v3049
    %3076 = vmatmul.f32.gmra.mxu0 %v3055
    %v3077 = vpop.f32.mrf.mxu0
    %v3078 = vadd.f32 0.0, %v3077
    %3079 = vmatmul.f32.gmra.mxu0 %v3058
    %v3080 = vpop.f32.mrf.mxu0
    %v3081 = vadd.f32 0.0, %v3080
    %3082 = vdwg.mxu0
    %3083 = vrot.lane.b32.xlu0 %v143, 48
    %v3084 = vpop.permute.xlu0 %3083
    %3085 = vrot.lane.b32.xlu0 %v146, 48
    %v3086 = vpop.permute.xlu0 %3085
    %v3090 = vsel %vm515, %v2847, 0
    %v3093 = vsel %vm515, %v2862, 0
    %3095 = vmatpush.msra.mxu0 0.0
    %3096 = vmatpush.msra.mxu0 0.0
    %3097 = vmatpush.msra.mxu0 0.0
    %3098 = vmatpush.msra.mxu0 0.0
    %3099 = vmatpush.msra.mxu0 0.0
    %3100 = vmatpush.msra.mxu0 0.0
    %3101 = vmatpush.msra.mxu0 0.0
    %3102 = vmatpush.msra.mxu0 0.0
    %3103 = vmatpush.msra.mxu0 0.0
    %3104 = vmatpush.msra.mxu0 0.0
    %3105 = vmatpush.msra.mxu0 0.0
    %3106 = vmatpush.msra.mxu0 0.0
    %3107 = vmatpush.msra.mxu0 0.0
    %3108 = vmatpush.msra.mxu0 0.0
    %3109 = vmatpush.msra.mxu0 %v3086
    %3110 = vmatpush.msra.mxu0 %v3084
    %3111 = vmatmul.f32.gmra.mxu0 %v3090
    %v3112 = vpop.f32.mrf.mxu0
    %v3113 = vadd.f32 0.0, %v3112
    %3114 = vmatmul.f32.gmra.mxu0 %v3093
    %v3115 = vpop.f32.mrf.mxu0
    %v3116 = vadd.f32 0.0, %v3115
    %3117 = vdwg.mxu0
    %3118 = vrot.lane.b32.xlu0 %v149, 48
    %v3119 = vpop.permute.xlu0 %3118
    %3120 = vrot.lane.b32.xlu0 %v152, 48
    %v3121 = vpop.permute.xlu0 %3120
    %v3125 = vsel %vm515, %v2877, 0
    %v3128 = vsel %vm515, %v2892, 0
    %3130 = vmatpush.msra.mxu0 0.0
    %3131 = vmatpush.msra.mxu0 0.0
    %3132 = vmatpush.msra.mxu0 0.0
    %3133 = vmatpush.msra.mxu0 0.0
    %3134 = vmatpush.msra.mxu0 0.0
    %3135 = vmatpush.msra.mxu0 0.0
    %3136 = vmatpush.msra.mxu0 0.0
    %3137 = vmatpush.msra.mxu0 0.0
    %3138 = vmatpush.msra.mxu0 0.0
    %3139 = vmatpush.msra.mxu0 0.0
    %3140 = vmatpush.msra.mxu0 0.0
    %3141 = vmatpush.msra.mxu0 0.0
    %3142 = vmatpush.msra.mxu0 0.0
    %3143 = vmatpush.msra.mxu0 0.0
    %3144 = vmatpush.msra.mxu0 %v3121
    %3145 = vmatpush.msra.mxu0 %v3119
    %3146 = vmatmul.f32.gmra.mxu0 %v3125
    %v3147 = vpop.f32.mrf.mxu0
    %v3148 = vadd.f32 0.0, %v3147
    %3149 = vmatmul.f32.gmra.mxu0 %v3128
    %v3150 = vpop.f32.mrf.mxu0
    %v3151 = vadd.f32 0.0, %v3150
    %3152 = vdwg.mxu0
    %3153 = vrot.lane.b32.xlu0 %v155, 48
    %v3154 = vpop.permute.xlu0 %3153
    %3155 = vrot.lane.b32.xlu0 %v158, 48
    %v3156 = vpop.permute.xlu0 %3155
    %v3160 = vsel %vm515, %v2907, 0
    %v3163 = vsel %vm515, %v2922, 0
    %3165 = vmatpush.msra.mxu0 0.0
    %3166 = vmatpush.msra.mxu0 0.0
    %3167 = vmatpush.msra.mxu0 0.0
    %3168 = vmatpush.msra.mxu0 0.0
    %3169 = vmatpush.msra.mxu0 0.0
    %3170 = vmatpush.msra.mxu0 0.0
    %3171 = vmatpush.msra.mxu0 0.0
    %3172 = vmatpush.msra.mxu0 0.0
    %3173 = vmatpush.msra.mxu0 0.0
    %3174 = vmatpush.msra.mxu0 0.0
    %3175 = vmatpush.msra.mxu0 0.0
    %3176 = vmatpush.msra.mxu0 0.0
    %3177 = vmatpush.msra.mxu0 0.0
    %3178 = vmatpush.msra.mxu0 0.0
    %3179 = vmatpush.msra.mxu0 %v3156
    %3180 = vmatpush.msra.mxu0 %v3154
    %3181 = vmatmul.f32.gmra.mxu0 %v3160
    %v3182 = vpop.f32.mrf.mxu0
    %v3183 = vadd.f32 0.0, %v3182
    %3184 = vmatmul.f32.gmra.mxu0 %v3163
    %v3185 = vpop.f32.mrf.mxu0
    %v3186 = vadd.f32 0.0, %v3185
    %3187 = vdwg.mxu0
    %3188 = vrot.lane.b32.xlu0 %v161, 48
    %v3189 = vpop.permute.xlu0 %3188
    %3190 = vrot.lane.b32.xlu0 %v164, 48
    %v3191 = vpop.permute.xlu0 %3190
    %v3195 = vsel %vm515, %v2937, 0
    %v3198 = vsel %vm515, %v2952, 0
    %3200 = vmatpush.msra.mxu0 0.0
    %3201 = vmatpush.msra.mxu0 0.0
    %3202 = vmatpush.msra.mxu0 0.0
    %3203 = vmatpush.msra.mxu0 0.0
    %3204 = vmatpush.msra.mxu0 0.0
    %3205 = vmatpush.msra.mxu0 0.0
    %3206 = vmatpush.msra.mxu0 0.0
    %3207 = vmatpush.msra.mxu0 0.0
    %3208 = vmatpush.msra.mxu0 0.0
    %3209 = vmatpush.msra.mxu0 0.0
    %3210 = vmatpush.msra.mxu0 0.0
    %3211 = vmatpush.msra.mxu0 0.0
    %3212 = vmatpush.msra.mxu0 0.0
    %3213 = vmatpush.msra.mxu0 0.0
    %3214 = vmatpush.msra.mxu0 %v3191
    %3215 = vmatpush.msra.mxu0 %v3189
    %3216 = vmatmul.f32.gmra.mxu0 %v3195
    %v3217 = vpop.f32.mrf.mxu0
    %v3218 = vadd.f32 0.0, %v3217
    %3219 = vmatmul.f32.gmra.mxu0 %v3198
    %v3220 = vpop.f32.mrf.mxu0
    %v3221 = vadd.f32 0.0, %v3220
    %3222 = vdwg.mxu0
    %3223 = vrot.lane.b32.xlu0 %v167, 48
    %v3224 = vpop.permute.xlu0 %3223
    %3225 = vrot.lane.b32.xlu0 %v170, 48
    %v3226 = vpop.permute.xlu0 %3225
    %v3230 = vsel %vm515, %v2967, 0
    %v3233 = vsel %vm515, %v2982, 0
    %3235 = vmatpush.msra.mxu0 0.0
    %3236 = vmatpush.msra.mxu0 0.0
    %3237 = vmatpush.msra.mxu0 0.0
    %3238 = vmatpush.msra.mxu0 0.0
    %3239 = vmatpush.msra.mxu0 0.0
    %3240 = vmatpush.msra.mxu0 0.0
    %3241 = vmatpush.msra.mxu0 0.0
    %3242 = vmatpush.msra.mxu0 0.0
    %3243 = vmatpush.msra.mxu0 0.0
    %3244 = vmatpush.msra.mxu0 0.0
    %3245 = vmatpush.msra.mxu0 0.0
    %3246 = vmatpush.msra.mxu0 0.0
    %3247 = vmatpush.msra.mxu0 0.0
    %3248 = vmatpush.msra.mxu0 0.0
    %3249 = vmatpush.msra.mxu0 %v3226
    %3250 = vmatpush.msra.mxu0 %v3224
    %3251 = vmatmul.f32.gmra.mxu0 %v3230
    %v3252 = vpop.f32.mrf.mxu0
    %v3253 = vadd.f32 0.0, %v3252
    %3254 = vmatmul.f32.gmra.mxu0 %v3233
    %v3255 = vpop.f32.mrf.mxu0
    %v3256 = vadd.f32 0.0, %v3255
    %3257 = vdwg.mxu0
    %3258 = vrot.lane.b32.xlu0 %v173, 48
    %v3259 = vpop.permute.xlu0 %3258
    %3260 = vrot.lane.b32.xlu0 %v176, 48
    %v3261 = vpop.permute.xlu0 %3260
    %v3265 = vsel %vm515, %v2997, 0
    %v3268 = vsel %vm515, %v3012, 0
    %3270 = vmatpush.msra.mxu0 0.0
    %3271 = vmatpush.msra.mxu0 0.0
    %3272 = vmatpush.msra.mxu0 0.0
    %3273 = vmatpush.msra.mxu0 0.0
    %3274 = vmatpush.msra.mxu0 0.0
    %3275 = vmatpush.msra.mxu0 0.0
    %3276 = vmatpush.msra.mxu0 0.0
    %3277 = vmatpush.msra.mxu0 0.0
    %3278 = vmatpush.msra.mxu0 0.0
    %3279 = vmatpush.msra.mxu0 0.0
    %3280 = vmatpush.msra.mxu0 0.0
    %3281 = vmatpush.msra.mxu0 0.0
    %3282 = vmatpush.msra.mxu0 0.0
    %3283 = vmatpush.msra.mxu0 0.0
    %3284 = vmatpush.msra.mxu0 %v3261
    %3285 = vmatpush.msra.mxu0 %v3259
    %3286 = vmatmul.f32.gmra.mxu0 %v3265
    %v3287 = vpop.f32.mrf.mxu0
    %v3288 = vadd.f32 0.0, %v3287
    %3289 = vmatmul.f32.gmra.mxu0 %v3268
    %v3290 = vpop.f32.mrf.mxu0
    %v3291 = vadd.f32 0.0, %v3290
    %3292 = vdwg.mxu0
    %3309 = vrot.lane.b32.xlu0 %v3043, 16
    %v3310 = vpop.permute.xlu0 %3309
    %3311 = vrot.lane.b32.xlu0 %v3046, 16
    %v3312 = vpop.permute.xlu0 %3311
    %3313 = vrot.lane.b32.xlu0 %v3078, 16
    %v3314 = vpop.permute.xlu0 %3313
    %3315 = vrot.lane.b32.xlu0 %v3081, 16
    %v3316 = vpop.permute.xlu0 %3315
    %3317 = vrot.lane.b32.xlu0 %v3113, 16
    %v3318 = vpop.permute.xlu0 %3317
    %3319 = vrot.lane.b32.xlu0 %v3116, 16
    %v3320 = vpop.permute.xlu0 %3319
    %3321 = vrot.lane.b32.xlu0 %v3148, 16
    %v3322 = vpop.permute.xlu0 %3321
    %3323 = vrot.lane.b32.xlu0 %v3151, 16
    %v3324 = vpop.permute.xlu0 %3323
    %3325 = vrot.lane.b32.xlu0 %v3183, 16
    %v3326 = vpop.permute.xlu0 %3325
    %3327 = vrot.lane.b32.xlu0 %v3186, 16
    %v3328 = vpop.permute.xlu0 %3327
    %3329 = vrot.lane.b32.xlu0 %v3218, 16
    %v3330 = vpop.permute.xlu0 %3329
    %3331 = vrot.lane.b32.xlu0 %v3221, 16
    %v3332 = vpop.permute.xlu0 %3331
    %3333 = vrot.lane.b32.xlu0 %v3253, 16
    %v3334 = vpop.permute.xlu0 %3333
    %3335 = vrot.lane.b32.xlu0 %v3256, 16
    %v3336 = vpop.permute.xlu0 %3335
    %3337 = vrot.lane.b32.xlu0 %v3288, 16
    %v3338 = vpop.permute.xlu0 %3337
    %3339 = vrot.lane.b32.xlu0 %v3291, 16
    %v3340 = vpop.permute.xlu0 %3339
    %vm3357 = vcmask 195712
    %3358 = vst.msk [vmem:[#allocation2] sm:$0xff] %vm3357, %v3310
    %3359 = vst.msk [vmem:[#allocation2 + $0x8] sm:$0xff] %vm3357, %v3312
    %3360 = vst.msk [vmem:[#allocation2 + $0x10] sm:$0xff] %vm3357, %v3314
    %3361 = vst.msk [vmem:[#allocation2 + $0x18] sm:$0xff] %vm3357, %v3316
    %3362 = vst.msk [vmem:[#allocation2 + $0x20] sm:$0xff] %vm3357, %v3318
    %3363 = vst.msk [vmem:[#allocation2 + $0x28] sm:$0xff] %vm3357, %v3320
    %3364 = vst.msk [vmem:[#allocation2 + $0x30] sm:$0xff] %vm3357, %v3322
    %3365 = vst.msk [vmem:[#allocation2 + $0x38] sm:$0xff] %vm3357, %v3324
    %3366 = vst.msk [vmem:[#allocation2 + $0x40] sm:$0xff] %vm3357, %v3326
    %3367 = vst.msk [vmem:[#allocation2 + $0x48] sm:$0xff] %vm3357, %v3328
    %3368 = vst.msk [vmem:[#allocation2 + $0x50] sm:$0xff] %vm3357, %v3330
    %3369 = vst.msk [vmem:[#allocation2 + $0x58] sm:$0xff] %vm3357, %v3332
    %3370 = vst.msk [vmem:[#allocation2 + $0x60] sm:$0xff] %vm3357, %v3334
    %3371 = vst.msk [vmem:[#allocation2 + $0x68] sm:$0xff] %vm3357, %v3336
    %3372 = vst.msk [vmem:[#allocation2 + $0x70] sm:$0xff] %vm3357, %v3338
    %3373 = vst.msk [vmem:[#allocation2 + $0x78] sm:$0xff] %vm3357, %v3340
    %3374 = vrot.lane.b32.xlu0 %v131, 104
    %v3375 = vpop.permute.xlu0 %3374
    %3376 = vrot.lane.b32.xlu0 %v134, 104
    %v3377 = vpop.permute.xlu0 %3376
    %3378 = vrot.lane.b32.xlu0 %v131, 72
    %v3379 = vpop.permute.xlu0 %3378
    %3380 = vrot.lane.b32.xlu0 %v134, 72
    %v3381 = vpop.permute.xlu0 %3380
    %v3382 = vsel %vm192, %v3375, 0
    %v3384 = vsel %vm192, %v3377, 0
    %v3386 = vsel %vm192, %v3379, 0
    %v3388 = vsel %vm192, %v3381, 0
    %3390 = vmatpush.xpose.msra.mxu0 0.0
    %3391 = vmatpush.xpose.msra.mxu0 0.0
    %3392 = vmatpush.xpose.msra.mxu0 0.0
    %3393 = vmatpush.xpose.msra.mxu0 0.0
    %3394 = vmatpush.xpose.msra.mxu0 0.0
    %3395 = vmatpush.xpose.msra.mxu0 0.0
    %3396 = vmatpush.xpose.msra.mxu0 0.0
    %3397 = vmatpush.xpose.msra.mxu0 0.0
    %3398 = vmatpush.xpose.msra.mxu0 0.0
    %3399 = vmatpush.xpose.msra.mxu0 0.0
    %3400 = vmatpush.xpose.msra.mxu0 0.0
    %3401 = vmatpush.xpose.msra.mxu0 0.0
    %3402 = vmatpush.xpose.msra.mxu0 0.0
    %3403 = vmatpush.xpose.msra.mxu0 0.0
    %3404 = vmatpush.xpose.msra.mxu0 %v3388
    %3405 = vmatpush.xpose.msra.mxu0 %v3386
    %3406 = vmatmul.f32.gmra.mxu0 %v3382
    %v3407 = vpop.f32.mrf.mxu0
    %v3408 = vadd.f32 0.0, %v3407
    %3409 = vmatmul.f32.gmra.mxu0 %v3384
    %v3410 = vpop.f32.mrf.mxu0
    %v3411 = vadd.f32 0.0, %v3410
    %3412 = vdwg.mxu0
    %3413 = vrot.lane.b32.xlu0 %v137, 104
    %v3414 = vpop.permute.xlu0 %3413
    %3415 = vrot.lane.b32.xlu0 %v140, 104
    %v3416 = vpop.permute.xlu0 %3415
    %3417 = vrot.lane.b32.xlu0 %v137, 72
    %v3418 = vpop.permute.xlu0 %3417
    %3419 = vrot.lane.b32.xlu0 %v140, 72
    %v3420 = vpop.permute.xlu0 %3419
    %v3421 = vsel %vm192, %v3414, 0
    %v3423 = vsel %vm192, %v3416, 0
    %v3425 = vsel %vm192, %v3418, 0
    %v3427 = vsel %vm192, %v3420, 0
    %3429 = vmatpush.xpose.msra.mxu0 0.0
    %3430 = vmatpush.xpose.msra.mxu0 0.0
    %3431 = vmatpush.xpose.msra.mxu0 0.0
    %3432 = vmatpush.xpose.msra.mxu0 0.0
    %3433 = vmatpush.xpose.msra.mxu0 0.0
    %3434 = vmatpush.xpose.msra.mxu0 0.0
    %3435 = vmatpush.xpose.msra.mxu0 0.0
    %3436 = vmatpush.xpose.msra.mxu0 0.0
    %3437 = vmatpush.xpose.msra.mxu0 0.0
    %3438 = vmatpush.xpose.msra.mxu0 0.0
    %3439 = vmatpush.xpose.msra.mxu0 0.0
    %3440 = vmatpush.xpose.msra.mxu0 0.0
    %3441 = vmatpush.xpose.msra.mxu0 0.0
    %3442 = vmatpush.xpose.msra.mxu0 0.0
    %3443 = vmatpush.xpose.msra.mxu0 %v3427
    %3444 = vmatpush.xpose.msra.mxu0 %v3425
    %3445 = vmatmul.f32.gmra.mxu0 %v3421
    %v3446 = vpop.f32.mrf.mxu0
    %v3447 = vadd.f32 0.0, %v3446
    %3448 = vmatmul.f32.gmra.mxu0 %v3423
    %v3449 = vpop.f32.mrf.mxu0
    %v3450 = vadd.f32 0.0, %v3449
    %3451 = vdwg.mxu0
    %3452 = vrot.lane.b32.xlu0 %v143, 104
    %v3453 = vpop.permute.xlu0 %3452
    %3454 = vrot.lane.b32.xlu0 %v146, 104
    %v3455 = vpop.permute.xlu0 %3454
    %3456 = vrot.lane.b32.xlu0 %v143, 72
    %v3457 = vpop.permute.xlu0 %3456
    %3458 = vrot.lane.b32.xlu0 %v146, 72
    %v3459 = vpop.permute.xlu0 %3458
    %v3460 = vsel %vm192, %v3453, 0
    %v3462 = vsel %vm192, %v3455, 0
    %v3464 = vsel %vm192, %v3457, 0
    %v3466 = vsel %vm192, %v3459, 0
    %3468 = vmatpush.xpose.msra.mxu0 0.0
    %3469 = vmatpush.xpose.msra.mxu0 0.0
    %3470 = vmatpush.xpose.msra.mxu0 0.0
    %3471 = vmatpush.xpose.msra.mxu0 0.0
    %3472 = vmatpush.xpose.msra.mxu0 0.0
    %3473 = vmatpush.xpose.msra.mxu0 0.0
    %3474 = vmatpush.xpose.msra.mxu0 0.0
    %3475 = vmatpush.xpose.msra.mxu0 0.0
    %3476 = vmatpush.xpose.msra.mxu0 0.0
    %3477 = vmatpush.xpose.msra.mxu0 0.0
    %3478 = vmatpush.xpose.msra.mxu0 0.0
    %3479 = vmatpush.xpose.msra.mxu0 0.0
    %3480 = vmatpush.xpose.msra.mxu0 0.0
    %3481 = vmatpush.xpose.msra.mxu0 0.0
    %3482 = vmatpush.xpose.msra.mxu0 %v3466
    %3483 = vmatpush.xpose.msra.mxu0 %v3464
    %3484 = vmatmul.f32.gmra.mxu0 %v3460
    %v3485 = vpop.f32.mrf.mxu0
    %v3486 = vadd.f32 0.0, %v3485
    %3487 = vmatmul.f32.gmra.mxu0 %v3462
    %v3488 = vpop.f32.mrf.mxu0
    %v3489 = vadd.f32 0.0, %v3488
    %3490 = vdwg.mxu0
    %3491 = vrot.lane.b32.xlu0 %v149, 104
    %v3492 = vpop.permute.xlu0 %3491
    %3493 = vrot.lane.b32.xlu0 %v152, 104
    %v3494 = vpop.permute.xlu0 %3493
    %3495 = vrot.lane.b32.xlu0 %v149, 72
    %v3496 = vpop.permute.xlu0 %3495
    %3497 = vrot.lane.b32.xlu0 %v152, 72
    %v3498 = vpop.permute.xlu0 %3497
    %v3499 = vsel %vm192, %v3492, 0
    %v3501 = vsel %vm192, %v3494, 0
    %v3503 = vsel %vm192, %v3496, 0
    %v3505 = vsel %vm192, %v3498, 0
    %3507 = vmatpush.xpose.msra.mxu0 0.0
    %3508 = vmatpush.xpose.msra.mxu0 0.0
    %3509 = vmatpush.xpose.msra.mxu0 0.0
    %3510 = vmatpush.xpose.msra.mxu0 0.0
    %3511 = vmatpush.xpose.msra.mxu0 0.0
    %3512 = vmatpush.xpose.msra.mxu0 0.0
    %3513 = vmatpush.xpose.msra.mxu0 0.0
    %3514 = vmatpush.xpose.msra.mxu0 0.0
    %3515 = vmatpush.xpose.msra.mxu0 0.0
    %3516 = vmatpush.xpose.msra.mxu0 0.0
    %3517 = vmatpush.xpose.msra.mxu0 0.0
    %3518 = vmatpush.xpose.msra.mxu0 0.0
    %3519 = vmatpush.xpose.msra.mxu0 0.0
    %3520 = vmatpush.xpose.msra.mxu0 0.0
    %3521 = vmatpush.xpose.msra.mxu0 %v3505
    %3522 = vmatpush.xpose.msra.mxu0 %v3503
    %3523 = vmatmul.f32.gmra.mxu0 %v3499
    %v3524 = vpop.f32.mrf.mxu0
    %v3525 = vadd.f32 0.0, %v3524
    %3526 = vmatmul.f32.gmra.mxu0 %v3501
    %v3527 = vpop.f32.mrf.mxu0
    %v3528 = vadd.f32 0.0, %v3527
    %3529 = vdwg.mxu0
    %3530 = vrot.lane.b32.xlu0 %v155, 104
    %v3531 = vpop.permute.xlu0 %3530
    %3532 = vrot.lane.b32.xlu0 %v158, 104
    %v3533 = vpop.permute.xlu0 %3532
    %3534 = vrot.lane.b32.xlu0 %v155, 72
    %v3535 = vpop.permute.xlu0 %3534
    %3536 = vrot.lane.b32.xlu0 %v158, 72
    %v3537 = vpop.permute.xlu0 %3536
    %v3538 = vsel %vm192, %v3531, 0
    %v3540 = vsel %vm192, %v3533, 0
    %v3542 = vsel %vm192, %v3535, 0
    %v3544 = vsel %vm192, %v3537, 0
    %3546 = vmatpush.xpose.msra.mxu0 0.0
    %3547 = vmatpush.xpose.msra.mxu0 0.0
    %3548 = vmatpush.xpose.msra.mxu0 0.0
    %3549 = vmatpush.xpose.msra.mxu0 0.0
    %3550 = vmatpush.xpose.msra.mxu0 0.0
    %3551 = vmatpush.xpose.msra.mxu0 0.0
    %3552 = vmatpush.xpose.msra.mxu0 0.0
    %3553 = vmatpush.xpose.msra.mxu0 0.0
    %3554 = vmatpush.xpose.msra.mxu0 0.0
    %3555 = vmatpush.xpose.msra.mxu0 0.0
    %3556 = vmatpush.xpose.msra.mxu0 0.0
    %3557 = vmatpush.xpose.msra.mxu0 0.0
    %3558 = vmatpush.xpose.msra.mxu0 0.0
    %3559 = vmatpush.xpose.msra.mxu0 0.0
    %3560 = vmatpush.xpose.msra.mxu0 %v3544
    %3561 = vmatpush.xpose.msra.mxu0 %v3542
    %3562 = vmatmul.f32.gmra.mxu0 %v3538
    %v3563 = vpop.f32.mrf.mxu0
    %v3564 = vadd.f32 0.0, %v3563
    %3565 = vmatmul.f32.gmra.mxu0 %v3540
    %v3566 = vpop.f32.mrf.mxu0
    %v3567 = vadd.f32 0.0, %v3566
    %3568 = vdwg.mxu0
    %3569 = vrot.lane.b32.xlu0 %v161, 104
    %v3570 = vpop.permute.xlu0 %3569
    %3571 = vrot.lane.b32.xlu0 %v164, 104
    %v3572 = vpop.permute.xlu0 %3571
    %3573 = vrot.lane.b32.xlu0 %v161, 72
    %v3574 = vpop.permute.xlu0 %3573
    %3575 = vrot.lane.b32.xlu0 %v164, 72
    %v3576 = vpop.permute.xlu0 %3575
    %v3577 = vsel %vm192, %v3570, 0
    %v3579 = vsel %vm192, %v3572, 0
    %v3581 = vsel %vm192, %v3574, 0
    %v3583 = vsel %vm192, %v3576, 0
    %3585 = vmatpush.xpose.msra.mxu0 0.0
    %3586 = vmatpush.xpose.msra.mxu0 0.0
    %3587 = vmatpush.xpose.msra.mxu0 0.0
    %3588 = vmatpush.xpose.msra.mxu0 0.0
    %3589 = vmatpush.xpose.msra.mxu0 0.0
    %3590 = vmatpush.xpose.msra.mxu0 0.0
    %3591 = vmatpush.xpose.msra.mxu0 0.0
    %3592 = vmatpush.xpose.msra.mxu0 0.0
    %3593 = vmatpush.xpose.msra.mxu0 0.0
    %3594 = vmatpush.xpose.msra.mxu0 0.0
    %3595 = vmatpush.xpose.msra.mxu0 0.0
    %3596 = vmatpush.xpose.msra.mxu0 0.0
    %3597 = vmatpush.xpose.msra.mxu0 0.0
    %3598 = vmatpush.xpose.msra.mxu0 0.0
    %3599 = vmatpush.xpose.msra.mxu0 %v3583
    %3600 = vmatpush.xpose.msra.mxu0 %v3581
    %3601 = vmatmul.f32.gmra.mxu0 %v3577
    %v3602 = vpop.f32.mrf.mxu0
    %v3603 = vadd.f32 0.0, %v3602
    %3604 = vmatmul.f32.gmra.mxu0 %v3579
    %v3605 = vpop.f32.mrf.mxu0
    %v3606 = vadd.f32 0.0, %v3605
    %3607 = vdwg.mxu0
    %3608 = vrot.lane.b32.xlu0 %v167, 104
    %v3609 = vpop.permute.xlu0 %3608
    %3610 = vrot.lane.b32.xlu0 %v170, 104
    %v3611 = vpop.permute.xlu0 %3610
    %3612 = vrot.lane.b32.xlu0 %v167, 72
    %v3613 = vpop.permute.xlu0 %3612
    %3614 = vrot.lane.b32.xlu0 %v170, 72
    %v3615 = vpop.permute.xlu0 %3614
    %v3616 = vsel %vm192, %v3609, 0
    %v3618 = vsel %vm192, %v3611, 0
    %v3620 = vsel %vm192, %v3613, 0
    %v3622 = vsel %vm192, %v3615, 0
    %3624 = vmatpush.xpose.msra.mxu0 0.0
    %3625 = vmatpush.xpose.msra.mxu0 0.0
    %3626 = vmatpush.xpose.msra.mxu0 0.0
    %3627 = vmatpush.xpose.msra.mxu0 0.0
    %3628 = vmatpush.xpose.msra.mxu0 0.0
    %3629 = vmatpush.xpose.msra.mxu0 0.0
    %3630 = vmatpush.xpose.msra.mxu0 0.0
    %3631 = vmatpush.xpose.msra.mxu0 0.0
    %3632 = vmatpush.xpose.msra.mxu0 0.0
    %3633 = vmatpush.xpose.msra.mxu0 0.0
    %3634 = vmatpush.xpose.msra.mxu0 0.0
    %3635 = vmatpush.xpose.msra.mxu0 0.0
    %3636 = vmatpush.xpose.msra.mxu0 0.0
    %3637 = vmatpush.xpose.msra.mxu0 0.0
    %3638 = vmatpush.xpose.msra.mxu0 %v3622
    %3639 = vmatpush.xpose.msra.mxu0 %v3620
    %3640 = vmatmul.f32.gmra.mxu0 %v3616
    %v3641 = vpop.f32.mrf.mxu0
    %v3642 = vadd.f32 0.0, %v3641
    %3643 = vmatmul.f32.gmra.mxu0 %v3618
    %v3644 = vpop.f32.mrf.mxu0
    %v3645 = vadd.f32 0.0, %v3644
    %3646 = vdwg.mxu0
    %3647 = vrot.lane.b32.xlu0 %v173, 104
    %v3648 = vpop.permute.xlu0 %3647
    %3649 = vrot.lane.b32.xlu0 %v176, 104
    %v3650 = vpop.permute.xlu0 %3649
    %3651 = vrot.lane.b32.xlu0 %v173, 72
    %v3652 = vpop.permute.xlu0 %3651
    %3653 = vrot.lane.b32.xlu0 %v176, 72
    %v3654 = vpop.permute.xlu0 %3653
    %v3655 = vsel %vm192, %v3648, 0
    %v3657 = vsel %vm192, %v3650, 0
    %v3659 = vsel %vm192, %v3652, 0
    %v3661 = vsel %vm192, %v3654, 0
    %3663 = vmatpush.xpose.msra.mxu0 0.0
    %3664 = vmatpush.xpose.msra.mxu0 0.0
    %3665 = vmatpush.xpose.msra.mxu0 0.0
    %3666 = vmatpush.xpose.msra.mxu0 0.0
    %3667 = vmatpush.xpose.msra.mxu0 0.0
    %3668 = vmatpush.xpose.msra.mxu0 0.0
    %3669 = vmatpush.xpose.msra.mxu0 0.0
    %3670 = vmatpush.xpose.msra.mxu0 0.0
    %3671 = vmatpush.xpose.msra.mxu0 0.0
    %3672 = vmatpush.xpose.msra.mxu0 0.0
    %3673 = vmatpush.xpose.msra.mxu0 0.0
    %3674 = vmatpush.xpose.msra.mxu0 0.0
    %3675 = vmatpush.xpose.msra.mxu0 0.0
    %3676 = vmatpush.xpose.msra.mxu0 0.0
    %3677 = vmatpush.xpose.msra.mxu0 %v3661
    %3678 = vmatpush.xpose.msra.mxu0 %v3659
    %3679 = vmatmul.f32.gmra.mxu0 %v3655
    %v3680 = vpop.f32.mrf.mxu0
    %v3681 = vadd.f32 0.0, %v3680
    %3682 = vmatmul.f32.gmra.mxu0 %v3657
    %v3683 = vpop.f32.mrf.mxu0
    %v3684 = vadd.f32 0.0, %v3683
    %3685 = vdwg.mxu0
    %v3686 = vmul.f32 %v3408, 0.35355338
    %v3687 = vmul.f32 %v3411, 0.35355338
    %v3688 = vmul.f32 %v3447, 0.35355338
    %v3689 = vmul.f32 %v3450, 0.35355338
    %v3690 = vmul.f32 %v3486, 0.35355338
    %v3691 = vmul.f32 %v3489, 0.35355338
    %v3692 = vmul.f32 %v3525, 0.35355338
    %v3693 = vmul.f32 %v3528, 0.35355338
    %v3694 = vmul.f32 %v3564, 0.35355338
    %v3695 = vmul.f32 %v3567, 0.35355338
    %v3696 = vmul.f32 %v3603, 0.35355338
    %v3697 = vmul.f32 %v3606, 0.35355338
    %v3698 = vmul.f32 %v3642, 0.35355338
    %v3699 = vmul.f32 %v3645, 0.35355338
    %v3700 = vmul.f32 %v3681, 0.35355338
    %v3701 = vmul.f32 %v3684, 0.35355338
    %v3702 = vadd.f32 %v3686, %v184
    %v3703 = vadd.f32 %v3687, %v185
    %v3704 = vadd.f32 %v3688, %v184
    %v3705 = vadd.f32 %v3689, %v185
    %v3706 = vadd.f32 %v3690, %v184
    %v3707 = vadd.f32 %v3691, %v185
    %v3708 = vadd.f32 %v3692, %v184
    %v3709 = vadd.f32 %v3693, %v185
    %v3710 = vadd.f32 %v3694, %v184
    %v3711 = vadd.f32 %v3695, %v185
    %v3712 = vadd.f32 %v3696, %v184
    %v3713 = vadd.f32 %v3697, %v185
    %v3714 = vadd.f32 %v3698, %v184
    %v3715 = vadd.f32 %v3699, %v185
    %v3716 = vadd.f32 %v3700, %v184
    %v3717 = vadd.f32 %v3701, %v185
    %v3718 = vsel %vm515, %v3702, -inf
    %3719 = vmax.xlane.f32.xlu0 %v3718
    %v3720 = vpop.xlane.xlu0 %3719
    %v3721 = vsel %vm515, %v3703, -inf
    %3722 = vmax.xlane.f32.xlu0 %v3721
    %v3723 = vpop.xlane.xlu0 %3722
    %v3724 = vsel %vm515, %v3704, -inf
    %3725 = vmax.xlane.f32.xlu0 %v3724
    %v3726 = vpop.xlane.xlu0 %3725
    %v3727 = vsel %vm515, %v3705, -inf
    %3728 = vmax.xlane.f32.xlu0 %v3727
    %v3729 = vpop.xlane.xlu0 %3728
    %v3730 = vsel %vm515, %v3706, -inf
    %3731 = vmax.xlane.f32.xlu0 %v3730
    %v3732 = vpop.xlane.xlu0 %3731
    %v3733 = vsel %vm515, %v3707, -inf
    %3734 = vmax.xlane.f32.xlu0 %v3733
    %v3735 = vpop.xlane.xlu0 %3734
    %v3736 = vsel %vm515, %v3708, -inf
    %3737 = vmax.xlane.f32.xlu0 %v3736
    %v3738 = vpop.xlane.xlu0 %3737
    %v3739 = vsel %vm515, %v3709, -inf
    %3740 = vmax.xlane.f32.xlu0 %v3739
    %v3741 = vpop.xlane.xlu0 %3740
    %v3742 = vsel %vm515, %v3710, -inf
    %3743 = vmax.xlane.f32.xlu0 %v3742
    %v3744 = vpop.xlane.xlu0 %3743
    %v3745 = vsel %vm515, %v3711, -inf
    %3746 = vmax.xlane.f32.xlu0 %v3745
    %v3747 = vpop.xlane.xlu0 %3746
    %v3748 = vsel %vm515, %v3712, -inf
    %3749 = vmax.xlane.f32.xlu0 %v3748
    %v3750 = vpop.xlane.xlu0 %3749
    %v3751 = vsel %vm515, %v3713, -inf
    %3752 = vmax.xlane.f32.xlu0 %v3751
    %v3753 = vpop.xlane.xlu0 %3752
    %v3754 = vsel %vm515, %v3714, -inf
    %3755 = vmax.xlane.f32.xlu0 %v3754
    %v3756 = vpop.xlane.xlu0 %3755
    %v3757 = vsel %vm515, %v3715, -inf
    %3758 = vmax.xlane.f32.xlu0 %v3757
    %v3759 = vpop.xlane.xlu0 %3758
    %v3760 = vsel %vm515, %v3716, -inf
    %3761 = vmax.xlane.f32.xlu0 %v3760
    %v3762 = vpop.xlane.xlu0 %3761
    %v3763 = vsel %vm515, %v3717, -inf
    %3764 = vmax.xlane.f32.xlu0 %v3763
    %v3765 = vpop.xlane.xlu0 %3764
    %v3766 = vsub.f32 %v3702, %v3720
    %v3767 = vsub.f32 %v3703, %v3723
    %v3768 = vsub.f32 %v3704, %v3726
    %v3769 = vsub.f32 %v3705, %v3729
    %v3770 = vsub.f32 %v3706, %v3732
    %v3771 = vsub.f32 %v3707, %v3735
    %v3772 = vsub.f32 %v3708, %v3738
    %v3773 = vsub.f32 %v3709, %v3741
    %v3774 = vsub.f32 %v3710, %v3744
    %v3775 = vsub.f32 %v3711, %v3747
    %v3776 = vsub.f32 %v3712, %v3750
    %v3777 = vsub.f32 %v3713, %v3753
    %v3778 = vsub.f32 %v3714, %v3756
    %v3779 = vsub.f32 %v3715, %v3759
    %v3780 = vsub.f32 %v3716, %v3762
    %v3781 = vsub.f32 %v3717, %v3765
    %v3782 = vmul.f32 %v3766, 1.442695
    %v3783 = vpow.pop %v3782
    %v3784 = vmul.f32 %v3767, 1.442695
    %v3785 = vpow.pop %v3784
    %v3786 = vmul.f32 %v3768, 1.442695
    %v3787 = vpow.pop %v3786
    %v3788 = vmul.f32 %v3769, 1.442695
    %v3789 = vpow.pop %v3788
    %v3790 = vmul.f32 %v3770, 1.442695
    %v3791 = vpow.pop %v3790
    %v3792 = vmul.f32 %v3771, 1.442695
    %v3793 = vpow.pop %v3792
    %v3794 = vmul.f32 %v3772, 1.442695
    %v3795 = vpow.pop %v3794
    %v3796 = vmul.f32 %v3773, 1.442695
    %v3797 = vpow.pop %v3796
    %v3798 = vmul.f32 %v3774, 1.442695
    %v3799 = vpow.pop %v3798
    %v3800 = vmul.f32 %v3775, 1.442695
    %v3801 = vpow.pop %v3800
    %v3802 = vmul.f32 %v3776, 1.442695
    %v3803 = vpow.pop %v3802
    %v3804 = vmul.f32 %v3777, 1.442695
    %v3805 = vpow.pop %v3804
    %v3806 = vmul.f32 %v3778, 1.442695
    %v3807 = vpow.pop %v3806
    %v3808 = vmul.f32 %v3779, 1.442695
    %v3809 = vpow.pop %v3808
    %v3810 = vmul.f32 %v3780, 1.442695
    %v3811 = vpow.pop %v3810
    %v3812 = vmul.f32 %v3781, 1.442695
    %v3813 = vpow.pop %v3812
    %v3814 = vsel %vm515, %v3783, 0.0
    %3815 = vadd.xlane.f32.xlu0 %v3814
    %v3816 = vpop.xlane.xlu0 %3815
    %v3817 = vsel %vm515, %v3785, 0.0
    %3818 = vadd.xlane.f32.xlu0 %v3817
    %v3819 = vpop.xlane.xlu0 %3818
    %v3820 = vsel %vm515, %v3787, 0.0
    %3821 = vadd.xlane.f32.xlu0 %v3820
    %v3822 = vpop.xlane.xlu0 %3821
    %v3823 = vsel %vm515, %v3789, 0.0
    %3824 = vadd.xlane.f32.xlu0 %v3823
    %v3825 = vpop.xlane.xlu0 %3824
    %v3826 = vsel %vm515, %v3791, 0.0
    %3827 = vadd.xlane.f32.xlu0 %v3826
    %v3828 = vpop.xlane.xlu0 %3827
    %v3829 = vsel %vm515, %v3793, 0.0
    %3830 = vadd.xlane.f32.xlu0 %v3829
    %v3831 = vpop.xlane.xlu0 %3830
    %v3832 = vsel %vm515, %v3795, 0.0
    %3833 = vadd.xlane.f32.xlu0 %v3832
    %v3834 = vpop.xlane.xlu0 %3833
    %v3835 = vsel %vm515, %v3797, 0.0
    %3836 = vadd.xlane.f32.xlu0 %v3835
    %v3837 = vpop.xlane.xlu0 %3836
    %v3838 = vsel %vm515, %v3799, 0.0
    %3839 = vadd.xlane.f32.xlu0 %v3838
    %v3840 = vpop.xlane.xlu0 %3839
    %v3841 = vsel %vm515, %v3801, 0.0
    %3842 = vadd.xlane.f32.xlu0 %v3841
    %v3843 = vpop.xlane.xlu0 %3842
    %v3844 = vsel %vm515, %v3803, 0.0
    %3845 = vadd.xlane.f32.xlu0 %v3844
    %v3846 = vpop.xlane.xlu0 %3845
    %v3847 = vsel %vm515, %v3805, 0.0
    %3848 = vadd.xlane.f32.xlu0 %v3847
    %v3849 = vpop.xlane.xlu0 %3848
    %v3850 = vsel %vm515, %v3807, 0.0
    %3851 = vadd.xlane.f32.xlu0 %v3850
    %v3852 = vpop.xlane.xlu0 %3851
    %v3853 = vsel %vm515, %v3809, 0.0
    %3854 = vadd.xlane.f32.xlu0 %v3853
    %v3855 = vpop.xlane.xlu0 %3854
    %v3856 = vsel %vm515, %v3811, 0.0
    %3857 = vadd.xlane.f32.xlu0 %v3856
    %v3858 = vpop.xlane.xlu0 %3857
    %v3859 = vsel %vm515, %v3813, 0.0
    %3860 = vadd.xlane.f32.xlu0 %v3859
    %v3861 = vpop.xlane.xlu0 %3860
    %v3862 = vrcp.pop %v3816
    %v3863 = vmul.f32 %v3816, %v3862
    %v3864 = vsub.f32 1.0, %v3863
    %v3865 = vmul.f32 %v3862, %v3864
    %v3866 = vadd.f32 %v3862, %v3865
    %vm3867 = vweird.f32 %v3816
    %vm3868 = vweird.f32 %v3862
    %vm3869 = vmor %vm3867, %vm3868
    %v3870 = vsel %vm3869, %v3862, %v3866
    %v3871 = vand.u32 2147483647, %v3816
    %vm3872 = vcmp.eq.f32.partialorder %v3871, 8.507059e+37
    %v3873 = vand.u32 %v3816, 2147483648
    %v3874 = vor.u32 1.1754944e-38, %v3873
    %v3875 = vsel %vm3872, %v3874, %v3870
    %v3876 = vmul.f32 %v3783, %v3875
    %v3877 = vrcp.pop %v3819
    %v3878 = vmul.f32 %v3819, %v3877
    %v3879 = vsub.f32 1.0, %v3878
    %v3880 = vmul.f32 %v3877, %v3879
    %v3881 = vadd.f32 %v3877, %v3880
    %vm3882 = vweird.f32 %v3819
    %vm3883 = vweird.f32 %v3877
    %vm3884 = vmor %vm3882, %vm3883
    %v3885 = vsel %vm3884, %v3877, %v3881
    %v3886 = vand.u32 2147483647, %v3819
    %vm3887 = vcmp.eq.f32.partialorder %v3886, 8.507059e+37
    %v3888 = vand.u32 %v3819, 2147483648
    %v3889 = vor.u32 1.1754944e-38, %v3888
    %v3890 = vsel %vm3887, %v3889, %v3885
    %v3891 = vmul.f32 %v3785, %v3890
    %v3892 = vrcp.pop %v3822
    %v3893 = vmul.f32 %v3822, %v3892
    %v3894 = vsub.f32 1.0, %v3893
    %v3895 = vmul.f32 %v3892, %v3894
    %v3896 = vadd.f32 %v3892, %v3895
    %vm3897 = vweird.f32 %v3822
    %vm3898 = vweird.f32 %v3892
    %vm3899 = vmor %vm3897, %vm3898
    %v3900 = vsel %vm3899, %v3892, %v3896
    %v3901 = vand.u32 2147483647, %v3822
    %vm3902 = vcmp.eq.f32.partialorder %v3901, 8.507059e+37
    %v3903 = vand.u32 %v3822, 2147483648
    %v3904 = vor.u32 1.1754944e-38, %v3903
    %v3905 = vsel %vm3902, %v3904, %v3900
    %v3906 = vmul.f32 %v3787, %v3905
    %v3907 = vrcp.pop %v3825
    %v3908 = vmul.f32 %v3825, %v3907
    %v3909 = vsub.f32 1.0, %v3908
    %v3910 = vmul.f32 %v3907, %v3909
    %v3911 = vadd.f32 %v3907, %v3910
    %vm3912 = vweird.f32 %v3825
    %vm3913 = vweird.f32 %v3907
    %vm3914 = vmor %vm3912, %vm3913
    %v3915 = vsel %vm3914, %v3907, %v3911
    %v3916 = vand.u32 2147483647, %v3825
    %vm3917 = vcmp.eq.f32.partialorder %v3916, 8.507059e+37
    %v3918 = vand.u32 %v3825, 2147483648
    %v3919 = vor.u32 1.1754944e-38, %v3918
    %v3920 = vsel %vm3917, %v3919, %v3915
    %v3921 = vmul.f32 %v3789, %v3920
    %v3922 = vrcp.pop %v3828
    %v3923 = vmul.f32 %v3828, %v3922
    %v3924 = vsub.f32 1.0, %v3923
    %v3925 = vmul.f32 %v3922, %v3924
    %v3926 = vadd.f32 %v3922, %v3925
    %vm3927 = vweird.f32 %v3828
    %vm3928 = vweird.f32 %v3922
    %vm3929 = vmor %vm3927, %vm3928
    %v3930 = vsel %vm3929, %v3922, %v3926
    %v3931 = vand.u32 2147483647, %v3828
    %vm3932 = vcmp.eq.f32.partialorder %v3931, 8.507059e+37
    %v3933 = vand.u32 %v3828, 2147483648
    %v3934 = vor.u32 1.1754944e-38, %v3933
    %v3935 = vsel %vm3932, %v3934, %v3930
    %v3936 = vmul.f32 %v3791, %v3935
    %v3937 = vrcp.pop %v3831
    %v3938 = vmul.f32 %v3831, %v3937
    %v3939 = vsub.f32 1.0, %v3938
    %v3940 = vmul.f32 %v3937, %v3939
    %v3941 = vadd.f32 %v3937, %v3940
    %vm3942 = vweird.f32 %v3831
    %vm3943 = vweird.f32 %v3937
    %vm3944 = vmor %vm3942, %vm3943
    %v3945 = vsel %vm3944, %v3937, %v3941
    %v3946 = vand.u32 2147483647, %v3831
    %vm3947 = vcmp.eq.f32.partialorder %v3946, 8.507059e+37
    %v3948 = vand.u32 %v3831, 2147483648
    %v3949 = vor.u32 1.1754944e-38, %v3948
    %v3950 = vsel %vm3947, %v3949, %v3945
    %v3951 = vmul.f32 %v3793, %v3950
    %v3952 = vrcp.pop %v3834
    %v3953 = vmul.f32 %v3834, %v3952
    %v3954 = vsub.f32 1.0, %v3953
    %v3955 = vmul.f32 %v3952, %v3954
    %v3956 = vadd.f32 %v3952, %v3955
    %vm3957 = vweird.f32 %v3834
    %vm3958 = vweird.f32 %v3952
    %vm3959 = vmor %vm3957, %vm3958
    %v3960 = vsel %vm3959, %v3952, %v3956
    %v3961 = vand.u32 2147483647, %v3834
    %vm3962 = vcmp.eq.f32.partialorder %v3961, 8.507059e+37
    %v3963 = vand.u32 %v3834, 2147483648
    %v3964 = vor.u32 1.1754944e-38, %v3963
    %v3965 = vsel %vm3962, %v3964, %v3960
    %v3966 = vmul.f32 %v3795, %v3965
    %v3967 = vrcp.pop %v3837
    %v3968 = vmul.f32 %v3837, %v3967
    %v3969 = vsub.f32 1.0, %v3968
    %v3970 = vmul.f32 %v3967, %v3969
    %v3971 = vadd.f32 %v3967, %v3970
    %vm3972 = vweird.f32 %v3837
    %vm3973 = vweird.f32 %v3967
    %vm3974 = vmor %vm3972, %vm3973
    %v3975 = vsel %vm3974, %v3967, %v3971
    %v3976 = vand.u32 2147483647, %v3837
    %vm3977 = vcmp.eq.f32.partialorder %v3976, 8.507059e+37
    %v3978 = vand.u32 %v3837, 2147483648
    %v3979 = vor.u32 1.1754944e-38, %v3978
    %v3980 = vsel %vm3977, %v3979, %v3975
    %v3981 = vmul.f32 %v3797, %v3980
    %v3982 = vrcp.pop %v3840
    %v3983 = vmul.f32 %v3840, %v3982
    %v3984 = vsub.f32 1.0, %v3983
    %v3985 = vmul.f32 %v3982, %v3984
    %v3986 = vadd.f32 %v3982, %v3985
    %vm3987 = vweird.f32 %v3840
    %vm3988 = vweird.f32 %v3982
    %vm3989 = vmor %vm3987, %vm3988
    %v3990 = vsel %vm3989, %v3982, %v3986
    %v3991 = vand.u32 2147483647, %v3840
    %vm3992 = vcmp.eq.f32.partialorder %v3991, 8.507059e+37
    %v3993 = vand.u32 %v3840, 2147483648
    %v3994 = vor.u32 1.1754944e-38, %v3993
    %v3995 = vsel %vm3992, %v3994, %v3990
    %v3996 = vmul.f32 %v3799, %v3995
    %v3997 = vrcp.pop %v3843
    %v3998 = vmul.f32 %v3843, %v3997
    %v3999 = vsub.f32 1.0, %v3998
    %v4000 = vmul.f32 %v3997, %v3999
    %v4001 = vadd.f32 %v3997, %v4000
    %vm4002 = vweird.f32 %v3843
    %vm4003 = vweird.f32 %v3997
    %vm4004 = vmor %vm4002, %vm4003
    %v4005 = vsel %vm4004, %v3997, %v4001
    %v4006 = vand.u32 2147483647, %v3843
    %vm4007 = vcmp.eq.f32.partialorder %v4006, 8.507059e+37
    %v4008 = vand.u32 %v3843, 2147483648
    %v4009 = vor.u32 1.1754944e-38, %v4008
    %v4010 = vsel %vm4007, %v4009, %v4005
    %v4011 = vmul.f32 %v3801, %v4010
    %v4012 = vrcp.pop %v3846
    %v4013 = vmul.f32 %v3846, %v4012
    %v4014 = vsub.f32 1.0, %v4013
    %v4015 = vmul.f32 %v4012, %v4014
    %v4016 = vadd.f32 %v4012, %v4015
    %vm4017 = vweird.f32 %v3846
    %vm4018 = vweird.f32 %v4012
    %vm4019 = vmor %vm4017, %vm4018
    %v4020 = vsel %vm4019, %v4012, %v4016
    %v4021 = vand.u32 2147483647, %v3846
    %vm4022 = vcmp.eq.f32.partialorder %v4021, 8.507059e+37
    %v4023 = vand.u32 %v3846, 2147483648
    %v4024 = vor.u32 1.1754944e-38, %v4023
    %v4025 = vsel %vm4022, %v4024, %v4020
    %v4026 = vmul.f32 %v3803, %v4025
    %v4027 = vrcp.pop %v3849
    %v4028 = vmul.f32 %v3849, %v4027
    %v4029 = vsub.f32 1.0, %v4028
    %v4030 = vmul.f32 %v4027, %v4029
    %v4031 = vadd.f32 %v4027, %v4030
    %vm4032 = vweird.f32 %v3849
    %vm4033 = vweird.f32 %v4027
    %vm4034 = vmor %vm4032, %vm4033
    %v4035 = vsel %vm4034, %v4027, %v4031
    %v4036 = vand.u32 2147483647, %v3849
    %vm4037 = vcmp.eq.f32.partialorder %v4036, 8.507059e+37
    %v4038 = vand.u32 %v3849, 2147483648
    %v4039 = vor.u32 1.1754944e-38, %v4038
    %v4040 = vsel %vm4037, %v4039, %v4035
    %v4041 = vmul.f32 %v3805, %v4040
    %v4042 = vrcp.pop %v3852
    %v4043 = vmul.f32 %v3852, %v4042
    %v4044 = vsub.f32 1.0, %v4043
    %v4045 = vmul.f32 %v4042, %v4044
    %v4046 = vadd.f32 %v4042, %v4045
    %vm4047 = vweird.f32 %v3852
    %vm4048 = vweird.f32 %v4042
    %vm4049 = vmor %vm4047, %vm4048
    %v4050 = vsel %vm4049, %v4042, %v4046
    %v4051 = vand.u32 2147483647, %v3852
    %vm4052 = vcmp.eq.f32.partialorder %v4051, 8.507059e+37
    %v4053 = vand.u32 %v3852, 2147483648
    %v4054 = vor.u32 1.1754944e-38, %v4053
    %v4055 = vsel %vm4052, %v4054, %v4050
    %v4056 = vmul.f32 %v3807, %v4055
    %v4057 = vrcp.pop %v3855
    %v4058 = vmul.f32 %v3855, %v4057
    %v4059 = vsub.f32 1.0, %v4058
    %v4060 = vmul.f32 %v4057, %v4059
    %v4061 = vadd.f32 %v4057, %v4060
    %vm4062 = vweird.f32 %v3855
    %vm4063 = vweird.f32 %v4057
    %vm4064 = vmor %vm4062, %vm4063
    %v4065 = vsel %vm4064, %v4057, %v4061
    %v4066 = vand.u32 2147483647, %v3855
    %vm4067 = vcmp.eq.f32.partialorder %v4066, 8.507059e+37
    %v4068 = vand.u32 %v3855, 2147483648
    %v4069 = vor.u32 1.1754944e-38, %v4068
    %v4070 = vsel %vm4067, %v4069, %v4065
    %v4071 = vmul.f32 %v3809, %v4070
    %v4072 = vrcp.pop %v3858
    %v4073 = vmul.f32 %v3858, %v4072
    %v4074 = vsub.f32 1.0, %v4073
    %v4075 = vmul.f32 %v4072, %v4074
    %v4076 = vadd.f32 %v4072, %v4075
    %vm4077 = vweird.f32 %v3858
    %vm4078 = vweird.f32 %v4072
    %vm4079 = vmor %vm4077, %vm4078
    %v4080 = vsel %vm4079, %v4072, %v4076
    %v4081 = vand.u32 2147483647, %v3858
    %vm4082 = vcmp.eq.f32.partialorder %v4081, 8.507059e+37
    %v4083 = vand.u32 %v3858, 2147483648
    %v4084 = vor.u32 1.1754944e-38, %v4083
    %v4085 = vsel %vm4082, %v4084, %v4080
    %v4086 = vmul.f32 %v3811, %v4085
    %v4087 = vrcp.pop %v3861
    %v4088 = vmul.f32 %v3861, %v4087
    %v4089 = vsub.f32 1.0, %v4088
    %v4090 = vmul.f32 %v4087, %v4089
    %v4091 = vadd.f32 %v4087, %v4090
    %vm4092 = vweird.f32 %v3861
    %vm4093 = vweird.f32 %v4087
    %vm4094 = vmor %vm4092, %vm4093
    %v4095 = vsel %vm4094, %v4087, %v4091
    %v4096 = vand.u32 2147483647, %v3861
    %vm4097 = vcmp.eq.f32.partialorder %v4096, 8.507059e+37
    %v4098 = vand.u32 %v3861, 2147483648
    %v4099 = vor.u32 1.1754944e-38, %v4098
    %v4100 = vsel %vm4097, %v4099, %v4095
    %v4101 = vmul.f32 %v3813, %v4100
    %4102 = vrot.lane.b32.xlu0 %v131, 40
    %v4103 = vpop.permute.xlu0 %4102
    %4104 = vrot.lane.b32.xlu0 %v134, 40
    %v4105 = vpop.permute.xlu0 %4104
    %v4109 = vsel %vm515, %v3876, 0
    %v4112 = vsel %vm515, %v3891, 0
    %4114 = vmatpush.msra.mxu0 0.0
    %4115 = vmatpush.msra.mxu0 0.0
    %4116 = vmatpush.msra.mxu0 0.0
    %4117 = vmatpush.msra.mxu0 0.0
    %4118 = vmatpush.msra.mxu0 0.0
    %4119 = vmatpush.msra.mxu0 0.0
    %4120 = vmatpush.msra.mxu0 0.0
    %4121 = vmatpush.msra.mxu0 0.0
    %4122 = vmatpush.msra.mxu0 0.0
    %4123 = vmatpush.msra.mxu0 0.0
    %4124 = vmatpush.msra.mxu0 0.0
    %4125 = vmatpush.msra.mxu0 0.0
    %4126 = vmatpush.msra.mxu0 0.0
    %4127 = vmatpush.msra.mxu0 0.0
    %4128 = vmatpush.msra.mxu0 %v4105
    %4129 = vmatpush.msra.mxu0 %v4103
    %4130 = vmatmul.f32.gmra.mxu0 %v4109
    %v4131 = vpop.f32.mrf.mxu0
    %v4132 = vadd.f32 0.0, %v4131
    %4133 = vmatmul.f32.gmra.mxu0 %v4112
    %v4134 = vpop.f32.mrf.mxu0
    %v4135 = vadd.f32 0.0, %v4134
    %4136 = vdwg.mxu0
    %4137 = vrot.lane.b32.xlu0 %v137, 40
    %v4138 = vpop.permute.xlu0 %4137
    %4139 = vrot.lane.b32.xlu0 %v140, 40
    %v4140 = vpop.permute.xlu0 %4139
    %v4144 = vsel %vm515, %v3906, 0
    %v4147 = vsel %vm515, %v3921, 0
    %4149 = vmatpush.msra.mxu0 0.0
    %4150 = vmatpush.msra.mxu0 0.0
    %4151 = vmatpush.msra.mxu0 0.0
    %4152 = vmatpush.msra.mxu0 0.0
    %4153 = vmatpush.msra.mxu0 0.0
    %4154 = vmatpush.msra.mxu0 0.0
    %4155 = vmatpush.msra.mxu0 0.0
    %4156 = vmatpush.msra.mxu0 0.0
    %4157 = vmatpush.msra.mxu0 0.0
    %4158 = vmatpush.msra.mxu0 0.0
    %4159 = vmatpush.msra.mxu0 0.0
    %4160 = vmatpush.msra.mxu0 0.0
    %4161 = vmatpush.msra.mxu0 0.0
    %4162 = vmatpush.msra.mxu0 0.0
    %4163 = vmatpush.msra.mxu0 %v4140
    %4164 = vmatpush.msra.mxu0 %v4138
    %4165 = vmatmul.f32.gmra.mxu0 %v4144
    %v4166 = vpop.f32.mrf.mxu0
    %v4167 = vadd.f32 0.0, %v4166
    %4168 = vmatmul.f32.gmra.mxu0 %v4147
    %v4169 = vpop.f32.mrf.mxu0
    %v4170 = vadd.f32 0.0, %v4169
    %4171 = vdwg.mxu0
    %4172 = vrot.lane.b32.xlu0 %v143, 40
    %v4173 = vpop.permute.xlu0 %4172
    %4174 = vrot.lane.b32.xlu0 %v146, 40
    %v4175 = vpop.permute.xlu0 %4174
    %v4179 = vsel %vm515, %v3936, 0
    %v4182 = vsel %vm515, %v3951, 0
    %4184 = vmatpush.msra.mxu0 0.0
    %4185 = vmatpush.msra.mxu0 0.0
    %4186 = vmatpush.msra.mxu0 0.0
    %4187 = vmatpush.msra.mxu0 0.0
    %4188 = vmatpush.msra.mxu0 0.0
    %4189 = vmatpush.msra.mxu0 0.0
    %4190 = vmatpush.msra.mxu0 0.0
    %4191 = vmatpush.msra.mxu0 0.0
    %4192 = vmatpush.msra.mxu0 0.0
    %4193 = vmatpush.msra.mxu0 0.0
    %4194 = vmatpush.msra.mxu0 0.0
    %4195 = vmatpush.msra.mxu0 0.0
    %4196 = vmatpush.msra.mxu0 0.0
    %4197 = vmatpush.msra.mxu0 0.0
    %4198 = vmatpush.msra.mxu0 %v4175
    %4199 = vmatpush.msra.mxu0 %v4173
    %4200 = vmatmul.f32.gmra.mxu0 %v4179
    %v4201 = vpop.f32.mrf.mxu0
    %v4202 = vadd.f32 0.0, %v4201
    %4203 = vmatmul.f32.gmra.mxu0 %v4182
    %v4204 = vpop.f32.mrf.mxu0
    %v4205 = vadd.f32 0.0, %v4204
    %4206 = vdwg.mxu0
    %4207 = vrot.lane.b32.xlu0 %v149, 40
    %v4208 = vpop.permute.xlu0 %4207
    %4209 = vrot.lane.b32.xlu0 %v152, 40
    %v4210 = vpop.permute.xlu0 %4209
    %v4214 = vsel %vm515, %v3966, 0
    %v4217 = vsel %vm515, %v3981, 0
    %4219 = vmatpush.msra.mxu0 0.0
    %4220 = vmatpush.msra.mxu0 0.0
    %4221 = vmatpush.msra.mxu0 0.0
    %4222 = vmatpush.msra.mxu0 0.0
    %4223 = vmatpush.msra.mxu0 0.0
    %4224 = vmatpush.msra.mxu0 0.0
    %4225 = vmatpush.msra.mxu0 0.0
    %4226 = vmatpush.msra.mxu0 0.0
    %4227 = vmatpush.msra.mxu0 0.0
    %4228 = vmatpush.msra.mxu0 0.0
    %4229 = vmatpush.msra.mxu0 0.0
    %4230 = vmatpush.msra.mxu0 0.0
    %4231 = vmatpush.msra.mxu0 0.0
    %4232 = vmatpush.msra.mxu0 0.0
    %4233 = vmatpush.msra.mxu0 %v4210
    %4234 = vmatpush.msra.mxu0 %v4208
    %4235 = vmatmul.f32.gmra.mxu0 %v4214
    %v4236 = vpop.f32.mrf.mxu0
    %v4237 = vadd.f32 0.0, %v4236
    %4238 = vmatmul.f32.gmra.mxu0 %v4217
    %v4239 = vpop.f32.mrf.mxu0
    %v4240 = vadd.f32 0.0, %v4239
    %4241 = vdwg.mxu0
    %4242 = vrot.lane.b32.xlu0 %v155, 40
    %v4243 = vpop.permute.xlu0 %4242
    %4244 = vrot.lane.b32.xlu0 %v158, 40
    %v4245 = vpop.permute.xlu0 %4244
    %v4249 = vsel %vm515, %v3996, 0
    %v4252 = vsel %vm515, %v4011, 0
    %4254 = vmatpush.msra.mxu0 0.0
    %4255 = vmatpush.msra.mxu0 0.0
    %4256 = vmatpush.msra.mxu0 0.0
    %4257 = vmatpush.msra.mxu0 0.0
    %4258 = vmatpush.msra.mxu0 0.0
    %4259 = vmatpush.msra.mxu0 0.0
    %4260 = vmatpush.msra.mxu0 0.0
    %4261 = vmatpush.msra.mxu0 0.0
    %4262 = vmatpush.msra.mxu0 0.0
    %4263 = vmatpush.msra.mxu0 0.0
    %4264 = vmatpush.msra.mxu0 0.0
    %4265 = vmatpush.msra.mxu0 0.0
    %4266 = vmatpush.msra.mxu0 0.0
    %4267 = vmatpush.msra.mxu0 0.0
    %4268 = vmatpush.msra.mxu0 %v4245
    %4269 = vmatpush.msra.mxu0 %v4243
    %4270 = vmatmul.f32.gmra.mxu0 %v4249
    %v4271 = vpop.f32.mrf.mxu0
    %v4272 = vadd.f32 0.0, %v4271
    %4273 = vmatmul.f32.gmra.mxu0 %v4252
    %v4274 = vpop.f32.mrf.mxu0
    %v4275 = vadd.f32 0.0, %v4274
    %4276 = vdwg.mxu0
    %4277 = vrot.lane.b32.xlu0 %v161, 40
    %v4278 = vpop.permute.xlu0 %4277
    %4279 = vrot.lane.b32.xlu0 %v164, 40
    %v4280 = vpop.permute.xlu0 %4279
    %v4284 = vsel %vm515, %v4026, 0
    %v4287 = vsel %vm515, %v4041, 0
    %4289 = vmatpush.msra.mxu0 0.0
    %4290 = vmatpush.msra.mxu0 0.0
    %4291 = vmatpush.msra.mxu0 0.0
    %4292 = vmatpush.msra.mxu0 0.0
    %4293 = vmatpush.msra.mxu0 0.0
    %4294 = vmatpush.msra.mxu0 0.0
    %4295 = vmatpush.msra.mxu0 0.0
    %4296 = vmatpush.msra.mxu0 0.0
    %4297 = vmatpush.msra.mxu0 0.0
    %4298 = vmatpush.msra.mxu0 0.0
    %4299 = vmatpush.msra.mxu0 0.0
    %4300 = vmatpush.msra.mxu0 0.0
    %4301 = vmatpush.msra.mxu0 0.0
    %4302 = vmatpush.msra.mxu0 0.0
    %4303 = vmatpush.msra.mxu0 %v4280
    %4304 = vmatpush.msra.mxu0 %v4278
    %4305 = vmatmul.f32.gmra.mxu0 %v4284
    %v4306 = vpop.f32.mrf.mxu0
    %v4307 = vadd.f32 0.0, %v4306
    %4308 = vmatmul.f32.gmra.mxu0 %v4287
    %v4309 = vpop.f32.mrf.mxu0
    %v4310 = vadd.f32 0.0, %v4309
    %4311 = vdwg.mxu0
    %4312 = vrot.lane.b32.xlu0 %v167, 40
    %v4313 = vpop.permute.xlu0 %4312
    %4314 = vrot.lane.b32.xlu0 %v170, 40
    %v4315 = vpop.permute.xlu0 %4314
    %v4319 = vsel %vm515, %v4056, 0
    %v4322 = vsel %vm515, %v4071, 0
    %4324 = vmatpush.msra.mxu0 0.0
    %4325 = vmatpush.msra.mxu0 0.0
    %4326 = vmatpush.msra.mxu0 0.0
    %4327 = vmatpush.msra.mxu0 0.0
    %4328 = vmatpush.msra.mxu0 0.0
    %4329 = vmatpush.msra.mxu0 0.0
    %4330 = vmatpush.msra.mxu0 0.0
    %4331 = vmatpush.msra.mxu0 0.0
    %4332 = vmatpush.msra.mxu0 0.0
    %4333 = vmatpush.msra.mxu0 0.0
    %4334 = vmatpush.msra.mxu0 0.0
    %4335 = vmatpush.msra.mxu0 0.0
    %4336 = vmatpush.msra.mxu0 0.0
    %4337 = vmatpush.msra.mxu0 0.0
    %4338 = vmatpush.msra.mxu0 %v4315
    %4339 = vmatpush.msra.mxu0 %v4313
    %4340 = vmatmul.f32.gmra.mxu0 %v4319
    %v4341 = vpop.f32.mrf.mxu0
    %v4342 = vadd.f32 0.0, %v4341
    %4343 = vmatmul.f32.gmra.mxu0 %v4322
    %v4344 = vpop.f32.mrf.mxu0
    %v4345 = vadd.f32 0.0, %v4344
    %4346 = vdwg.mxu0
    %4347 = vrot.lane.b32.xlu0 %v173, 40
    %v4348 = vpop.permute.xlu0 %4347
    %4349 = vrot.lane.b32.xlu0 %v176, 40
    %v4350 = vpop.permute.xlu0 %4349
    %v4354 = vsel %vm515, %v4086, 0
    %v4357 = vsel %vm515, %v4101, 0
    %4359 = vmatpush.msra.mxu0 0.0
    %4360 = vmatpush.msra.mxu0 0.0
    %4361 = vmatpush.msra.mxu0 0.0
    %4362 = vmatpush.msra.mxu0 0.0
    %4363 = vmatpush.msra.mxu0 0.0
    %4364 = vmatpush.msra.mxu0 0.0
    %4365 = vmatpush.msra.mxu0 0.0
    %4366 = vmatpush.msra.mxu0 0.0
    %4367 = vmatpush.msra.mxu0 0.0
    %4368 = vmatpush.msra.mxu0 0.0
    %4369 = vmatpush.msra.mxu0 0.0
    %4370 = vmatpush.msra.mxu0 0.0
    %4371 = vmatpush.msra.mxu0 0.0
    %4372 = vmatpush.msra.mxu0 0.0
    %4373 = vmatpush.msra.mxu0 %v4350
    %4374 = vmatpush.msra.mxu0 %v4348
    %4375 = vmatmul.f32.gmra.mxu0 %v4354
    %v4376 = vpop.f32.mrf.mxu0
    %v4377 = vadd.f32 0.0, %v4376
    %4378 = vmatmul.f32.gmra.mxu0 %v4357
    %v4379 = vpop.f32.mrf.mxu0
    %v4380 = vadd.f32 0.0, %v4379
    %4381 = vdwg.mxu0
    %4398 = vrot.lane.b32.xlu0 %v4132, 24
    %v4399 = vpop.permute.xlu0 %4398
    %4400 = vrot.lane.b32.xlu0 %v4135, 24
    %v4401 = vpop.permute.xlu0 %4400
    %4402 = vrot.lane.b32.xlu0 %v4167, 24
    %v4403 = vpop.permute.xlu0 %4402
    %4404 = vrot.lane.b32.xlu0 %v4170, 24
    %v4405 = vpop.permute.xlu0 %4404
    %4406 = vrot.lane.b32.xlu0 %v4202, 24
    %v4407 = vpop.permute.xlu0 %4406
    %4408 = vrot.lane.b32.xlu0 %v4205, 24
    %v4409 = vpop.permute.xlu0 %4408
    %4410 = vrot.lane.b32.xlu0 %v4237, 24
    %v4411 = vpop.permute.xlu0 %4410
    %4412 = vrot.lane.b32.xlu0 %v4240, 24
    %v4413 = vpop.permute.xlu0 %4412
    %4414 = vrot.lane.b32.xlu0 %v4272, 24
    %v4415 = vpop.permute.xlu0 %4414
    %4416 = vrot.lane.b32.xlu0 %v4275, 24
    %v4417 = vpop.permute.xlu0 %4416
    %4418 = vrot.lane.b32.xlu0 %v4307, 24
    %v4419 = vpop.permute.xlu0 %4418
    %4420 = vrot.lane.b32.xlu0 %v4310, 24
    %v4421 = vpop.permute.xlu0 %4420
    %4422 = vrot.lane.b32.xlu0 %v4342, 24
    %v4423 = vpop.permute.xlu0 %4422
    %4424 = vrot.lane.b32.xlu0 %v4345, 24
    %v4425 = vpop.permute.xlu0 %4424
    %4426 = vrot.lane.b32.xlu0 %v4377, 24
    %v4427 = vpop.permute.xlu0 %4426
    %4428 = vrot.lane.b32.xlu0 %v4380, 24
    %v4429 = vpop.permute.xlu0 %4428
    %vm4446 = vcmask 261312
    %4447 = vst.msk [vmem:[#allocation2] sm:$0xff] %vm4446, %v4399
    %4448 = vst.msk [vmem:[#allocation2 + $0x8] sm:$0xff] %vm4446, %v4401
    %4449 = vst.msk [vmem:[#allocation2 + $0x10] sm:$0xff] %vm4446, %v4403
    %4450 = vst.msk [vmem:[#allocation2 + $0x18] sm:$0xff] %vm4446, %v4405
    %4451 = vst.msk [vmem:[#allocation2 + $0x20] sm:$0xff] %vm4446, %v4407
    %4452 = vst.msk [vmem:[#allocation2 + $0x28] sm:$0xff] %vm4446, %v4409
    %4453 = vst.msk [vmem:[#allocation2 + $0x30] sm:$0xff] %vm4446, %v4411
    %4454 = vst.msk [vmem:[#allocation2 + $0x38] sm:$0xff] %vm4446, %v4413
    %4455 = vst.msk [vmem:[#allocation2 + $0x40] sm:$0xff] %vm4446, %v4415
    %4456 = vst.msk [vmem:[#allocation2 + $0x48] sm:$0xff] %vm4446, %v4417
    %4457 = vst.msk [vmem:[#allocation2 + $0x50] sm:$0xff] %vm4446, %v4419
    %4458 = vst.msk [vmem:[#allocation2 + $0x58] sm:$0xff] %vm4446, %v4421
    %4459 = vst.msk [vmem:[#allocation2 + $0x60] sm:$0xff] %vm4446, %v4423
    %4460 = vst.msk [vmem:[#allocation2 + $0x68] sm:$0xff] %vm4446, %v4425
    %4461 = vst.msk [vmem:[#allocation2 + $0x70] sm:$0xff] %vm4446, %v4427
    %4462 = vst.msk [vmem:[#allocation2 + $0x78] sm:$0xff] %vm4446, %v4429
    %v4463 = vld [vmem:[#allocation2] sm:$0xff]
    %v4464 = vld [vmem:[#allocation2 + $0x8] sm:$0xff]
    %v4465 = vld [vmem:[#allocation2 + $0x10] sm:$0xff]
    %v4466 = vld [vmem:[#allocation2 + $0x18] sm:$0xff]
    %v4467 = vld [vmem:[#allocation2 + $0x20] sm:$0xff]
    %v4468 = vld [vmem:[#allocation2 + $0x28] sm:$0xff]
    %v4469 = vld [vmem:[#allocation2 + $0x30] sm:$0xff]
    %v4470 = vld [vmem:[#allocation2 + $0x38] sm:$0xff]
    %v4471 = vld [vmem:[#allocation2 + $0x40] sm:$0xff]
    %v4472 = vld [vmem:[#allocation2 + $0x48] sm:$0xff]
    %v4473 = vld [vmem:[#allocation2 + $0x50] sm:$0xff]
    %v4474 = vld [vmem:[#allocation2 + $0x58] sm:$0xff]
    %v4475 = vld [vmem:[#allocation2 + $0x60] sm:$0xff]
    %v4476 = vld [vmem:[#allocation2 + $0x68] sm:$0xff]
    %v4477 = vld [vmem:[#allocation2 + $0x70] sm:$0xff]
    %v4478 = vld [vmem:[#allocation2 + $0x78] sm:$0xff]
    %v4479 = vld [vmem:[%s3] sm:$0xff]
    %v4480 = vld [vmem:[%s3 + $0x8] sm:$0xff]
    %v4481 = vld [vmem:[%s3 + $0x10] sm:$0xff]
    %v4482 = vld [vmem:[%s3 + $0x18] sm:$0xff]
    %v4483 = vld [vmem:[%s4] sm:$0x1]
    %v4485 = vperm.slane %v4483, 0
    %v4488 = vsel %vm64, %v4463, 0
    %v4491 = vsel %vm64, %v4464, 0
    %v4494 = vsel %vm64, %v4465, 0
    %v4497 = vsel %vm64, %v4466, 0
    %v4500 = vsel %vm64, %v4467, 0
    %v4503 = vsel %vm64, %v4468, 0
    %v4506 = vsel %vm64, %v4469, 0
    %v4509 = vsel %vm64, %v4470, 0
    %v4512 = vsel %vm64, %v4471, 0
    %v4515 = vsel %vm64, %v4472, 0
    %v4518 = vsel %vm64, %v4473, 0
    %v4521 = vsel %vm64, %v4474, 0
    %v4524 = vsel %vm64, %v4475, 0
    %v4527 = vsel %vm64, %v4476, 0
    %v4530 = vsel %vm64, %v4477, 0
    %v4533 = vsel %vm64, %v4478, 0
    %4535 = vmatpush.msra.mxu0 0.0
    %4536 = vmatpush.msra.mxu0 0.0
    %4537 = vmatpush.msra.mxu0 0.0
    %4538 = vmatpush.msra.mxu0 0.0
    %4539 = vmatpush.msra.mxu0 0.0
    %4540 = vmatpush.msra.mxu0 0.0
    %4541 = vmatpush.msra.mxu0 0.0
    %4542 = vmatpush.msra.mxu0 0.0
    %4543 = vmatpush.msra.mxu0 0.0
    %4544 = vmatpush.msra.mxu0 0.0
    %4545 = vmatpush.msra.mxu0 0.0
    %4546 = vmatpush.msra.mxu0 0.0
    %4547 = vmatpush.msra.mxu0 %v4482
    %4548 = vmatpush.msra.mxu0 %v4481
    %4549 = vmatpush.msra.mxu0 %v4480
    %4550 = vmatpush.msra.mxu0 %v4479
    %4551 = vmatmul.f32.gmra.mxu0 %v4488
    %v4552 = vpop.f32.mrf.mxu0
    %v4553 = vadd.f32 %v4485, %v4552
    %4554 = vmatmul.f32.gmra.mxu0 %v4491
    %v4555 = vpop.f32.mrf.mxu0
    %v4556 = vadd.f32 %v4485, %v4555
    %4557 = vmatmul.f32.gmra.mxu0 %v4494
    %v4558 = vpop.f32.mrf.mxu0
    %v4559 = vadd.f32 %v4485, %v4558
    %4560 = vmatmul.f32.gmra.mxu0 %v4497
    %v4561 = vpop.f32.mrf.mxu0
    %v4562 = vadd.f32 %v4485, %v4561
    %4563 = vmatmul.f32.gmra.mxu0 %v4500
    %v4564 = vpop.f32.mrf.mxu0
    %v4565 = vadd.f32 %v4485, %v4564
    %4566 = vmatmul.f32.gmra.mxu0 %v4503
    %v4567 = vpop.f32.mrf.mxu0
    %v4568 = vadd.f32 %v4485, %v4567
    %4569 = vmatmul.f32.gmra.mxu0 %v4506
    %v4570 = vpop.f32.mrf.mxu0
    %v4571 = vadd.f32 %v4485, %v4570
    %4572 = vmatmul.f32.gmra.mxu0 %v4509
    %v4573 = vpop.f32.mrf.mxu0
    %v4574 = vadd.f32 %v4485, %v4573
    %4575 = vmatmul.f32.gmra.mxu0 %v4512
    %v4576 = vpop.f32.mrf.mxu0
    %v4577 = vadd.f32 %v4485, %v4576
    %4578 = vmatmul.f32.gmra.mxu0 %v4515
    %v4579 = vpop.f32.mrf.mxu0
    %v4580 = vadd.f32 %v4485, %v4579
    %4581 = vmatmul.f32.gmra.mxu0 %v4518
    %v4582 = vpop.f32.mrf.mxu0
    %v4583 = vadd.f32 %v4485, %v4582
    %4584 = vmatmul.f32.gmra.mxu0 %v4521
    %v4585 = vpop.f32.mrf.mxu0
    %v4586 = vadd.f32 %v4485, %v4585
    %4587 = vmatmul.f32.gmra.mxu0 %v4524
    %v4588 = vpop.f32.mrf.mxu0
    %v4589 = vadd.f32 %v4485, %v4588
    %4590 = vmatmul.f32.gmra.mxu0 %v4527
    %v4591 = vpop.f32.mrf.mxu0
    %v4592 = vadd.f32 %v4485, %v4591
    %4593 = vmatmul.f32.gmra.mxu0 %v4530
    %v4594 = vpop.f32.mrf.mxu0
    %v4595 = vadd.f32 %v4485, %v4594
    %4596 = vmatmul.f32.gmra.mxu0 %v4533
    %v4597 = vpop.f32.mrf.mxu0
    %v4598 = vadd.f32 %v4485, %v4597
    %4599 = vdwg.mxu0
    %4600 = vst.msk [vmem:[#allocation6] sm:$0xff] %vm64, %v4553
    %4601 = vst.msk [vmem:[#allocation6 + $0x8] sm:$0xff] %vm64, %v4556
    %4602 = vst.msk [vmem:[#allocation6 + $0x10] sm:$0xff] %vm64, %v4559
    %4603 = vst.msk [vmem:[#allocation6 + $0x18] sm:$0xff] %vm64, %v4562
    %4604 = vst.msk [vmem:[#allocation6 + $0x20] sm:$0xff] %vm64, %v4565
    %4605 = vst.msk [vmem:[#allocation6 + $0x28] sm:$0xff] %vm64, %v4568
    %4606 = vst.msk [vmem:[#allocation6 + $0x30] sm:$0xff] %vm64, %v4571
    %4607 = vst.msk [vmem:[#allocation6 + $0x38] sm:$0xff] %vm64, %v4574
    %4608 = vst.msk [vmem:[#allocation6 + $0x40] sm:$0xff] %vm64, %v4577
    %4609 = vst.msk [vmem:[#allocation6 + $0x48] sm:$0xff] %vm64, %v4580
    %4610 = vst.msk [vmem:[#allocation6 + $0x50] sm:$0xff] %vm64, %v4583
    %4611 = vst.msk [vmem:[#allocation6 + $0x58] sm:$0xff] %vm64, %v4586
    %4612 = vst.msk [vmem:[#allocation6 + $0x60] sm:$0xff] %vm64, %v4589
    %4613 = vst.msk [vmem:[#allocation6 + $0x68] sm:$0xff] %vm64, %v4592
    %4614 = vst.msk [vmem:[#allocation6 + $0x70] sm:$0xff] %vm64, %v4595
    %4615 = vst.msk [vmem:[#allocation6 + $0x78] sm:$0xff] %vm64, %v4598
    // Predicated region
    $region30: #{tpu_custom_call.1} parent=1 // pred_check
      _
    $region31: #{tpu_custom_call.1} parent=1 // pred_check_branch
      %4617 = sbr.rel (0) target = $region33
    $region32: #{tpu_custom_call.1} parent=1 // pred_region
      %4619 = vsyncadd [#allocation5], 0
      %s4620 = sshll.u32 [#allocation6], 4
      %s4621 = int_to_ptr.vmem [resolvable:$true] %s4620
      %s4622 = sshll.u32 %s6, 4
      %s4623 = int_to_ptr.hbm [resolvable:$true] %s4622
      %4628 = dma.vmem_to_hbm [thread:$0]  %s4621, 2048, %s4623, [#allocation5], 128, 128, 8
    $region33: #{tpu_custom_call.1} parent=1 // pred_fallthru
      _
    // Predicated region
    $region34: #{tpu_custom_call.1} parent=1 // pred_check
      _
    $region35: #{tpu_custom_call.1} parent=1 // pred_check_branch
      %4630 = sbr.rel (0) target = $region37
    $region36: #{tpu_custom_call.1} parent=1 // pred_region
      %4632 = dma.done [#allocation5], 2048
    $region37: #{tpu_custom_call.1} parent=1 // pred_fallthru
      _
    %4633 = vsyncpa [#allocation4], 1
    %4634 = vsyncpa [#allocation5], 1

</llo_original>
